<compile_context>
chip_gen: v7x
topology: tpu7x:2x2x1
jax: 0.10.0
libtpu: 0.0.40
codegen_flags: <defaults>
</compile_context>

<pallas_src>
import numpy as np
import jax
import jax.numpy as jnp
from jax import lax
from jax.experimental import pallas as pl
from jax.experimental.pallas import tpu as pltpu


# ---------------------------------------------------------------------------
# Fused kernel: BN (affine) + PReLU + 3x3x3 conv for one (n, d) output slice.
# ---------------------------------------------------------------------------
def dense_layer_kernel(x0_ref, x1_ref, x2_ref, w_ref, aff_ref, b_ref, o_ref):
    """One (n, d) grid step.

    x{0,1,2}_ref : (H+2, W+2, Cin) f32   padded input slabs at depth d, d+1, d+2
    w_ref        : (27, Cin, Cout) bf16  conv weights, tap-major (kd, kh, kw)
    aff_ref      : (3, Cin) f32          rows = (bn_scale, bn_shift, prelu_alpha)
    b_ref        : (1, Cout) f32         conv bias
    o_ref        : (H*W, Cout) f32       one output depth slice, rows = (h, w)
    """
    Hp, Wp, Cin = x0_ref.shape
    H, W = Hp - 2, Wp - 2
    HW, Cout = o_ref.shape

    aff = aff_ref[...]
    scale, shift, alpha = aff[0:1], aff[1:2], aff[2:3]      # (1, Cin) each

    acc = jnp.zeros((HW, Cout), jnp.float32)
    for kd, x_ref in enumerate((x0_ref, x1_ref, x2_ref)):
        # Fused BatchNorm (running stats) + PReLU in f32 on the whole slab.
        y = x_ref[...] * scale + shift
        y = jnp.where(y >= 0.0, y, alpha * y)
        y = y.astype(jnp.bfloat16)                          # cast only for MXU
        for kh in range(3):
            for kw in range(3):
                patch = y[kh:kh + H, kw:kw + W, :].reshape(HW, Cin)
                k = (kd * 3 + kh) * 3 + kw
                acc += jnp.dot(patch, w_ref[k],
                               preferred_element_type=jnp.float32)
    o_ref[...] = acc + b_ref[...]


# ---------------------------------------------------------------------------
# DenseLayer forward (eval mode)
# ---------------------------------------------------------------------------
def dense_layer_forward(x_ncdhw, params, eps=1e-5):
    """BN3d -> PReLU -> Conv3d(k=3, s=1, p=1, bias) -> dropout(identity)."""
    N, Cin, D, H, W = x_ncdhw.shape
    w = params["conv_w"]                                    # (Cout, Cin, 3, 3, 3)
    Cout = w.shape[0]

    # Fold BatchNorm running statistics into a per-channel affine.
    scale = (params["gamma"] / jnp.sqrt(params["running_var"] + eps)).astype(jnp.float32)
    shift = (params["beta"] - params["running_mean"] * scale).astype(jnp.float32)
    alpha = jnp.broadcast_to(jnp.asarray(params["alpha"], jnp.float32), (Cin,))
    aff = jnp.stack([scale, shift, alpha], axis=0)          # (3, Cin)

    # Channels-last, spatially padded with the per-channel value that BN+PReLU
    # maps to 0, so the fused kernel reproduces conv zero-padding of the
    # activation exactly (up to f32 rounding).
    x_cl = jnp.transpose(x_ncdhw, (0, 2, 3, 4, 1)).astype(jnp.float32)   # NDHWC
    pad_val = jnp.where(scale != 0.0, -shift / scale, 0.0).astype(jnp.float32)
    xp = jnp.broadcast_to(pad_val, (N, D + 2, H + 2, W + 2, Cin))
    xp = lax.dynamic_update_slice(xp, x_cl, (0, 1, 1, 1, 0))

    # Conv weights (Cout, Cin, 3,3,3) -> tap-major (27, Cin, Cout), bf16 for MXU.
    w_taps = (jnp.transpose(w, (2, 3, 4, 1, 0))
              .reshape(27, Cin, Cout).astype(jnp.bfloat16))
    b2d = params["conv_b"].reshape(1, Cout).astype(jnp.float32)

    Hp, Wp = H + 2, W + 2

    def slab_spec(kd):
        # One padded depth slice (N and D dims squeezed out of the kernel Ref).
        return pl.BlockSpec((None, None, Hp, Wp, Cin),
                            lambda n, d, kd=kd: (n, d + kd, 0, 0, 0))

    out = pl.pallas_call(
        dense_layer_kernel,
        out_shape=jax.ShapeDtypeStruct((N, D, H * W, Cout), jnp.float32),
        grid_spec=pltpu.PrefetchScalarGridSpec(
            num_scalar_prefetch=0,
            grid=(N, D),
            in_specs=[
                slab_spec(0), slab_spec(1), slab_spec(2),   # D-halo: d, d+1, d+2
                pl.BlockSpec((27, Cin, Cout), lambda n, d: (0, 0, 0)),
                pl.BlockSpec((3, Cin), lambda n, d: (0, 0)),
                pl.BlockSpec((1, Cout), lambda n, d: (0, 0)),
            ],
            out_specs=pl.BlockSpec((None, None, H * W, Cout),
                                   lambda n, d: (n, d, 0, 0)),
        ),
        compiler_params=pltpu.CompilerParams(
            dimension_semantics=("parallel", "parallel")),
    )(xp, xp, xp, w_taps, aff, b2d)

    # TODO(synk): dropout is the identity in eval mode; training-mode dropout
    # would use pltpu.prng_seed / pltpu.prng_random_bits inside the kernel.
    # NOTE: for large H*W*Cin, tile H (or D) further and size blocks against
    # VMEM (64 MiB physical on v7x) via pltpu.CompilerParams(vmem_limit_bytes=...).
    out = out.reshape(N, D, H, W, Cout)
    return jnp.transpose(out, (0, 4, 1, 2, 3))              # back to NCDHW


# ---------------------------------------------------------------------------
# Pure-JAX reference (mirrors the kernel's bf16 matmul operands, f32 accum)
# ---------------------------------------------------------------------------
def reference_forward(x, params, eps=1e-5):
    scale = params["gamma"] / jnp.sqrt(params["running_var"] + eps)
    shift = params["beta"] - params["running_mean"] * scale
    y = x * scale.reshape(1, -1, 1, 1, 1) + shift.reshape(1, -1, 1, 1, 1)
    y = jnp.where(y >= 0, y, params["alpha"] * y)
    out = lax.conv_general_dilated(
        y.astype(jnp.bfloat16), params["conv_w"].astype(jnp.bfloat16),
        window_strides=(1, 1, 1),
        padding=((1, 1), (1, 1), (1, 1)),
        dimension_numbers=("NCDHW", "OIDHW", "NCDHW"),
        preferred_element_type=jnp.float32,
        precision=lax.Precision.HIGHEST)
    return out + params["conv_b"].reshape(1, -1, 1, 1, 1)


if __name__ == "__main__":
    key = jax.random.PRNGKey(0)
    N, Cin, Cout, D, H, W = 2, 4, 8, 8, 8, 8
    ks = jax.random.split(key, 7)

    x = jax.random.normal(ks[0], (N, Cin, D, H, W), jnp.float32)
    params = dict(
        gamma=1.0 + 0.1 * jax.random.normal(ks[1], (Cin,), jnp.float32),
        beta=0.1 * jax.random.normal(ks[2], (Cin,), jnp.float32),
        running_mean=0.1 * jax.random.normal(ks[3], (Cin,), jnp.float32),
        running_var=jax.random.uniform(ks[4], (Cin,), jnp.float32,
                                       minval=0.5, maxval=1.5),
        alpha=jnp.asarray(0.25, jnp.float32),   # nn.PReLU() single parameter
        conv_w=jax.random.normal(ks[5], (Cout, Cin, 3, 3, 3), jnp.float32)
               * (1.0 / np.sqrt(Cin * 27)),
        conv_b=0.05 * jax.random.normal(ks[6], (Cout,), jnp.float32),
    )

    out = dense_layer_forward(x, params)
    out = jax.block_until_ready(out)
    assert out.shape == (N, Cout, D, H, W)

    ref = reference_forward(x, params)
    np.testing.assert_allclose(np.asarray(out), np.asarray(ref),
                               rtol=2e-3, atol=2e-3)

    print("KERNEL_OK")
</pallas_src>

<mosaic_0001>
module attributes {stable_mosaic.version = 11 : i64} {
  func.func @dense_layer_kernel(%arg0: i32, %arg1: i32, %arg2: memref<1x1x10x10x4xf32, #tpu.memory_space<vmem>>, %arg3: memref<1x1x10x10x4xf32, #tpu.memory_space<vmem>>, %arg4: memref<1x1x10x10x4xf32, #tpu.memory_space<vmem>>, %arg5: memref<27x4x8xbf16, #tpu.memory_space<vmem>>, %arg6: memref<3x4xf32, #tpu.memory_space<vmem>>, %arg7: memref<1x8xf32, #tpu.memory_space<vmem>>, %arg8: memref<1x1x64x8xf32, #tpu.memory_space<vmem>>) attributes {dimension_semantics = [#tpu.dimension_semantics<parallel>, #tpu.dimension_semantics<parallel>], iteration_bounds = array<i64: 2, 8>, scalar_prefetch = 0 : i64, scratch_operands = 0 : i64, tpu.core_type = #tpu.core_type<tc>, window_params = [{transform_indices = @transform_0, window_bounds = array<i64: 1, 1, 10, 10, 4>}, {transform_indices = @transform_1, window_bounds = array<i64: 1, 1, 10, 10, 4>}, {transform_indices = @transform_2, window_bounds = array<i64: 1, 1, 10, 10, 4>}, {pipeline_mode = #tpu.pipeline_mode<synchronous>, transform_indices = @transform_3, window_bounds = array<i64: 27, 4, 8>}, {pipeline_mode = #tpu.pipeline_mode<synchronous>, transform_indices = @transform_4, window_bounds = array<i64: 3, 4>}, {pipeline_mode = #tpu.pipeline_mode<synchronous>, transform_indices = @transform_5, window_bounds = array<i64: 1, 8>}, {transform_indices = @transform_6, window_bounds = array<i64: 1, 1, 64, 8>}]} {
    %c0 = arith.constant 0 : index
    %c0_0 = arith.constant 0 : index
    %0 = vector.load %arg6[%c0, %c0_0] : memref<3x4xf32, #tpu.memory_space<vmem>>, vector<3x4xf32>
    %1 = vector.extract_strided_slice %0 {offsets = [0, 0], sizes = [1, 4], strides = [1, 1]} : vector<3x4xf32> to vector<1x4xf32>
    %2 = vector.extract_strided_slice %0 {offsets = [1, 0], sizes = [1, 4], strides = [1, 1]} : vector<3x4xf32> to vector<1x4xf32>
    %3 = vector.extract_strided_slice %0 {offsets = [2, 0], sizes = [1, 4], strides = [1, 1]} : vector<3x4xf32> to vector<1x4xf32>
    %cst = arith.constant 0.000000e+00 : f32
    %4 = vector.broadcast %cst : f32 to vector<64x8xf32>
    %c0_1 = arith.constant 0 : index
    %c0_2 = arith.constant 0 : index
    %c0_3 = arith.constant 0 : index
    %c0_4 = arith.constant 0 : index
    %c0_5 = arith.constant 0 : index
    %5 = vector.load %arg2[%c0_1, %c0_2, %c0_3, %c0_4, %c0_5] : memref<1x1x10x10x4xf32, #tpu.memory_space<vmem>>, vector<1x1x10x10x4xf32>
    %6 = vector.shape_cast %5 : vector<1x1x10x10x4xf32> to vector<10x10x4xf32>
    %7 = vector.shape_cast %1 : vector<1x4xf32> to vector<1x1x4xf32>
    %8 = vector.broadcast %7 : vector<1x1x4xf32> to vector<10x10x4xf32>
    %9 = arith.mulf %6, %8 : vector<10x10x4xf32>
    %10 = vector.shape_cast %2 : vector<1x4xf32> to vector<1x1x4xf32>
    %11 = vector.broadcast %10 : vector<1x1x4xf32> to vector<10x10x4xf32>
    %12 = arith.addf %9, %11 : vector<10x10x4xf32>
    %cst_6 = arith.constant 0.000000e+00 : f32
    %13 = vector.broadcast %cst_6 : f32 to vector<10x10x4xf32>
    %14 = arith.cmpf oge, %12, %13 : vector<10x10x4xf32>
    %15 = vector.shape_cast %3 : vector<1x4xf32> to vector<1x1x4xf32>
    %16 = vector.broadcast %15 : vector<1x1x4xf32> to vector<10x10x4xf32>
    %17 = arith.mulf %16, %12 : vector<10x10x4xf32>
    %18 = arith.select %14, %12, %17 : vector<10x10x4xi1>, vector<10x10x4xf32>
    %19 = arith.truncf %18 : vector<10x10x4xf32> to vector<10x10x4xbf16>
    %20 = vector.extract_strided_slice %19 {offsets = [0, 0, 0], sizes = [8, 8, 4], strides = [1, 1, 1]} : vector<10x10x4xbf16> to vector<8x8x4xbf16>
    %21 = vector.shape_cast %20 : vector<8x8x4xbf16> to vector<64x4xbf16>
    %c0_7 = arith.constant 0 : index
    %c0_8 = arith.constant 0 : index
    %c0_9 = arith.constant 0 : index
    %22 = vector.load %arg5[%c0_7, %c0_8, %c0_9] : memref<27x4x8xbf16, #tpu.memory_space<vmem>>, vector<1x4x8xbf16>
    %23 = vector.shape_cast %22 : vector<1x4x8xbf16> to vector<4x8xbf16>
    %cst_10 = arith.constant dense<0.000000e+00> : vector<64x8xf32>
    %24 = tpu.matmul %21, %23, %cst_10 {dimension_numbers = #tpu.dot_dimension_numbers<[1], [0], [0], [1], [0, 0, 1, 1], [], []>} : vector<64x4xbf16>, vector<4x8xbf16>, vector<64x8xf32> -> vector<64x8xf32>
    %25 = arith.addf %4, %24 : vector<64x8xf32>
    %26 = vector.extract_strided_slice %19 {offsets = [0, 1, 0], sizes = [8, 8, 4], strides = [1, 1, 1]} : vector<10x10x4xbf16> to vector<8x8x4xbf16>
    %27 = vector.shape_cast %26 : vector<8x8x4xbf16> to vector<64x4xbf16>
    %c1 = arith.constant 1 : index
    %c0_11 = arith.constant 0 : index
    %c0_12 = arith.constant 0 : index
    %28 = vector.load %arg5[%c1, %c0_11, %c0_12] : memref<27x4x8xbf16, #tpu.memory_space<vmem>>, vector<1x4x8xbf16>
    %29 = vector.shape_cast %28 : vector<1x4x8xbf16> to vector<4x8xbf16>
    %cst_13 = arith.constant dense<0.000000e+00> : vector<64x8xf32>
    %30 = tpu.matmul %27, %29, %cst_13 {dimension_numbers = #tpu.dot_dimension_numbers<[1], [0], [0], [1], [0, 0, 1, 1], [], []>} : vector<64x4xbf16>, vector<4x8xbf16>, vector<64x8xf32> -> vector<64x8xf32>
    %31 = arith.addf %25, %30 : vector<64x8xf32>
    %32 = vector.extract_strided_slice %19 {offsets = [0, 2, 0], sizes = [8, 8, 4], strides = [1, 1, 1]} : vector<10x10x4xbf16> to vector<8x8x4xbf16>
    %33 = vector.shape_cast %32 : vector<8x8x4xbf16> to vector<64x4xbf16>
    %c2 = arith.constant 2 : index
    %c0_14 = arith.constant 0 : index
    %c0_15 = arith.constant 0 : index
    %34 = vector.load %arg5[%c2, %c0_14, %c0_15] : memref<27x4x8xbf16, #tpu.memory_space<vmem>>, vector<1x4x8xbf16>
    %35 = vector.shape_cast %34 : vector<1x4x8xbf16> to vector<4x8xbf16>
    %cst_16 = arith.constant dense<0.000000e+00> : vector<64x8xf32>
    %36 = tpu.matmul %33, %35, %cst_16 {dimension_numbers = #tpu.dot_dimension_numbers<[1], [0], [0], [1], [0, 0, 1, 1], [], []>} : vector<64x4xbf16>, vector<4x8xbf16>, vector<64x8xf32> -> vector<64x8xf32>
    %37 = arith.addf %31, %36 : vector<64x8xf32>
    %38 = vector.extract_strided_slice %19 {offsets = [1, 0, 0], sizes = [8, 8, 4], strides = [1, 1, 1]} : vector<10x10x4xbf16> to vector<8x8x4xbf16>
    %39 = vector.shape_cast %38 : vector<8x8x4xbf16> to vector<64x4xbf16>
    %c3 = arith.constant 3 : index
    %c0_17 = arith.constant 0 : index
    %c0_18 = arith.constant 0 : index
    %40 = vector.load %arg5[%c3, %c0_17, %c0_18] : memref<27x4x8xbf16, #tpu.memory_space<vmem>>, vector<1x4x8xbf16>
    %41 = vector.shape_cast %40 : vector<1x4x8xbf16> to vector<4x8xbf16>
    %cst_19 = arith.constant dense<0.000000e+00> : vector<64x8xf32>
    %42 = tpu.matmul %39, %41, %cst_19 {dimension_numbers = #tpu.dot_dimension_numbers<[1], [0], [0], [1], [0, 0, 1, 1], [], []>} : vector<64x4xbf16>, vector<4x8xbf16>, vector<64x8xf32> -> vector<64x8xf32>
    %43 = arith.addf %37, %42 : vector<64x8xf32>
    %44 = vector.extract_strided_slice %19 {offsets = [1, 1, 0], sizes = [8, 8, 4], strides = [1, 1, 1]} : vector<10x10x4xbf16> to vector<8x8x4xbf16>
    %45 = vector.shape_cast %44 : vector<8x8x4xbf16> to vector<64x4xbf16>
    %c4 = arith.constant 4 : index
    %c0_20 = arith.constant 0 : index
    %c0_21 = arith.constant 0 : index
    %46 = vector.load %arg5[%c4, %c0_20, %c0_21] : memref<27x4x8xbf16, #tpu.memory_space<vmem>>, vector<1x4x8xbf16>
    %47 = vector.shape_cast %46 : vector<1x4x8xbf16> to vector<4x8xbf16>
    %cst_22 = arith.constant dense<0.000000e+00> : vector<64x8xf32>
    %48 = tpu.matmul %45, %47, %cst_22 {dimension_numbers = #tpu.dot_dimension_numbers<[1], [0], [0], [1], [0, 0, 1, 1], [], []>} : vector<64x4xbf16>, vector<4x8xbf16>, vector<64x8xf32> -> vector<64x8xf32>
    %49 = arith.addf %43, %48 : vector<64x8xf32>
    %50 = vector.extract_strided_slice %19 {offsets = [1, 2, 0], sizes = [8, 8, 4], strides = [1, 1, 1]} : vector<10x10x4xbf16> to vector<8x8x4xbf16>
    %51 = vector.shape_cast %50 : vector<8x8x4xbf16> to vector<64x4xbf16>
    %c5 = arith.constant 5 : index
    %c0_23 = arith.constant 0 : index
    %c0_24 = arith.constant 0 : index
    %52 = vector.load %arg5[%c5, %c0_23, %c0_24] : memref<27x4x8xbf16, #tpu.memory_space<vmem>>, vector<1x4x8xbf16>
    %53 = vector.shape_cast %52 : vector<1x4x8xbf16> to vector<4x8xbf16>
    %cst_25 = arith.constant dense<0.000000e+00> : vector<64x8xf32>
    %54 = tpu.matmul %51, %53, %cst_25 {dimension_numbers = #tpu.dot_dimension_numbers<[1], [0], [0], [1], [0, 0, 1, 1], [], []>} : vector<64x4xbf16>, vector<4x8xbf16>, vector<64x8xf32> -> vector<64x8xf32>
    %55 = arith.addf %49, %54 : vector<64x8xf32>
    %56 = vector.extract_strided_slice %19 {offsets = [2, 0, 0], sizes = [8, 8, 4], strides = [1, 1, 1]} : vector<10x10x4xbf16> to vector<8x8x4xbf16>
    %57 = vector.shape_cast %56 : vector<8x8x4xbf16> to vector<64x4xbf16>
    %c6 = arith.constant 6 : index
    %c0_26 = arith.constant 0 : index
    %c0_27 = arith.constant 0 : index
    %58 = vector.load %arg5[%c6, %c0_26, %c0_27] : memref<27x4x8xbf16, #tpu.memory_space<vmem>>, vector<1x4x8xbf16>
    %59 = vector.shape_cast %58 : vector<1x4x8xbf16> to vector<4x8xbf16>
    %cst_28 = arith.constant dense<0.000000e+00> : vector<64x8xf32>
    %60 = tpu.matmul %57, %59, %cst_28 {dimension_numbers = #tpu.dot_dimension_numbers<[1], [0], [0], [1], [0, 0, 1, 1], [], []>} : vector<64x4xbf16>, vector<4x8xbf16>, vector<64x8xf32> -> vector<64x8xf32>
    %61 = arith.addf %55, %60 : vector<64x8xf32>
    %62 = vector.extract_strided_slice %19 {offsets = [2, 1, 0], sizes = [8, 8, 4], strides = [1, 1, 1]} : vector<10x10x4xbf16> to vector<8x8x4xbf16>
    %63 = vector.shape_cast %62 : vector<8x8x4xbf16> to vector<64x4xbf16>
    %c7 = arith.constant 7 : index
    %c0_29 = arith.constant 0 : index
    %c0_30 = arith.constant 0 : index
    %64 = vector.load %arg5[%c7, %c0_29, %c0_30] : memref<27x4x8xbf16, #tpu.memory_space<vmem>>, vector<1x4x8xbf16>
    %65 = vector.shape_cast %64 : vector<1x4x8xbf16> to vector<4x8xbf16>
    %cst_31 = arith.constant dense<0.000000e+00> : vector<64x8xf32>
    %66 = tpu.matmul %63, %65, %cst_31 {dimension_numbers = #tpu.dot_dimension_numbers<[1], [0], [0], [1], [0, 0, 1, 1], [], []>} : vector<64x4xbf16>, vector<4x8xbf16>, vector<64x8xf32> -> vector<64x8xf32>
    %67 = arith.addf %61, %66 : vector<64x8xf32>
    %68 = vector.extract_strided_slice %19 {offsets = [2, 2, 0], sizes = [8, 8, 4], strides = [1, 1, 1]} : vector<10x10x4xbf16> to vector<8x8x4xbf16>
    %69 = vector.shape_cast %68 : vector<8x8x4xbf16> to vector<64x4xbf16>
    %c8 = arith.constant 8 : index
    %c0_32 = arith.constant 0 : index
    %c0_33 = arith.constant 0 : index
    %70 = vector.load %arg5[%c8, %c0_32, %c0_33] : memref<27x4x8xbf16, #tpu.memory_space<vmem>>, vector<1x4x8xbf16>
    %71 = vector.shape_cast %70 : vector<1x4x8xbf16> to vector<4x8xbf16>
    %cst_34 = arith.constant dense<0.000000e+00> : vector<64x8xf32>
    %72 = tpu.matmul %69, %71, %cst_34 {dimension_numbers = #tpu.dot_dimension_numbers<[1], [0], [0], [1], [0, 0, 1, 1], [], []>} : vector<64x4xbf16>, vector<4x8xbf16>, vector<64x8xf32> -> vector<64x8xf32>
    %73 = arith.addf %67, %72 : vector<64x8xf32>
    %c0_35 = arith.constant 0 : index
    %c0_36 = arith.constant 0 : index
    %c0_37 = arith.constant 0 : index
    %c0_38 = arith.constant 0 : index
    %c0_39 = arith.constant 0 : index
    %74 = vector.load %arg3[%c0_35, %c0_36, %c0_37, %c0_38, %c0_39] : memref<1x1x10x10x4xf32, #tpu.memory_space<vmem>>, vector<1x1x10x10x4xf32>
    %75 = vector.shape_cast %74 : vector<1x1x10x10x4xf32> to vector<10x10x4xf32>
    %76 = vector.shape_cast %1 : vector<1x4xf32> to vector<1x1x4xf32>
    %77 = vector.broadcast %76 : vector<1x1x4xf32> to vector<10x10x4xf32>
    %78 = arith.mulf %75, %77 : vector<10x10x4xf32>
    %79 = vector.shape_cast %2 : vector<1x4xf32> to vector<1x1x4xf32>
    %80 = vector.broadcast %79 : vector<1x1x4xf32> to vector<10x10x4xf32>
    %81 = arith.addf %78, %80 : vector<10x10x4xf32>
    %cst_40 = arith.constant 0.000000e+00 : f32
    %82 = vector.broadcast %cst_40 : f32 to vector<10x10x4xf32>
    %83 = arith.cmpf oge, %81, %82 : vector<10x10x4xf32>
    %84 = vector.shape_cast %3 : vector<1x4xf32> to vector<1x1x4xf32>
    %85 = vector.broadcast %84 : vector<1x1x4xf32> to vector<10x10x4xf32>
    %86 = arith.mulf %85, %81 : vector<10x10x4xf32>
    %87 = arith.select %83, %81, %86 : vector<10x10x4xi1>, vector<10x10x4xf32>
    %88 = arith.truncf %87 : vector<10x10x4xf32> to vector<10x10x4xbf16>
    %89 = vector.extract_strided_slice %88 {offsets = [0, 0, 0], sizes = [8, 8, 4], strides = [1, 1, 1]} : vector<10x10x4xbf16> to vector<8x8x4xbf16>
    %90 = vector.shape_cast %89 : vector<8x8x4xbf16> to vector<64x4xbf16>
    %c9 = arith.constant 9 : index
    %c0_41 = arith.constant 0 : index
    %c0_42 = arith.constant 0 : index
    %91 = vector.load %arg5[%c9, %c0_41, %c0_42] : memref<27x4x8xbf16, #tpu.memory_space<vmem>>, vector<1x4x8xbf16>
    %92 = vector.shape_cast %91 : vector<1x4x8xbf16> to vector<4x8xbf16>
    %cst_43 = arith.constant dense<0.000000e+00> : vector<64x8xf32>
    %93 = tpu.matmul %90, %92, %cst_43 {dimension_numbers = #tpu.dot_dimension_numbers<[1], [0], [0], [1], [0, 0, 1, 1], [], []>} : vector<64x4xbf16>, vector<4x8xbf16>, vector<64x8xf32> -> vector<64x8xf32>
    %94 = arith.addf %73, %93 : vector<64x8xf32>
    %95 = vector.extract_strided_slice %88 {offsets = [0, 1, 0], sizes = [8, 8, 4], strides = [1, 1, 1]} : vector<10x10x4xbf16> to vector<8x8x4xbf16>
    %96 = vector.shape_cast %95 : vector<8x8x4xbf16> to vector<64x4xbf16>
    %c10 = arith.constant 10 : index
    %c0_44 = arith.constant 0 : index
    %c0_45 = arith.constant 0 : index
    %97 = vector.load %arg5[%c10, %c0_44, %c0_45] : memref<27x4x8xbf16, #tpu.memory_space<vmem>>, vector<1x4x8xbf16>
    %98 = vector.shape_cast %97 : vector<1x4x8xbf16> to vector<4x8xbf16>
    %cst_46 = arith.constant dense<0.000000e+00> : vector<64x8xf32>
    %99 = tpu.matmul %96, %98, %cst_46 {dimension_numbers = #tpu.dot_dimension_numbers<[1], [0], [0], [1], [0, 0, 1, 1], [], []>} : vector<64x4xbf16>, vector<4x8xbf16>, vector<64x8xf32> -> vector<64x8xf32>
    %100 = arith.addf %94, %99 : vector<64x8xf32>
    %101 = vector.extract_strided_slice %88 {offsets = [0, 2, 0], sizes = [8, 8, 4], strides = [1, 1, 1]} : vector<10x10x4xbf16> to vector<8x8x4xbf16>
    %102 = vector.shape_cast %101 : vector<8x8x4xbf16> to vector<64x4xbf16>
    %c11 = arith.constant 11 : index
    %c0_47 = arith.constant 0 : index
    %c0_48 = arith.constant 0 : index
    %103 = vector.load %arg5[%c11, %c0_47, %c0_48] : memref<27x4x8xbf16, #tpu.memory_space<vmem>>, vector<1x4x8xbf16>
    %104 = vector.shape_cast %103 : vector<1x4x8xbf16> to vector<4x8xbf16>
    %cst_49 = arith.constant dense<0.000000e+00> : vector<64x8xf32>
    %105 = tpu.matmul %102, %104, %cst_49 {dimension_numbers = #tpu.dot_dimension_numbers<[1], [0], [0], [1], [0, 0, 1, 1], [], []>} : vector<64x4xbf16>, vector<4x8xbf16>, vector<64x8xf32> -> vector<64x8xf32>
    %106 = arith.addf %100, %105 : vector<64x8xf32>
    %107 = vector.extract_strided_slice %88 {offsets = [1, 0, 0], sizes = [8, 8, 4], strides = [1, 1, 1]} : vector<10x10x4xbf16> to vector<8x8x4xbf16>
    %108 = vector.shape_cast %107 : vector<8x8x4xbf16> to vector<64x4xbf16>
    %c12 = arith.constant 12 : index
    %c0_50 = arith.constant 0 : index
    %c0_51 = arith.constant 0 : index
    %109 = vector.load %arg5[%c12, %c0_50, %c0_51] : memref<27x4x8xbf16, #tpu.memory_space<vmem>>, vector<1x4x8xbf16>
    %110 = vector.shape_cast %109 : vector<1x4x8xbf16> to vector<4x8xbf16>
    %cst_52 = arith.constant dense<0.000000e+00> : vector<64x8xf32>
    %111 = tpu.matmul %108, %110, %cst_52 {dimension_numbers = #tpu.dot_dimension_numbers<[1], [0], [0], [1], [0, 0, 1, 1], [], []>} : vector<64x4xbf16>, vector<4x8xbf16>, vector<64x8xf32> -> vector<64x8xf32>
    %112 = arith.addf %106, %111 : vector<64x8xf32>
    %113 = vector.extract_strided_slice %88 {offsets = [1, 1, 0], sizes = [8, 8, 4], strides = [1, 1, 1]} : vector<10x10x4xbf16> to vector<8x8x4xbf16>
    %114 = vector.shape_cast %113 : vector<8x8x4xbf16> to vector<64x4xbf16>
    %c13 = arith.constant 13 : index
    %c0_53 = arith.constant 0 : index
    %c0_54 = arith.constant 0 : index
    %115 = vector.load %arg5[%c13, %c0_53, %c0_54] : memref<27x4x8xbf16, #tpu.memory_space<vmem>>, vector<1x4x8xbf16>
    %116 = vector.shape_cast %115 : vector<1x4x8xbf16> to vector<4x8xbf16>
    %cst_55 = arith.constant dense<0.000000e+00> : vector<64x8xf32>
    %117 = tpu.matmul %114, %116, %cst_55 {dimension_numbers = #tpu.dot_dimension_numbers<[1], [0], [0], [1], [0, 0, 1, 1], [], []>} : vector<64x4xbf16>, vector<4x8xbf16>, vector<64x8xf32> -> vector<64x8xf32>
    %118 = arith.addf %112, %117 : vector<64x8xf32>
    %119 = vector.extract_strided_slice %88 {offsets = [1, 2, 0], sizes = [8, 8, 4], strides = [1, 1, 1]} : vector<10x10x4xbf16> to vector<8x8x4xbf16>
    %120 = vector.shape_cast %119 : vector<8x8x4xbf16> to vector<64x4xbf16>
    %c14 = arith.constant 14 : index
    %c0_56 = arith.constant 0 : index
    %c0_57 = arith.constant 0 : index
    %121 = vector.load %arg5[%c14, %c0_56, %c0_57] : memref<27x4x8xbf16, #tpu.memory_space<vmem>>, vector<1x4x8xbf16>
    %122 = vector.shape_cast %121 : vector<1x4x8xbf16> to vector<4x8xbf16>
    %cst_58 = arith.constant dense<0.000000e+00> : vector<64x8xf32>
    %123 = tpu.matmul %120, %122, %cst_58 {dimension_numbers = #tpu.dot_dimension_numbers<[1], [0], [0], [1], [0, 0, 1, 1], [], []>} : vector<64x4xbf16>, vector<4x8xbf16>, vector<64x8xf32> -> vector<64x8xf32>
    %124 = arith.addf %118, %123 : vector<64x8xf32>
    %125 = vector.extract_strided_slice %88 {offsets = [2, 0, 0], sizes = [8, 8, 4], strides = [1, 1, 1]} : vector<10x10x4xbf16> to vector<8x8x4xbf16>
    %126 = vector.shape_cast %125 : vector<8x8x4xbf16> to vector<64x4xbf16>
    %c15 = arith.constant 15 : index
    %c0_59 = arith.constant 0 : index
    %c0_60 = arith.constant 0 : index
    %127 = vector.load %arg5[%c15, %c0_59, %c0_60] : memref<27x4x8xbf16, #tpu.memory_space<vmem>>, vector<1x4x8xbf16>
    %128 = vector.shape_cast %127 : vector<1x4x8xbf16> to vector<4x8xbf16>
    %cst_61 = arith.constant dense<0.000000e+00> : vector<64x8xf32>
    %129 = tpu.matmul %126, %128, %cst_61 {dimension_numbers = #tpu.dot_dimension_numbers<[1], [0], [0], [1], [0, 0, 1, 1], [], []>} : vector<64x4xbf16>, vector<4x8xbf16>, vector<64x8xf32> -> vector<64x8xf32>
    %130 = arith.addf %124, %129 : vector<64x8xf32>
    %131 = vector.extract_strided_slice %88 {offsets = [2, 1, 0], sizes = [8, 8, 4], strides = [1, 1, 1]} : vector<10x10x4xbf16> to vector<8x8x4xbf16>
    %132 = vector.shape_cast %131 : vector<8x8x4xbf16> to vector<64x4xbf16>
    %c16 = arith.constant 16 : index
    %c0_62 = arith.constant 0 : index
    %c0_63 = arith.constant 0 : index
    %133 = vector.load %arg5[%c16, %c0_62, %c0_63] : memref<27x4x8xbf16, #tpu.memory_space<vmem>>, vector<1x4x8xbf16>
    %134 = vector.shape_cast %133 : vector<1x4x8xbf16> to vector<4x8xbf16>
    %cst_64 = arith.constant dense<0.000000e+00> : vector<64x8xf32>
    %135 = tpu.matmul %132, %134, %cst_64 {dimension_numbers = #tpu.dot_dimension_numbers<[1], [0], [0], [1], [0, 0, 1, 1], [], []>} : vector<64x4xbf16>, vector<4x8xbf16>, vector<64x8xf32> -> vector<64x8xf32>
    %136 = arith.addf %130, %135 : vector<64x8xf32>
    %137 = vector.extract_strided_slice %88 {offsets = [2, 2, 0], sizes = [8, 8, 4], strides = [1, 1, 1]} : vector<10x10x4xbf16> to vector<8x8x4xbf16>
    %138 = vector.shape_cast %137 : vector<8x8x4xbf16> to vector<64x4xbf16>
    %c17 = arith.constant 17 : index
    %c0_65 = arith.constant 0 : index
    %c0_66 = arith.constant 0 : index
    %139 = vector.load %arg5[%c17, %c0_65, %c0_66] : memref<27x4x8xbf16, #tpu.memory_space<vmem>>, vector<1x4x8xbf16>
    %140 = vector.shape_cast %139 : vector<1x4x8xbf16> to vector<4x8xbf16>
    %cst_67 = arith.constant dense<0.000000e+00> : vector<64x8xf32>
    %141 = tpu.matmul %138, %140, %cst_67 {dimension_numbers = #tpu.dot_dimension_numbers<[1], [0], [0], [1], [0, 0, 1, 1], [], []>} : vector<64x4xbf16>, vector<4x8xbf16>, vector<64x8xf32> -> vector<64x8xf32>
    %142 = arith.addf %136, %141 : vector<64x8xf32>
    %c0_68 = arith.constant 0 : index
    %c0_69 = arith.constant 0 : index
    %c0_70 = arith.constant 0 : index
    %c0_71 = arith.constant 0 : index
    %c0_72 = arith.constant 0 : index
    %143 = vector.load %arg4[%c0_68, %c0_69, %c0_70, %c0_71, %c0_72] : memref<1x1x10x10x4xf32, #tpu.memory_space<vmem>>, vector<1x1x10x10x4xf32>
    %144 = vector.shape_cast %143 : vector<1x1x10x10x4xf32> to vector<10x10x4xf32>
    %145 = vector.shape_cast %1 : vector<1x4xf32> to vector<1x1x4xf32>
    %146 = vector.broadcast %145 : vector<1x1x4xf32> to vector<10x10x4xf32>
    %147 = arith.mulf %144, %146 : vector<10x10x4xf32>
    %148 = vector.shape_cast %2 : vector<1x4xf32> to vector<1x1x4xf32>
    %149 = vector.broadcast %148 : vector<1x1x4xf32> to vector<10x10x4xf32>
    %150 = arith.addf %147, %149 : vector<10x10x4xf32>
    %cst_73 = arith.constant 0.000000e+00 : f32
    %151 = vector.broadcast %cst_73 : f32 to vector<10x10x4xf32>
    %152 = arith.cmpf oge, %150, %151 : vector<10x10x4xf32>
    %153 = vector.shape_cast %3 : vector<1x4xf32> to vector<1x1x4xf32>
    %154 = vector.broadcast %153 : vector<1x1x4xf32> to vector<10x10x4xf32>
    %155 = arith.mulf %154, %150 : vector<10x10x4xf32>
    %156 = arith.select %152, %150, %155 : vector<10x10x4xi1>, vector<10x10x4xf32>
    %157 = arith.truncf %156 : vector<10x10x4xf32> to vector<10x10x4xbf16>
    %158 = vector.extract_strided_slice %157 {offsets = [0, 0, 0], sizes = [8, 8, 4], strides = [1, 1, 1]} : vector<10x10x4xbf16> to vector<8x8x4xbf16>
    %159 = vector.shape_cast %158 : vector<8x8x4xbf16> to vector<64x4xbf16>
    %c18 = arith.constant 18 : index
    %c0_74 = arith.constant 0 : index
    %c0_75 = arith.constant 0 : index
    %160 = vector.load %arg5[%c18, %c0_74, %c0_75] : memref<27x4x8xbf16, #tpu.memory_space<vmem>>, vector<1x4x8xbf16>
    %161 = vector.shape_cast %160 : vector<1x4x8xbf16> to vector<4x8xbf16>
    %cst_76 = arith.constant dense<0.000000e+00> : vector<64x8xf32>
    %162 = tpu.matmul %159, %161, %cst_76 {dimension_numbers = #tpu.dot_dimension_numbers<[1], [0], [0], [1], [0, 0, 1, 1], [], []>} : vector<64x4xbf16>, vector<4x8xbf16>, vector<64x8xf32> -> vector<64x8xf32>
    %163 = arith.addf %142, %162 : vector<64x8xf32>
    %164 = vector.extract_strided_slice %157 {offsets = [0, 1, 0], sizes = [8, 8, 4], strides = [1, 1, 1]} : vector<10x10x4xbf16> to vector<8x8x4xbf16>
    %165 = vector.shape_cast %164 : vector<8x8x4xbf16> to vector<64x4xbf16>
    %c19 = arith.constant 19 : index
    %c0_77 = arith.constant 0 : index
    %c0_78 = arith.constant 0 : index
    %166 = vector.load %arg5[%c19, %c0_77, %c0_78] : memref<27x4x8xbf16, #tpu.memory_space<vmem>>, vector<1x4x8xbf16>
    %167 = vector.shape_cast %166 : vector<1x4x8xbf16> to vector<4x8xbf16>
    %cst_79 = arith.constant dense<0.000000e+00> : vector<64x8xf32>
    %168 = tpu.matmul %165, %167, %cst_79 {dimension_numbers = #tpu.dot_dimension_numbers<[1], [0], [0], [1], [0, 0, 1, 1], [], []>} : vector<64x4xbf16>, vector<4x8xbf16>, vector<64x8xf32> -> vector<64x8xf32>
    %169 = arith.addf %163, %168 : vector<64x8xf32>
    %170 = vector.extract_strided_slice %157 {offsets = [0, 2, 0], sizes = [8, 8, 4], strides = [1, 1, 1]} : vector<10x10x4xbf16> to vector<8x8x4xbf16>
    %171 = vector.shape_cast %170 : vector<8x8x4xbf16> to vector<64x4xbf16>
    %c20 = arith.constant 20 : index
    %c0_80 = arith.constant 0 : index
    %c0_81 = arith.constant 0 : index
    %172 = vector.load %arg5[%c20, %c0_80, %c0_81] : memref<27x4x8xbf16, #tpu.memory_space<vmem>>, vector<1x4x8xbf16>
    %173 = vector.shape_cast %172 : vector<1x4x8xbf16> to vector<4x8xbf16>
    %cst_82 = arith.constant dense<0.000000e+00> : vector<64x8xf32>
    %174 = tpu.matmul %171, %173, %cst_82 {dimension_numbers = #tpu.dot_dimension_numbers<[1], [0], [0], [1], [0, 0, 1, 1], [], []>} : vector<64x4xbf16>, vector<4x8xbf16>, vector<64x8xf32> -> vector<64x8xf32>
    %175 = arith.addf %169, %174 : vector<64x8xf32>
    %176 = vector.extract_strided_slice %157 {offsets = [1, 0, 0], sizes = [8, 8, 4], strides = [1, 1, 1]} : vector<10x10x4xbf16> to vector<8x8x4xbf16>
    %177 = vector.shape_cast %176 : vector<8x8x4xbf16> to vector<64x4xbf16>
    %c21 = arith.constant 21 : index
    %c0_83 = arith.constant 0 : index
    %c0_84 = arith.constant 0 : index
    %178 = vector.load %arg5[%c21, %c0_83, %c0_84] : memref<27x4x8xbf16, #tpu.memory_space<vmem>>, vector<1x4x8xbf16>
    %179 = vector.shape_cast %178 : vector<1x4x8xbf16> to vector<4x8xbf16>
    %cst_85 = arith.constant dense<0.000000e+00> : vector<64x8xf32>
    %180 = tpu.matmul %177, %179, %cst_85 {dimension_numbers = #tpu.dot_dimension_numbers<[1], [0], [0], [1], [0, 0, 1, 1], [], []>} : vector<64x4xbf16>, vector<4x8xbf16>, vector<64x8xf32> -> vector<64x8xf32>
    %181 = arith.addf %175, %180 : vector<64x8xf32>
    %182 = vector.extract_strided_slice %157 {offsets = [1, 1, 0], sizes = [8, 8, 4], strides = [1, 1, 1]} : vector<10x10x4xbf16> to vector<8x8x4xbf16>
    %183 = vector.shape_cast %182 : vector<8x8x4xbf16> to vector<64x4xbf16>
    %c22 = arith.constant 22 : index
    %c0_86 = arith.constant 0 : index
    %c0_87 = arith.constant 0 : index
    %184 = vector.load %arg5[%c22, %c0_86, %c0_87] : memref<27x4x8xbf16, #tpu.memory_space<vmem>>, vector<1x4x8xbf16>
    %185 = vector.shape_cast %184 : vector<1x4x8xbf16> to vector<4x8xbf16>
    %cst_88 = arith.constant dense<0.000000e+00> : vector<64x8xf32>
    %186 = tpu.matmul %183, %185, %cst_88 {dimension_numbers = #tpu.dot_dimension_numbers<[1], [0], [0], [1], [0, 0, 1, 1], [], []>} : vector<64x4xbf16>, vector<4x8xbf16>, vector<64x8xf32> -> vector<64x8xf32>
    %187 = arith.addf %181, %186 : vector<64x8xf32>
    %188 = vector.extract_strided_slice %157 {offsets = [1, 2, 0], sizes = [8, 8, 4], strides = [1, 1, 1]} : vector<10x10x4xbf16> to vector<8x8x4xbf16>
    %189 = vector.shape_cast %188 : vector<8x8x4xbf16> to vector<64x4xbf16>
    %c23 = arith.constant 23 : index
    %c0_89 = arith.constant 0 : index
    %c0_90 = arith.constant 0 : index
    %190 = vector.load %arg5[%c23, %c0_89, %c0_90] : memref<27x4x8xbf16, #tpu.memory_space<vmem>>, vector<1x4x8xbf16>
    %191 = vector.shape_cast %190 : vector<1x4x8xbf16> to vector<4x8xbf16>
    %cst_91 = arith.constant dense<0.000000e+00> : vector<64x8xf32>
    %192 = tpu.matmul %189, %191, %cst_91 {dimension_numbers = #tpu.dot_dimension_numbers<[1], [0], [0], [1], [0, 0, 1, 1], [], []>} : vector<64x4xbf16>, vector<4x8xbf16>, vector<64x8xf32> -> vector<64x8xf32>
    %193 = arith.addf %187, %192 : vector<64x8xf32>
    %194 = vector.extract_strided_slice %157 {offsets = [2, 0, 0], sizes = [8, 8, 4], strides = [1, 1, 1]} : vector<10x10x4xbf16> to vector<8x8x4xbf16>
    %195 = vector.shape_cast %194 : vector<8x8x4xbf16> to vector<64x4xbf16>
    %c24 = arith.constant 24 : index
    %c0_92 = arith.constant 0 : index
    %c0_93 = arith.constant 0 : index
    %196 = vector.load %arg5[%c24, %c0_92, %c0_93] : memref<27x4x8xbf16, #tpu.memory_space<vmem>>, vector<1x4x8xbf16>
    %197 = vector.shape_cast %196 : vector<1x4x8xbf16> to vector<4x8xbf16>
    %cst_94 = arith.constant dense<0.000000e+00> : vector<64x8xf32>
    %198 = tpu.matmul %195, %197, %cst_94 {dimension_numbers = #tpu.dot_dimension_numbers<[1], [0], [0], [1], [0, 0, 1, 1], [], []>} : vector<64x4xbf16>, vector<4x8xbf16>, vector<64x8xf32> -> vector<64x8xf32>
    %199 = arith.addf %193, %198 : vector<64x8xf32>
    %200 = vector.extract_strided_slice %157 {offsets = [2, 1, 0], sizes = [8, 8, 4], strides = [1, 1, 1]} : vector<10x10x4xbf16> to vector<8x8x4xbf16>
    %201 = vector.shape_cast %200 : vector<8x8x4xbf16> to vector<64x4xbf16>
    %c25 = arith.constant 25 : index
    %c0_95 = arith.constant 0 : index
    %c0_96 = arith.constant 0 : index
    %202 = vector.load %arg5[%c25, %c0_95, %c0_96] : memref<27x4x8xbf16, #tpu.memory_space<vmem>>, vector<1x4x8xbf16>
    %203 = vector.shape_cast %202 : vector<1x4x8xbf16> to vector<4x8xbf16>
    %cst_97 = arith.constant dense<0.000000e+00> : vector<64x8xf32>
    %204 = tpu.matmul %201, %203, %cst_97 {dimension_numbers = #tpu.dot_dimension_numbers<[1], [0], [0], [1], [0, 0, 1, 1], [], []>} : vector<64x4xbf16>, vector<4x8xbf16>, vector<64x8xf32> -> vector<64x8xf32>
    %205 = arith.addf %199, %204 : vector<64x8xf32>
    %206 = vector.extract_strided_slice %157 {offsets = [2, 2, 0], sizes = [8, 8, 4], strides = [1, 1, 1]} : vector<10x10x4xbf16> to vector<8x8x4xbf16>
    %207 = vector.shape_cast %206 : vector<8x8x4xbf16> to vector<64x4xbf16>
    %c26 = arith.constant 26 : index
    %c0_98 = arith.constant 0 : index
    %c0_99 = arith.constant 0 : index
    %208 = vector.load %arg5[%c26, %c0_98, %c0_99] : memref<27x4x8xbf16, #tpu.memory_space<vmem>>, vector<1x4x8xbf16>
    %209 = vector.shape_cast %208 : vector<1x4x8xbf16> to vector<4x8xbf16>
    %cst_100 = arith.constant dense<0.000000e+00> : vector<64x8xf32>
    %210 = tpu.matmul %207, %209, %cst_100 {dimension_numbers = #tpu.dot_dimension_numbers<[1], [0], [0], [1], [0, 0, 1, 1], [], []>} : vector<64x4xbf16>, vector<4x8xbf16>, vector<64x8xf32> -> vector<64x8xf32>
    %211 = arith.addf %205, %210 : vector<64x8xf32>
    %c0_101 = arith.constant 0 : index
    %c0_102 = arith.constant 0 : index
    %212 = vector.load %arg7[%c0_101, %c0_102] : memref<1x8xf32, #tpu.memory_space<vmem>>, vector<1x8xf32>
    %213 = vector.broadcast %212 : vector<1x8xf32> to vector<64x8xf32>
    %214 = arith.addf %211, %213 : vector<64x8xf32>
    %c0_103 = arith.constant 0 : index
    %c0_104 = arith.constant 0 : index
    %c0_105 = arith.constant 0 : index
    %c0_106 = arith.constant 0 : index
    %215 = vector.load %arg8[%c0_103, %c0_104, %c0_105, %c0_106] : memref<1x1x64x8xf32, #tpu.memory_space<vmem>>, vector<1x1x64x8xf32>
    %216 = vector.shape_cast %215 : vector<1x1x64x8xf32> to vector<64x8xf32>
    %217 = vector.shape_cast %214 : vector<64x8xf32> to vector<1x1x64x8xf32>
    tpu.vector_store %arg8[%c0_103, %c0_104, %c0_105, %c0_106], %217 {strides = array<i32>} : memref<1x1x64x8xf32, #tpu.memory_space<vmem>>, vector<1x1x64x8xf32>,
    return
  }
  func.func @transform_0(%arg0: i32, %arg1: i32) -> (i32, i32, i32, i32, i32) {
    %c0_i32 = arith.constant 0 : i32
    %0 = arith.addi %arg1, %c0_i32 : i32
    %c0_i32_0 = arith.constant 0 : i32
    %c0_i32_1 = arith.constant 0 : i32
    %c0_i32_2 = arith.constant 0 : i32
    %c0_i32_3 = arith.constant 0 : i32
    return %arg0, %0, %c0_i32_0, %c0_i32_1, %c0_i32_2 : i32, i32, i32, i32, i32
  }
  func.func @transform_1(%arg0: i32, %arg1: i32) -> (i32, i32, i32, i32, i32) {
    %c1_i32 = arith.constant 1 : i32
    %0 = arith.addi %arg1, %c1_i32 : i32
    %c0_i32 = arith.constant 0 : i32
    %c0_i32_0 = arith.constant 0 : i32
    %c0_i32_1 = arith.constant 0 : i32
    %c0_i32_2 = arith.constant 0 : i32
    return %arg0, %0, %c0_i32, %c0_i32_0, %c0_i32_1 : i32, i32, i32, i32, i32
  }
  func.func @transform_2(%arg0: i32, %arg1: i32) -> (i32, i32, i32, i32, i32) {
    %c2_i32 = arith.constant 2 : i32
    %0 = arith.addi %arg1, %c2_i32 : i32
    %c0_i32 = arith.constant 0 : i32
    %c0_i32_0 = arith.constant 0 : i32
    %c0_i32_1 = arith.constant 0 : i32
    %c0_i32_2 = arith.constant 0 : i32
    return %arg0, %0, %c0_i32, %c0_i32_0, %c0_i32_1 : i32, i32, i32, i32, i32
  }
  func.func @transform_3(%arg0: i32, %arg1: i32) -> (i32, i32, i32) {
    %c0_i32 = arith.constant 0 : i32
    %c0_i32_0 = arith.constant 0 : i32
    %c0_i32_1 = arith.constant 0 : i32
    %c0_i32_2 = arith.constant 0 : i32
    return %c0_i32, %c0_i32_0, %c0_i32_1 : i32, i32, i32
  }
  func.func @transform_4(%arg0: i32, %arg1: i32) -> (i32, i32) {
    %c0_i32 = arith.constant 0 : i32
    %c0_i32_0 = arith.constant 0 : i32
    %c0_i32_1 = arith.constant 0 : i32
    return %c0_i32, %c0_i32_0 : i32, i32
  }
  func.func @transform_5(%arg0: i32, %arg1: i32) -> (i32, i32) {
    %c0_i32 = arith.constant 0 : i32
    %c0_i32_0 = arith.constant 0 : i32
    %c0_i32_1 = arith.constant 0 : i32
    return %c0_i32, %c0_i32_0 : i32, i32
  }
  func.func @transform_6(%arg0: i32, %arg1: i32) -> (i32, i32, i32, i32) {
    %c0_i32 = arith.constant 0 : i32
    %c0_i32_0 = arith.constant 0 : i32
    %c0_i32_1 = arith.constant 0 : i32
    return %arg0, %arg1, %c0_i32, %c0_i32_0 : i32, i32, i32, i32
  }
}

</mosaic_0001>

<llo_original>
// kernel: tpu_custom_call.1
$region0: #{tpu_custom_call.1}
  #allocation0 [shape = 'u32[]', space=smem, size = 0x4, offset = 0x4, fixed_abs, tag = 'smem constant byte address 0x4 - core index']
  #allocation1 [shape = 'u32[144,128]{1,0:T(1,128)}', space=vmem, size = 0x12000, scoped, tag = 'internal scratch']
  %s0 = inlined_call_operand.vmem [shape: f32[2,10,10,10,4], index: 0, kind: input, shape index: {}]
  %s1 = inlined_call_operand.vmem [shape: f32[2,10,10,10,4], index: 1, kind: input, shape index: {}]
  %s2 = inlined_call_operand.vmem [shape: f32[2,10,10,10,4], index: 2, kind: input, shape index: {}]
  %s3 = inlined_call_operand.vmem [shape: bf16[27,4,8], index: 3, kind: input, shape index: {}]
  %s4 = inlined_call_operand.vmem [shape: f32[3,4], index: 4, kind: input, shape index: {}]
  %s5 = inlined_call_operand.vmem [shape: f32[1,8], index: 5, kind: input, shape index: {}]
  %s6 = inlined_call_operand.vmem [shape: f32[2,8,64,8], index: 6, kind: output, shape index: {}]
  %s7 = sld [smem:[#allocation0]]
  $region57: #{tpu_custom_call.1} parent=0
    _
  %s9 = ssub.s32 1, %s7
  %s10 = scalar_select 0, %s9, %s7
  loop: start=0, step=1, limit=18
  $region2: #{tpu_custom_call.1} parent=0 // loop_pre_header
    _
  $region3: #{tpu_custom_call.1} parent=0 // loop_header
    %s12 = sphi 0, %s16
    %p13 = scmp.ge.s32.totalorder %s12, 18
    %s19 = sphi 0, %s31
    %s20 = sphi 0, %s27
    %s21 = sphi 0, %s19
    %s22 = sphi 0, %s20
    %s23 = sphi 0, %s21
    %s24 = sphi 0, %s22
    %s36 = sphi 0, %s38
    %s39 = sphi 0, %s36
    %s40 = sphi 0, %s39
    %s56 = sphi 0, %s40
    %s66 = sphi 0, %s68
    %s69 = sphi 0, %s66
    %s70 = sphi 0, %s69
    %s86 = sphi 0, %s70
    %s96 = sphi 0, %s98
    %s99 = sphi 0, %s96
    %s100 = sphi 0, %s99
    %s116 = sphi 0, %s100
    %s120 = sphi 0, %s120
    %s122 = sphi 0, %s120
    %s123 = sphi 0, %s122
    %s137 = sphi 0, %s123
    %s141 = sphi 0, %s141
    %s143 = sphi 0, %s141
    %s144 = sphi 0, %s143
    %s158 = sphi 0, %s144
    %s162 = sphi 0, %s162
    %s164 = sphi 0, %s162
    %s165 = sphi 0, %s164
    %s179 = sphi 0, %s165
    %s187 = sphi 0, %s189
    %s190 = sphi 0, %s187
    %s191 = sphi 0, %s190
    %s207 = sphi 0, %s191
  $region4: #{tpu_custom_call.1} parent=0 // loop_header_branch
    %15 = sbr.rel (%p13) target = $region8
  $region5: #{tpu_custom_call.1} parent=0 // loop_body
    %s17 = ssub.s32 %s12, 1
    %s18 = ssub.s32 %s12, 2
    %s25 = sadd.s32 1, %s20
    %p26 = scmp.ge.s32.totalorder %s25, 8
    %s27 = scalar_select %p26, 0, %s25
    %s28 = sadd.s32 1, %s19
    %s29 = scalar_select %p26, %s28, %s19
    %p30 = scmp.ge.s32.totalorder %s29, 2
    %s31 = scalar_select %p30, 0, %s29
    %s32 = ssub.s32 %s19, %s31
    %s33 = ssub.s32 %s20, %s27
    %s34 = sor.u32 %s32, %s33
    %p35 = scmp.eq.s32.totalorder %s34, 0
    %s37 = sadd.s32 %s36, 1
    %s38 = scalar_select %p35, %s36, %s37
    %p41 = pneg %p35
    %p42 = scmp.eq.s32.totalorder %s12, 15
    %p43 = por %p41, %p42
    %p44 = scmp.ne.s32.totalorder %s36, %s39
    %p45 = scmp.eq.s32.totalorder %s12, 0
    %p46 = por %p44, %p45
    %p47 = scmp.ne.s32.totalorder %s36, %s39
    %p48 = scmp.eq.s32.totalorder %s17, 15
    %p49 = por %p47, %p48
    %p50 = scmp.ne.s32.totalorder %s39, %s40
    %p51 = scmp.eq.s32.totalorder %s17, 0
    %p52 = por %p50, %p51
    %p53 = scmp.ne.s32.totalorder %s39, %s40
    %p54 = scmp.eq.s32.totalorder %s18, 15
    %p55 = por %p53, %p54
    %p57 = scmp.ne.s32.totalorder %s40, %s56
    %p58 = scmp.eq.s32.totalorder %s18, 0
    %p59 = por %p57, %p58
    %s60 = sadd.s32 %s20, 1
    %s61 = sadd.s32 %s27, 1
    %s62 = ssub.s32 %s19, %s31
    %s63 = ssub.s32 %s60, %s61
    %s64 = sor.u32 %s62, %s63
    %p65 = scmp.eq.s32.totalorder %s64, 0
    %s67 = sadd.s32 %s66, 1
    %s68 = scalar_select %p65, %s66, %s67
    %p71 = pneg %p65
    %p72 = scmp.eq.s32.totalorder %s12, 15
    %p73 = por %p71, %p72
    %p74 = scmp.ne.s32.totalorder %s66, %s69
    %p75 = scmp.eq.s32.totalorder %s12, 0
    %p76 = por %p74, %p75
    %p77 = scmp.ne.s32.totalorder %s66, %s69
    %p78 = scmp.eq.s32.totalorder %s17, 15
    %p79 = por %p77, %p78
    %p80 = scmp.ne.s32.totalorder %s69, %s70
    %p81 = scmp.eq.s32.totalorder %s17, 0
    %p82 = por %p80, %p81
    %p83 = scmp.ne.s32.totalorder %s69, %s70
    %p84 = scmp.eq.s32.totalorder %s18, 15
    %p85 = por %p83, %p84
    %p87 = scmp.ne.s32.totalorder %s70, %s86
    %p88 = scmp.eq.s32.totalorder %s18, 0
    %p89 = por %p87, %p88
    %s90 = sadd.s32 %s20, 2
    %s91 = sadd.s32 %s27, 2
    %s92 = ssub.s32 %s19, %s31
    %s93 = ssub.s32 %s90, %s91
    %s94 = sor.u32 %s92, %s93
    %p95 = scmp.eq.s32.totalorder %s94, 0
    %s97 = sadd.s32 %s96, 1
    %s98 = scalar_select %p95, %s96, %s97
    %p101 = pneg %p95
    %p102 = scmp.eq.s32.totalorder %s12, 15
    %p103 = por %p101, %p102
    %p104 = scmp.ne.s32.totalorder %s96, %s99
    %p105 = scmp.eq.s32.totalorder %s12, 0
    %p106 = por %p104, %p105
    %p107 = scmp.ne.s32.totalorder %s96, %s99
    %p108 = scmp.eq.s32.totalorder %s17, 15
    %p109 = por %p107, %p108
    %p110 = scmp.ne.s32.totalorder %s99, %s100
    %p111 = scmp.eq.s32.totalorder %s17, 0
    %p112 = por %p110, %p111
    %p113 = scmp.ne.s32.totalorder %s99, %s100
    %p114 = scmp.eq.s32.totalorder %s18, 15
    %p115 = por %p113, %p114
    %p117 = scmp.ne.s32.totalorder %s100, %s116
    %p118 = scmp.eq.s32.totalorder %s18, 0
    %p119 = por %p117, %p118
    %s121 = sadd.s32 %s120, 1
    %p124 = scmp.eq.s32.totalorder %s12, 15
    %p125 = scmp.ne.s32.totalorder %s120, %s122
    %p126 = scmp.eq.s32.totalorder %s12, 0
    %p127 = por %p125, %p126
    %p128 = scmp.ne.s32.totalorder %s120, %s122
    %p129 = scmp.eq.s32.totalorder %s17, 15
    %p130 = por %p128, %p129
    %p131 = scmp.ne.s32.totalorder %s122, %s123
    %p132 = scmp.eq.s32.totalorder %s17, 0
    %p133 = por %p131, %p132
    %p134 = scmp.ne.s32.totalorder %s122, %s123
    %p135 = scmp.eq.s32.totalorder %s18, 15
    %p136 = por %p134, %p135
    %p138 = scmp.ne.s32.totalorder %s123, %s137
    %p139 = scmp.eq.s32.totalorder %s18, 0
    %p140 = por %p138, %p139
    %s142 = sadd.s32 %s141, 1
    %p145 = scmp.eq.s32.totalorder %s12, 15
    %p146 = scmp.ne.s32.totalorder %s141, %s143
    %p147 = scmp.eq.s32.totalorder %s12, 0
    %p148 = por %p146, %p147
    %p149 = scmp.ne.s32.totalorder %s141, %s143
    %p150 = scmp.eq.s32.totalorder %s17, 15
    %p151 = por %p149, %p150
    %p152 = scmp.ne.s32.totalorder %s143, %s144
    %p153 = scmp.eq.s32.totalorder %s17, 0
    %p154 = por %p152, %p153
    %p155 = scmp.ne.s32.totalorder %s143, %s144
    %p156 = scmp.eq.s32.totalorder %s18, 15
    %p157 = por %p155, %p156
    %p159 = scmp.ne.s32.totalorder %s144, %s158
    %p160 = scmp.eq.s32.totalorder %s18, 0
    %p161 = por %p159, %p160
    %s163 = sadd.s32 %s162, 1
    %p166 = scmp.eq.s32.totalorder %s12, 15
    %p167 = scmp.ne.s32.totalorder %s162, %s164
    %p168 = scmp.eq.s32.totalorder %s12, 0
    %p169 = por %p167, %p168
    %p170 = scmp.ne.s32.totalorder %s162, %s164
    %p171 = scmp.eq.s32.totalorder %s17, 15
    %p172 = por %p170, %p171
    %p173 = scmp.ne.s32.totalorder %s164, %s165
    %p174 = scmp.eq.s32.totalorder %s17, 0
    %p175 = por %p173, %p174
    %p176 = scmp.ne.s32.totalorder %s164, %s165
    %p177 = scmp.eq.s32.totalorder %s18, 15
    %p178 = por %p176, %p177
    %p180 = scmp.ne.s32.totalorder %s165, %s179
    %p181 = scmp.eq.s32.totalorder %s18, 0
    %p182 = por %p180, %p181
    %s183 = ssub.s32 %s19, %s31
    %s184 = ssub.s32 %s20, %s27
    %s185 = sor.u32 %s183, %s184
    %p186 = scmp.eq.s32.totalorder %s185, 0
    %s188 = sadd.s32 %s187, 1
    %s189 = scalar_select %p186, %s187, %s188
    %p192 = pneg %p186
    %p193 = scmp.eq.s32.totalorder %s12, 15
    %p194 = por %p192, %p193
    %p195 = scmp.ne.s32.totalorder %s187, %s190
    %p196 = scmp.eq.s32.totalorder %s12, 0
    %p197 = por %p195, %p196
    %p198 = scmp.ne.s32.totalorder %s187, %s190
    %p199 = scmp.eq.s32.totalorder %s17, 15
    %p200 = por %p198, %p199
    %p201 = scmp.ne.s32.totalorder %s190, %s191
    %p202 = scmp.eq.s32.totalorder %s17, 0
    %p203 = por %p201, %p202
    %p204 = scmp.ne.s32.totalorder %s190, %s191
    %p205 = scmp.eq.s32.totalorder %s18, 15
    %p206 = por %p204, %p205
    %p208 = scmp.ne.s32.totalorder %s191, %s207
    %p209 = scmp.eq.s32.totalorder %s18, 0
    %p210 = por %p208, %p209
    %p211 = scmp.le.s32.totalorder 1, %s12
    %p212 = scmp.lt.s32.totalorder %s12, 17
    %p213 = pnand %p211, %p212
    %p214 = pneg %p213
    // Predicated region
    $region9: #{tpu_custom_call.1} parent=5 // pred_check
      _
    $region10: #{tpu_custom_call.1} parent=5 // pred_check_branch
      %216 = sbr.rel (%p213) target = $region12
    $region11: #{tpu_custom_call.1} parent=5 // pred_region
      %s217 = ssub.s32 %s12, 1
      // Predicated region
      $region13: #{tpu_custom_call.1} parent=11 // pred_check
        %p218 = pneg %p133
      $region14: #{tpu_custom_call.1} parent=11 // pred_check_branch
        %220 = sbr.rel (%p218) target = $region16
      $region15: #{tpu_custom_call.1} parent=11 // pred_region
        _
      $region16: #{tpu_custom_call.1} parent=11 // pred_fallthru
        _
      // Predicated region
      $region17: #{tpu_custom_call.1} parent=11 // pred_check
        %p221 = pneg %p154
      $region18: #{tpu_custom_call.1} parent=11 // pred_check_branch
        %223 = sbr.rel (%p221) target = $region20
      $region19: #{tpu_custom_call.1} parent=11 // pred_region
        _
      $region20: #{tpu_custom_call.1} parent=11 // pred_fallthru
        _
      // Predicated region
      $region21: #{tpu_custom_call.1} parent=11 // pred_check
        %p224 = pneg %p175
      $region22: #{tpu_custom_call.1} parent=11 // pred_check_branch
        %226 = sbr.rel (%p224) target = $region24
      $region23: #{tpu_custom_call.1} parent=11 // pred_region
        _
      $region24: #{tpu_custom_call.1} parent=11 // pred_fallthru
        _
    $region12: #{tpu_custom_call.1} parent=5 // pred_fallthru
      _
    %p227 = scmp.lt.s32.totalorder %s12, 16
    // Predicated region
    $region25: #{tpu_custom_call.1} parent=5 // pred_check
      %p228 = pneg %p227
    $region26: #{tpu_custom_call.1} parent=5 // pred_check_branch
      %230 = sbr.rel (%p228) target = $region28
    $region27: #{tpu_custom_call.1} parent=5 // pred_region
      // Predicated region
      $region29: #{tpu_custom_call.1} parent=27 // pred_check
        %p231 = pneg %p46
      $region30: #{tpu_custom_call.1} parent=27 // pred_check_branch
        %233 = sbr.rel (%p231) target = $region32
      $region31: #{tpu_custom_call.1} parent=27 // pred_region
        %p234 = scmp.lt.s32.totalorder %s19, 1
        %s235 = scalar_select %p234, %s19, 1
        %p236 = scmp.lt.s32.totalorder %s20, 9
        %s237 = scalar_select %p236, %s20, 9
        %s238 = smul.addr %s237, 20
        %s239 = smul.addr %s235, 200
        %s240 = sadd.s32 %s238, %s239
        %s241 = smul.addr %s240, 8
        %s242 = scalar_lea.vmem %s0, %s241
      $region32: #{tpu_custom_call.1} parent=27 // pred_fallthru
        _
      // Predicated region
      $region33: #{tpu_custom_call.1} parent=27 // pred_check
        %p243 = pneg %p76
      $region34: #{tpu_custom_call.1} parent=27 // pred_check_branch
        %245 = sbr.rel (%p243) target = $region36
      $region35: #{tpu_custom_call.1} parent=27 // pred_region
        %s246 = sadd.s32 %s20, 1
        %p247 = scmp.lt.s32.totalorder %s19, 1
        %s248 = scalar_select %p247, %s19, 1
        %p249 = scmp.lt.s32.totalorder %s246, 9
        %s250 = scalar_select %p249, %s246, 9
        %s251 = smul.addr %s250, 20
        %s252 = smul.addr %s248, 200
        %s253 = sadd.s32 %s251, %s252
        %s254 = smul.addr %s253, 8
        %s255 = scalar_lea.vmem %s1, %s254
        %s256 = sadd.s32 %s20, 1
      $region36: #{tpu_custom_call.1} parent=27 // pred_fallthru
        _
      // Predicated region
      $region37: #{tpu_custom_call.1} parent=27 // pred_check
        %p257 = pneg %p106
      $region38: #{tpu_custom_call.1} parent=27 // pred_check_branch
        %259 = sbr.rel (%p257) target = $region40
      $region39: #{tpu_custom_call.1} parent=27 // pred_region
        %s260 = sadd.s32 %s20, 2
        %p261 = scmp.lt.s32.totalorder %s19, 1
        %s262 = scalar_select %p261, %s19, 1
        %p263 = scmp.lt.s32.totalorder %s260, 9
        %s264 = scalar_select %p263, %s260, 9
        %s265 = smul.addr %s264, 20
        %s266 = smul.addr %s262, 200
        %s267 = sadd.s32 %s265, %s266
        %s268 = smul.addr %s267, 8
        %s269 = scalar_lea.vmem %s2, %s268
        %s270 = sadd.s32 %s20, 2
      $region40: #{tpu_custom_call.1} parent=27 // pred_fallthru
        _
    $region28: #{tpu_custom_call.1} parent=5 // pred_fallthru
      _
    %p271 = scmp.le.s32.totalorder 1, %s12
    %p272 = scmp.lt.s32.totalorder %s12, 17
    %p273 = pnand %p271, %p272
    %p274 = pneg %p273
    // Predicated region
    $region41: #{tpu_custom_call.1} parent=5 // pred_check
      _
    $region42: #{tpu_custom_call.1} parent=5 // pred_check_branch
      %276 = sbr.rel (%p273) target = $region44
    $region43: #{tpu_custom_call.1} parent=5 // pred_region
      %s277 = ssub.s32 %s12, 1
      %p278 = scmp.lt.s32.totalorder %s21, 1
      %s279 = scalar_select %p278, %s21, 1
      %p280 = scmp.lt.s32.totalorder %s22, 9
      %s281 = scalar_select %p280, %s22, 9
      %s282 = smul.addr %s281, 20
      %s283 = smul.addr %s279, 200
      %s284 = sadd.s32 %s282, %s283
      %s285 = smul.addr %s284, 8
      %s286 = scalar_lea.vmem %s0, %s285
      %p287 = pneg %p52
      %p288 = pneg %p49
      %s289 = sadd.s32 %s22, 1
      %p290 = scmp.lt.s32.totalorder %s21, 1
      %s291 = scalar_select %p290, %s21, 1
      %p292 = scmp.lt.s32.totalorder %s289, 9
      %s293 = scalar_select %p292, %s289, 9
      %s294 = smul.addr %s293, 20
      %s295 = smul.addr %s291, 200
      %s296 = sadd.s32 %s294, %s295
      %s297 = smul.addr %s296, 8
      %s298 = scalar_lea.vmem %s1, %s297
      %p299 = pneg %p82
      %p300 = pneg %p79
      %s301 = sadd.s32 %s22, 2
      %p302 = scmp.lt.s32.totalorder %s21, 1
      %s303 = scalar_select %p302, %s21, 1
      %p304 = scmp.lt.s32.totalorder %s301, 9
      %s305 = scalar_select %p304, %s301, 9
      %s306 = smul.addr %s305, 20
      %s307 = smul.addr %s303, 200
      %s308 = sadd.s32 %s306, %s307
      %s309 = smul.addr %s308, 8
      %s310 = scalar_lea.vmem %s2, %s309
      %p311 = pneg %p112
      %p312 = pneg %p109
      %p313 = pneg %p133
      %p314 = pneg %p130
      %p315 = pneg %p154
      %p316 = pneg %p151
      %p317 = pneg %p175
      %p318 = pneg %p172
      %p319 = pneg %p203
      %p320 = pneg %p200
      %p321 = scmp.lt.s32.totalorder %s21, 1
      %s322 = scalar_select %p321, %s21, 1
      %p323 = scmp.lt.s32.totalorder %s22, 7
      %s324 = scalar_select %p323, %s22, 7
      %s325 = smul.addr %s324, 8
      %s326 = smul.addr %s322, 64
      %s327 = sadd.s32 %s325, %s326
      %s328 = smul.addr %s327, 8
      %s329 = scalar_lea.vmem %s6, %s328
      %p330 = scmp.lt.s32.totalorder %s21, 1
      %s331 = scalar_select %p330, %s21, 1
      %p332 = scmp.lt.s32.totalorder %s22, 9
      %s333 = scalar_select %p332, %s22, 9
      %s334 = smul.addr %s333, 20
      %s335 = smul.addr %s331, 200
      %s336 = sadd.s32 %s334, %s335
      %s337 = smul.addr %s336, 8
      %s338 = scalar_lea.vmem %s0, %s337
      %s339 = sadd.s32 %s22, 1
      %p340 = scmp.lt.s32.totalorder %s21, 1
      %s341 = scalar_select %p340, %s21, 1
      %p342 = scmp.lt.s32.totalorder %s339, 9
      %s343 = scalar_select %p342, %s339, 9
      %s344 = smul.addr %s343, 20
      %s345 = smul.addr %s341, 200
      %s346 = sadd.s32 %s344, %s345
      %s347 = smul.addr %s346, 8
      %s348 = scalar_lea.vmem %s1, %s347
      %s349 = sadd.s32 %s22, 1
      %s350 = sadd.s32 %s22, 2
      %p351 = scmp.lt.s32.totalorder %s21, 1
      %s352 = scalar_select %p351, %s21, 1
      %p353 = scmp.lt.s32.totalorder %s350, 9
      %s354 = scalar_select %p353, %s350, 9
      %s355 = smul.addr %s354, 20
      %s356 = smul.addr %s352, 200
      %s357 = sadd.s32 %s355, %s356
      %s358 = smul.addr %s357, 8
      %s359 = scalar_lea.vmem %s2, %s358
      %s360 = sadd.s32 %s22, 2
      %p361 = scmp.lt.s32.totalorder %s21, 1
      %s362 = scalar_select %p361, %s21, 1
      %p363 = scmp.lt.s32.totalorder %s22, 7
      %s364 = scalar_select %p363, %s22, 7
      %s365 = smul.addr %s364, 8
      %s366 = smul.addr %s362, 64
      %s367 = sadd.s32 %s365, %s366
      %s368 = smul.addr %s367, 8
      %s369 = scalar_lea.vmem %s6, %s368
      %v371 = vld [vmem:[%s4] sm:$0x7]
      %v372 = vld [vmem:[%s338] sm:$0xff]
      %v373 = vld [vmem:[%s338 + $0x8] sm:$0x3]
      %v374 = vld [vmem:[%s338 + $0x10] sm:$0xff]
      %v375 = vld [vmem:[%s338 + $0x18] sm:$0x3]
      %v376 = vld [vmem:[%s338 + $0x20] sm:$0xff]
      %v377 = vld [vmem:[%s338 + $0x28] sm:$0x3]
      %v378 = vld [vmem:[%s338 + $0x30] sm:$0xff]
      %v379 = vld [vmem:[%s338 + $0x38] sm:$0x3]
      %v380 = vld [vmem:[%s338 + $0x40] sm:$0xff]
      %v381 = vld [vmem:[%s338 + $0x48] sm:$0x3]
      %v382 = vld [vmem:[%s338 + $0x50] sm:$0xff]
      %v383 = vld [vmem:[%s338 + $0x58] sm:$0x3]
      %v384 = vld [vmem:[%s338 + $0x60] sm:$0xff]
      %v385 = vld [vmem:[%s338 + $0x68] sm:$0x3]
      %v386 = vld [vmem:[%s338 + $0x70] sm:$0xff]
      %v387 = vld [vmem:[%s338 + $0x78] sm:$0x3]
      %v388 = vld [vmem:[%s338 + $0x80] sm:$0xff]
      %v389 = vld [vmem:[%s338 + $0x88] sm:$0x3]
      %v390 = vld [vmem:[%s338 + $0x90] sm:$0xff]
      %v391 = vld [vmem:[%s338 + $0x98] sm:$0x3]
      %v392 = vlaneseq
      %v393 = vshrl.u32 %v392, 7
      %v394 = vsub.s32 0, %v393
      %v395 = vrot.slane %v371, %v394
      %v396 = vmul.f32 %v372, %v395
      %v397 = vmul.f32 %v373, %v395
      %v398 = vmul.f32 %v374, %v395
      %v399 = vmul.f32 %v375, %v395
      %v400 = vmul.f32 %v376, %v395
      %v401 = vmul.f32 %v377, %v395
      %v402 = vmul.f32 %v378, %v395
      %v403 = vmul.f32 %v379, %v395
      %v404 = vmul.f32 %v380, %v395
      %v405 = vmul.f32 %v381, %v395
      %v406 = vmul.f32 %v382, %v395
      %v407 = vmul.f32 %v383, %v395
      %v408 = vmul.f32 %v384, %v395
      %v409 = vmul.f32 %v385, %v395
      %v410 = vmul.f32 %v386, %v395
      %v411 = vmul.f32 %v387, %v395
      %v412 = vmul.f32 %v388, %v395
      %v413 = vmul.f32 %v389, %v395
      %v414 = vmul.f32 %v390, %v395
      %v415 = vmul.f32 %v391, %v395
      %v416 = vlaneseq
      %v417 = vshrl.u32 %v416, 7
      %v418 = vsub.s32 1, %v417
      %v419 = vrot.slane %v371, %v418
      %v420 = vadd.f32 %v396, %v419
      %v421 = vadd.f32 %v397, %v419
      %v422 = vadd.f32 %v398, %v419
      %v423 = vadd.f32 %v399, %v419
      %v424 = vadd.f32 %v400, %v419
      %v425 = vadd.f32 %v401, %v419
      %v426 = vadd.f32 %v402, %v419
      %v427 = vadd.f32 %v403, %v419
      %v428 = vadd.f32 %v404, %v419
      %v429 = vadd.f32 %v405, %v419
      %v430 = vadd.f32 %v406, %v419
      %v431 = vadd.f32 %v407, %v419
      %v432 = vadd.f32 %v408, %v419
      %v433 = vadd.f32 %v409, %v419
      %v434 = vadd.f32 %v410, %v419
      %v435 = vadd.f32 %v411, %v419
      %v436 = vadd.f32 %v412, %v419
      %v437 = vadd.f32 %v413, %v419
      %v438 = vadd.f32 %v414, %v419
      %v439 = vadd.f32 %v415, %v419
      %vm440 = vcmp.ge.f32.partialorder %v420, 0.0
      %vm441 = vcmp.ge.f32.partialorder %v421, 0.0
      %vm442 = vcmp.ge.f32.partialorder %v422, 0.0
      %vm443 = vcmp.ge.f32.partialorder %v423, 0.0
      %vm444 = vcmp.ge.f32.partialorder %v424, 0.0
      %vm445 = vcmp.ge.f32.partialorder %v425, 0.0
      %vm446 = vcmp.ge.f32.partialorder %v426, 0.0
      %vm447 = vcmp.ge.f32.partialorder %v427, 0.0
      %vm448 = vcmp.ge.f32.partialorder %v428, 0.0
      %vm449 = vcmp.ge.f32.partialorder %v429, 0.0
      %vm450 = vcmp.ge.f32.partialorder %v430, 0.0
      %vm451 = vcmp.ge.f32.partialorder %v431, 0.0
      %vm452 = vcmp.ge.f32.partialorder %v432, 0.0
      %vm453 = vcmp.ge.f32.partialorder %v433, 0.0
      %vm454 = vcmp.ge.f32.partialorder %v434, 0.0
      %vm455 = vcmp.ge.f32.partialorder %v435, 0.0
      %vm456 = vcmp.ge.f32.partialorder %v436, 0.0
      %vm457 = vcmp.ge.f32.partialorder %v437, 0.0
      %vm458 = vcmp.ge.f32.partialorder %v438, 0.0
      %vm459 = vcmp.ge.f32.partialorder %v439, 0.0
      %v460 = vlaneseq
      %v461 = vshrl.u32 %v460, 7
      %v462 = vsub.s32 2, %v461
      %v463 = vrot.slane %v371, %v462
      %v464 = vmul.f32 %v463, %v420
      %v465 = vmul.f32 %v463, %v421
      %v466 = vmul.f32 %v463, %v422
      %v467 = vmul.f32 %v463, %v423
      %v468 = vmul.f32 %v463, %v424
      %v469 = vmul.f32 %v463, %v425
      %v470 = vmul.f32 %v463, %v426
      %v471 = vmul.f32 %v463, %v427
      %v472 = vmul.f32 %v463, %v428
      %v473 = vmul.f32 %v463, %v429
      %v474 = vmul.f32 %v463, %v430
      %v475 = vmul.f32 %v463, %v431
      %v476 = vmul.f32 %v463, %v432
      %v477 = vmul.f32 %v463, %v433
      %v478 = vmul.f32 %v463, %v434
      %v479 = vmul.f32 %v463, %v435
      %v480 = vmul.f32 %v463, %v436
      %v481 = vmul.f32 %v463, %v437
      %v482 = vmul.f32 %v463, %v438
      %v483 = vmul.f32 %v463, %v439
      %v484 = vsel %vm440, %v420, %v464
      %v485 = vsel %vm441, %v421, %v465
      %v486 = vsel %vm442, %v422, %v466
      %v487 = vsel %vm443, %v423, %v467
      %v488 = vsel %vm444, %v424, %v468
      %v489 = vsel %vm445, %v425, %v469
      %v490 = vsel %vm446, %v426, %v470
      %v491 = vsel %vm447, %v427, %v471
      %v492 = vsel %vm448, %v428, %v472
      %v493 = vsel %vm449, %v429, %v473
      %v494 = vsel %vm450, %v430, %v474
      %v495 = vsel %vm451, %v431, %v475
      %v496 = vsel %vm452, %v432, %v476
      %v497 = vsel %vm453, %v433, %v477
      %v498 = vsel %vm454, %v434, %v478
      %v499 = vsel %vm455, %v435, %v479
      %v500 = vsel %vm456, %v436, %v480
      %v501 = vsel %vm457, %v437, %v481
      %v502 = vsel %vm458, %v438, %v482
      %v503 = vsel %vm459, %v439, %v483
      %v504 = vpack.c.bf16 %v485, %v484
      %v505 = vpack.c.bf16 %v487, %v486
      %v506 = vpack.c.bf16 %v489, %v488
      %v507 = vpack.c.bf16 %v491, %v490
      %v508 = vpack.c.bf16 %v493, %v492
      %v509 = vpack.c.bf16 %v495, %v494
      %v510 = vpack.c.bf16 %v497, %v496
      %v511 = vpack.c.bf16 %v499, %v498
      %v512 = vpack.c.bf16 %v501, %v500
      %v513 = vpack.c.bf16 %v503, %v502
      %v514 = vld [vmem:[%s3] sm:$0x3]
      %v523 = vunpack.c.l.b16 %v504
      %v524 = vunpack.c.h.b16 %v504
      %v525 = vunpack.c.l.b16 %v505
      %v526 = vunpack.c.h.b16 %v505
      %v527 = vunpack.c.l.b16 %v506
      %v528 = vunpack.c.h.b16 %v506
      %v529 = vunpack.c.l.b16 %v507
      %v530 = vunpack.c.h.b16 %v507
      %v531 = vunpack.c.l.b16 %v508
      %v532 = vunpack.c.h.b16 %v508
      %v533 = vunpack.c.l.b16 %v509
      %v534 = vunpack.c.h.b16 %v509
      %v535 = vunpack.c.l.b16 %v510
      %v536 = vunpack.c.h.b16 %v510
      %v537 = vunpack.c.l.b16 %v511
      %v538 = vunpack.c.h.b16 %v511
      %v539 = vpack.c.b16 %v523, %v523
      %v540 = vpack.c.b16 %v524, %v524
      %v541 = vpack.c.b16 %v525, %v525
      %v542 = vpack.c.b16 %v526, %v526
      %v543 = vpack.c.b16 %v527, %v527
      %v544 = vpack.c.b16 %v528, %v528
      %v545 = vpack.c.b16 %v529, %v529
      %v546 = vpack.c.b16 %v530, %v530
      %v547 = vpack.c.b16 %v531, %v531
      %v548 = vpack.c.b16 %v532, %v532
      %v549 = vpack.c.b16 %v533, %v533
      %v550 = vpack.c.b16 %v534, %v534
      %v551 = vpack.c.b16 %v535, %v535
      %v552 = vpack.c.b16 %v536, %v536
      %v553 = vpack.c.b16 %v537, %v537
      %v554 = vpack.c.b16 %v538, %v538
      %vm555 = vsmask.f32 3328
      %vm556 = vsmask.f32 7440
      %vm557 = vmor %vm555, %vm556
      %v559 = vshrl.u32 %v539, 16
      %v561 = vrot.slane %v559, 4
      %v562 = vshll.u32 %v539, 16
      %v564 = vrot.slane %v562, 5
      %v565 = vor.u32 %v561, %v564
      %v566 = vrot.slane %v565, 4
      %v568 = vshll.u32 %v540, 16
      %v570 = vrot.slane %v568, 5
      %v571 = vsel %vm557, %v566, %v570
      %v573 = vshrl.u32 %v541, 16
      %v575 = vrot.slane %v573, 4
      %v576 = vshll.u32 %v541, 16
      %v578 = vrot.slane %v576, 5
      %v579 = vor.u32 %v575, %v578
      %v580 = vrot.slane %v579, 4
      %v582 = vshll.u32 %v542, 16
      %v584 = vrot.slane %v582, 5
      %v585 = vsel %vm557, %v580, %v584
      %v587 = vshrl.u32 %v543, 16
      %v589 = vrot.slane %v587, 4
      %v590 = vshll.u32 %v543, 16
      %v592 = vrot.slane %v590, 5
      %v593 = vor.u32 %v589, %v592
      %v594 = vrot.slane %v593, 4
      %v596 = vshll.u32 %v544, 16
      %v598 = vrot.slane %v596, 5
      %v599 = vsel %vm557, %v594, %v598
      %v601 = vshrl.u32 %v545, 16
      %v603 = vrot.slane %v601, 4
      %v604 = vshll.u32 %v545, 16
      %v606 = vrot.slane %v604, 5
      %v607 = vor.u32 %v603, %v606
      %v608 = vrot.slane %v607, 4
      %v610 = vshll.u32 %v546, 16
      %v612 = vrot.slane %v610, 5
      %v613 = vsel %vm557, %v608, %v612
      %v615 = vshrl.u32 %v547, 16
      %v617 = vrot.slane %v615, 4
      %v618 = vshll.u32 %v547, 16
      %v620 = vrot.slane %v618, 5
      %v621 = vor.u32 %v617, %v620
      %v622 = vrot.slane %v621, 4
      %v624 = vshll.u32 %v548, 16
      %v626 = vrot.slane %v624, 5
      %v627 = vsel %vm557, %v622, %v626
      %v629 = vshrl.u32 %v549, 16
      %v631 = vrot.slane %v629, 4
      %v632 = vshll.u32 %v549, 16
      %v634 = vrot.slane %v632, 5
      %v635 = vor.u32 %v631, %v634
      %v636 = vrot.slane %v635, 4
      %v638 = vshll.u32 %v550, 16
      %v640 = vrot.slane %v638, 5
      %v641 = vsel %vm557, %v636, %v640
      %v643 = vshrl.u32 %v551, 16
      %v645 = vrot.slane %v643, 4
      %v646 = vshll.u32 %v551, 16
      %v648 = vrot.slane %v646, 5
      %v649 = vor.u32 %v645, %v648
      %v650 = vrot.slane %v649, 4
      %v652 = vshll.u32 %v552, 16
      %v654 = vrot.slane %v652, 5
      %v655 = vsel %vm557, %v650, %v654
      %v657 = vshrl.u32 %v553, 16
      %v659 = vrot.slane %v657, 4
      %v660 = vshll.u32 %v553, 16
      %v662 = vrot.slane %v660, 5
      %v663 = vor.u32 %v659, %v662
      %v664 = vrot.slane %v663, 4
      %v666 = vshll.u32 %v554, 16
      %v668 = vrot.slane %v666, 5
      %v669 = vsel %vm557, %v664, %v668
      %s670 = scalar_lea.vmem %s3, 2
      %v671 = vld [vmem:[%s670] sm:$0x3]
      %v672 = vunpack.c.l.b16 %v571
      %v673 = vunpack.c.l.b16 %v585
      %v674 = vunpack.c.l.b16 %v599
      %v675 = vunpack.c.l.b16 %v613
      %v676 = vunpack.c.l.b16 %v627
      %v677 = vunpack.c.l.b16 %v641
      %v678 = vunpack.c.l.b16 %v655
      %v679 = vunpack.c.l.b16 %v669
      %v680 = vpack.c.b16 %v673, %v672
      %v681 = vpack.c.b16 %v675, %v674
      %v682 = vpack.c.b16 %v677, %v676
      %v683 = vpack.c.b16 %v679, %v678
      %vm684 = vcmask 31744
      %v686 = vsel %vm684, %v680, 0
      %v689 = vsel %vm684, %v681, 0
      %v692 = vsel %vm684, %v682, 0
      %v695 = vsel %vm684, %v683, 0
      %vm697 = vcmask 1041408
      %v699 = vsel %vm697, %v671, 0
      %701 = vmatprep.subr.bf16.mxu0 0
      %702 = vmatpush1.bf16.msra.mxu0 %v699
      %703 = vmatprep.subr.bf16.mxu0 0
      %704 = vmatpush1.bf16.msra.mxu0 0
      %705 = vmatprep.subr.bf16.mxu0 0
      %706 = vmatpush1.bf16.msra.mxu0 0
      %707 = vmatprep.subr.bf16.mxu0 0
      %708 = vmatpush1.bf16.msra.mxu0 0
      %709 = vmatprep.subr.bf16.mxu0 0
      %710 = vmatpush1.bf16.msra.mxu0 0
      %711 = vmatprep.subr.bf16.mxu0 0
      %712 = vmatpush1.bf16.msra.mxu0 0
      %713 = vmatprep.subr.bf16.mxu0 0
      %714 = vmatpush1.bf16.msra.mxu0 0
      %715 = vmatprep.subr.bf16.mxu0 0
      %716 = vmatpush1.bf16.msra.mxu0 0
      %717 = vmatprep.subr.bf16.mxu0 0
      %718 = vmatpush1.bf16.msra.mxu0 0
      %719 = vmatprep.subr.bf16.mxu0 0
      %720 = vmatpush1.bf16.msra.mxu0 0
      %721 = vmatprep.subr.bf16.mxu0 0
      %722 = vmatpush1.bf16.msra.mxu0 0
      %723 = vmatprep.subr.bf16.mxu0 0
      %724 = vmatpush1.bf16.msra.mxu0 0
      %725 = vmatprep.subr.bf16.mxu0 0
      %726 = vmatpush1.bf16.msra.mxu0 0
      %727 = vmatprep.subr.bf16.mxu0 0
      %728 = vmatpush1.bf16.msra.mxu0 0
      %729 = vmatprep.subr.bf16.mxu0 0
      %730 = vmatpush1.bf16.msra.mxu0 0
      %731 = vmatprep.subr.bf16.mxu0 0
      %732 = vmatpush1.bf16.msra.mxu0 0
      %733 = vmatprep.mubr.bf16.mxu0 0
      %734 = vmatmul.mubr.bf16.gmra.mrb[0].mxu0 %v686
      %v735 = vpop.f32.mrb[0].mxu0
      %v736 = vadd.f32 0.0, %v735
      %v737 = vpop.f32.mrb[0].mxu0
      %v738 = vpop.f32.mrb[0].mxu0
      %v739 = vadd.f32 0.0, %v738
      %v740 = vpop.f32.mrb[0].mxu0
      %741 = vmatprep.mubr.bf16.mxu0 0
      %742 = vmatmul.mubr.bf16.gmra.mrb[0].mxu0 %v689
      %v743 = vpop.f32.mrb[0].mxu0
      %v744 = vadd.f32 0.0, %v743
      %v745 = vpop.f32.mrb[0].mxu0
      %v746 = vpop.f32.mrb[0].mxu0
      %v747 = vadd.f32 0.0, %v746
      %v748 = vpop.f32.mrb[0].mxu0
      %749 = vmatprep.mubr.bf16.mxu0 0
      %750 = vmatmul.mubr.bf16.gmra.mrb[0].mxu0 %v692
      %v751 = vpop.f32.mrb[0].mxu0
      %v752 = vadd.f32 0.0, %v751
      %v753 = vpop.f32.mrb[0].mxu0
      %v754 = vpop.f32.mrb[0].mxu0
      %v755 = vadd.f32 0.0, %v754
      %v756 = vpop.f32.mrb[0].mxu0
      %757 = vmatprep.mubr.bf16.mxu0 0
      %758 = vmatmul.mubr.bf16.gmra.mrb[0].mxu0 %v695
      %v759 = vpop.f32.mrb[0].mxu0
      %v760 = vadd.f32 0.0, %v759
      %v761 = vpop.f32.mrb[0].mxu0
      %v762 = vpop.f32.mrb[0].mxu0
      %v763 = vadd.f32 0.0, %v762
      %v764 = vpop.f32.mrb[0].mxu0
      %765 = vdwg.mxu0
      %v766 = vpack.c.b16 %v525, %v523
      %v767 = vpack.c.b16 %v529, %v527
      %v768 = vpack.c.b16 %v533, %v531
      %v769 = vpack.c.b16 %v537, %v535
      %v771 = vsel %vm684, %v766, 0
      %v774 = vsel %vm684, %v767, 0
      %v777 = vsel %vm684, %v768, 0
      %v780 = vsel %vm684, %v769, 0
      %v783 = vsel %vm697, %v514, 0
      %785 = vmatprep.subr.bf16.mxu0 0
      %786 = vmatpush1.bf16.msra.mxu0 %v783
      %787 = vmatprep.subr.bf16.mxu0 0
      %788 = vmatpush1.bf16.msra.mxu0 0
      %789 = vmatprep.subr.bf16.mxu0 0
      %790 = vmatpush1.bf16.msra.mxu0 0
      %791 = vmatprep.subr.bf16.mxu0 0
      %792 = vmatpush1.bf16.msra.mxu0 0
      %793 = vmatprep.subr.bf16.mxu0 0
      %794 = vmatpush1.bf16.msra.mxu0 0
      %795 = vmatprep.subr.bf16.mxu0 0
      %796 = vmatpush1.bf16.msra.mxu0 0
      %797 = vmatprep.subr.bf16.mxu0 0
      %798 = vmatpush1.bf16.msra.mxu0 0
      %799 = vmatprep.subr.bf16.mxu0 0
      %800 = vmatpush1.bf16.msra.mxu0 0
      %801 = vmatprep.subr.bf16.mxu0 0
      %802 = vmatpush1.bf16.msra.mxu0 0
      %803 = vmatprep.subr.bf16.mxu0 0
      %804 = vmatpush1.bf16.msra.mxu0 0
      %805 = vmatprep.subr.bf16.mxu0 0
      %806 = vmatpush1.bf16.msra.mxu0 0
      %807 = vmatprep.subr.bf16.mxu0 0
      %808 = vmatpush1.bf16.msra.mxu0 0
      %809 = vmatprep.subr.bf16.mxu0 0
      %810 = vmatpush1.bf16.msra.mxu0 0
      %811 = vmatprep.subr.bf16.mxu0 0
      %812 = vmatpush1.bf16.msra.mxu0 0
      %813 = vmatprep.subr.bf16.mxu0 0
      %814 = vmatpush1.bf16.msra.mxu0 0
      %815 = vmatprep.subr.bf16.mxu0 0
      %816 = vmatpush1.bf16.msra.mxu0 0
      %817 = vmatprep.mubr.bf16.mxu0 0
      %818 = vmatmul.mubr.bf16.gmra.mrb[0].mxu0 %v771
      %v819 = vpop.f32.mrb[0].mxu0
      %v820 = vadd.f32 %v736, %v819
      %v821 = vpop.f32.mrb[0].mxu0
      %v822 = vpop.f32.mrb[0].mxu0
      %v823 = vadd.f32 %v739, %v822
      %v824 = vpop.f32.mrb[0].mxu0
      %825 = vmatprep.mubr.bf16.mxu0 0
      %826 = vmatmul.mubr.bf16.gmra.mrb[0].mxu0 %v774
      %v827 = vpop.f32.mrb[0].mxu0
      %v828 = vadd.f32 %v744, %v827
      %v829 = vpop.f32.mrb[0].mxu0
      %v830 = vpop.f32.mrb[0].mxu0
      %v831 = vadd.f32 %v747, %v830
      %v832 = vpop.f32.mrb[0].mxu0
      %833 = vmatprep.mubr.bf16.mxu0 0
      %834 = vmatmul.mubr.bf16.gmra.mrb[0].mxu0 %v777
      %v835 = vpop.f32.mrb[0].mxu0
      %v836 = vadd.f32 %v752, %v835
      %v837 = vpop.f32.mrb[0].mxu0
      %v838 = vpop.f32.mrb[0].mxu0
      %v839 = vadd.f32 %v755, %v838
      %v840 = vpop.f32.mrb[0].mxu0
      %841 = vmatprep.mubr.bf16.mxu0 0
      %842 = vmatmul.mubr.bf16.gmra.mrb[0].mxu0 %v780
      %v843 = vpop.f32.mrb[0].mxu0
      %v844 = vadd.f32 %v760, %v843
      %v845 = vpop.f32.mrb[0].mxu0
      %v846 = vpop.f32.mrb[0].mxu0
      %v847 = vadd.f32 %v763, %v846
      %v848 = vpop.f32.mrb[0].mxu0
      %849 = vdwg.mxu0
      %vm850 = vcmask 1042432
      %vm851 = vcmask 1046532
      %vm852 = vmor %vm850, %vm851
      %v853 = vrot.slane %v539, 5
      %v854 = vrot.slane %v853, 4
      %v855 = vrot.slane %v540, 5
      %v856 = vsel %vm852, %v854, %v855
      %v857 = vrot.slane %v541, 5
      %v858 = vrot.slane %v857, 4
      %v859 = vrot.slane %v542, 5
      %v860 = vsel %vm852, %v858, %v859
      %v861 = vrot.slane %v543, 5
      %v862 = vrot.slane %v861, 4
      %v863 = vrot.slane %v544, 5
      %v864 = vsel %vm852, %v862, %v863
      %v865 = vrot.slane %v545, 5
      %v866 = vrot.slane %v865, 4
      %v867 = vrot.slane %v546, 5
      %v868 = vsel %vm852, %v866, %v867
      %v869 = vrot.slane %v547, 5
      %v870 = vrot.slane %v869, 4
      %v871 = vrot.slane %v548, 5
      %v872 = vsel %vm852, %v870, %v871
      %v873 = vrot.slane %v549, 5
      %v874 = vrot.slane %v873, 4
      %v875 = vrot.slane %v550, 5
      %v876 = vsel %vm852, %v874, %v875
      %v877 = vrot.slane %v551, 5
      %v878 = vrot.slane %v877, 4
      %v879 = vrot.slane %v552, 5
      %v880 = vsel %vm852, %v878, %v879
      %v881 = vrot.slane %v553, 5
      %v882 = vrot.slane %v881, 4
      %v883 = vrot.slane %v554, 5
      %v884 = vsel %vm852, %v882, %v883
      %s885 = scalar_lea.vmem %s3, 4
      %v886 = vld [vmem:[%s885] sm:$0x3]
      %v887 = vunpack.c.l.b16 %v856
      %v888 = vunpack.c.l.b16 %v860
      %v889 = vunpack.c.l.b16 %v864
      %v890 = vunpack.c.l.b16 %v868
      %v891 = vunpack.c.l.b16 %v872
      %v892 = vunpack.c.l.b16 %v876
      %v893 = vunpack.c.l.b16 %v880
      %v894 = vunpack.c.l.b16 %v884
      %v895 = vpack.c.b16 %v888, %v887
      %v896 = vpack.c.b16 %v890, %v889
      %v897 = vpack.c.b16 %v892, %v891
      %v898 = vpack.c.b16 %v894, %v893
      %v900 = vsel %vm684, %v895, 0
      %v903 = vsel %vm684, %v896, 0
      %v906 = vsel %vm684, %v897, 0
      %v909 = vsel %vm684, %v898, 0
      %v912 = vsel %vm697, %v886, 0
      %914 = vmatprep.subr.bf16.mxu0 0
      %915 = vmatpush1.bf16.msra.mxu0 %v912
      %916 = vmatprep.subr.bf16.mxu0 0
      %917 = vmatpush1.bf16.msra.mxu0 0
      %918 = vmatprep.subr.bf16.mxu0 0
      %919 = vmatpush1.bf16.msra.mxu0 0
      %920 = vmatprep.subr.bf16.mxu0 0
      %921 = vmatpush1.bf16.msra.mxu0 0
      %922 = vmatprep.subr.bf16.mxu0 0
      %923 = vmatpush1.bf16.msra.mxu0 0
      %924 = vmatprep.subr.bf16.mxu0 0
      %925 = vmatpush1.bf16.msra.mxu0 0
      %926 = vmatprep.subr.bf16.mxu0 0
      %927 = vmatpush1.bf16.msra.mxu0 0
      %928 = vmatprep.subr.bf16.mxu0 0
      %929 = vmatpush1.bf16.msra.mxu0 0
      %930 = vmatprep.subr.bf16.mxu0 0
      %931 = vmatpush1.bf16.msra.mxu0 0
      %932 = vmatprep.subr.bf16.mxu0 0
      %933 = vmatpush1.bf16.msra.mxu0 0
      %934 = vmatprep.subr.bf16.mxu0 0
      %935 = vmatpush1.bf16.msra.mxu0 0
      %936 = vmatprep.subr.bf16.mxu0 0
      %937 = vmatpush1.bf16.msra.mxu0 0
      %938 = vmatprep.subr.bf16.mxu0 0
      %939 = vmatpush1.bf16.msra.mxu0 0
      %940 = vmatprep.subr.bf16.mxu0 0
      %941 = vmatpush1.bf16.msra.mxu0 0
      %942 = vmatprep.subr.bf16.mxu0 0
      %943 = vmatpush1.bf16.msra.mxu0 0
      %944 = vmatprep.subr.bf16.mxu0 0
      %945 = vmatpush1.bf16.msra.mxu0 0
      %946 = vmatprep.mubr.bf16.mxu0 0
      %947 = vmatmul.mubr.bf16.gmra.mrb[0].mxu0 %v900
      %v948 = vpop.f32.mrb[0].mxu0
      %v949 = vadd.f32 0.0, %v948
      %v950 = vpop.f32.mrb[0].mxu0
      %v951 = vpop.f32.mrb[0].mxu0
      %v952 = vadd.f32 0.0, %v951
      %v953 = vpop.f32.mrb[0].mxu0
      %954 = vmatprep.mubr.bf16.mxu0 0
      %955 = vmatmul.mubr.bf16.gmra.mrb[0].mxu0 %v903
      %v956 = vpop.f32.mrb[0].mxu0
      %v957 = vadd.f32 0.0, %v956
      %v958 = vpop.f32.mrb[0].mxu0
      %v959 = vpop.f32.mrb[0].mxu0
      %v960 = vadd.f32 0.0, %v959
      %v961 = vpop.f32.mrb[0].mxu0
      %962 = vmatprep.mubr.bf16.mxu0 0
      %963 = vmatmul.mubr.bf16.gmra.mrb[0].mxu0 %v906
      %v964 = vpop.f32.mrb[0].mxu0
      %v965 = vadd.f32 0.0, %v964
      %v966 = vpop.f32.mrb[0].mxu0
      %v967 = vpop.f32.mrb[0].mxu0
      %v968 = vadd.f32 0.0, %v967
      %v969 = vpop.f32.mrb[0].mxu0
      %970 = vmatprep.mubr.bf16.mxu0 0
      %971 = vmatmul.mubr.bf16.gmra.mrb[0].mxu0 %v909
      %v972 = vpop.f32.mrb[0].mxu0
      %v973 = vadd.f32 0.0, %v972
      %v974 = vpop.f32.mrb[0].mxu0
      %v975 = vpop.f32.mrb[0].mxu0
      %v976 = vadd.f32 0.0, %v975
      %v977 = vpop.f32.mrb[0].mxu0
      %978 = vdwg.mxu0
      %v979 = vadd.f32 %v820, %v949
      %v980 = vadd.f32 %v823, %v952
      %v981 = vadd.f32 %v828, %v957
      %v982 = vadd.f32 %v831, %v960
      %v983 = vadd.f32 %v836, %v965
      %v984 = vadd.f32 %v839, %v968
      %v985 = vadd.f32 %v844, %v973
      %v986 = vadd.f32 %v847, %v976
      %s987 = scalar_lea.vmem %s3, 6
      %v988 = vld [vmem:[%s987] sm:$0x3]
      %v990 = vunpack.c.l.b16 %v512
      %v991 = vpack.c.b16 %v527, %v525
      %v992 = vpack.c.b16 %v531, %v529
      %v993 = vpack.c.b16 %v535, %v533
      %v994 = vpack.c.b16 %v990, %v537
      %v996 = vsel %vm684, %v991, 0
      %v999 = vsel %vm684, %v992, 0
      %v1002 = vsel %vm684, %v993, 0
      %v1005 = vsel %vm684, %v994, 0
      %v1008 = vsel %vm697, %v988, 0
      %1010 = vmatprep.subr.bf16.mxu0 0
      %1011 = vmatpush1.bf16.msra.mxu0 %v1008
      %1012 = vmatprep.subr.bf16.mxu0 0
      %1013 = vmatpush1.bf16.msra.mxu0 0
      %1014 = vmatprep.subr.bf16.mxu0 0
      %1015 = vmatpush1.bf16.msra.mxu0 0
      %1016 = vmatprep.subr.bf16.mxu0 0
      %1017 = vmatpush1.bf16.msra.mxu0 0
      %1018 = vmatprep.subr.bf16.mxu0 0
      %1019 = vmatpush1.bf16.msra.mxu0 0
      %1020 = vmatprep.subr.bf16.mxu0 0
      %1021 = vmatpush1.bf16.msra.mxu0 0
      %1022 = vmatprep.subr.bf16.mxu0 0
      %1023 = vmatpush1.bf16.msra.mxu0 0
      %1024 = vmatprep.subr.bf16.mxu0 0
      %1025 = vmatpush1.bf16.msra.mxu0 0
      %1026 = vmatprep.subr.bf16.mxu0 0
      %1027 = vmatpush1.bf16.msra.mxu0 0
      %1028 = vmatprep.subr.bf16.mxu0 0
      %1029 = vmatpush1.bf16.msra.mxu0 0
      %1030 = vmatprep.subr.bf16.mxu0 0
      %1031 = vmatpush1.bf16.msra.mxu0 0
      %1032 = vmatprep.subr.bf16.mxu0 0
      %1033 = vmatpush1.bf16.msra.mxu0 0
      %1034 = vmatprep.subr.bf16.mxu0 0
      %1035 = vmatpush1.bf16.msra.mxu0 0
      %1036 = vmatprep.subr.bf16.mxu0 0
      %1037 = vmatpush1.bf16.msra.mxu0 0
      %1038 = vmatprep.subr.bf16.mxu0 0
      %1039 = vmatpush1.bf16.msra.mxu0 0
      %1040 = vmatprep.subr.bf16.mxu0 0
      %1041 = vmatpush1.bf16.msra.mxu0 0
      %1042 = vmatprep.mubr.bf16.mxu0 0
      %1043 = vmatmul.mubr.bf16.gmra.mrb[0].mxu0 %v996
      %v1044 = vpop.f32.mrb[0].mxu0
      %v1045 = vadd.f32 0.0, %v1044
      %v1046 = vpop.f32.mrb[0].mxu0
      %v1047 = vpop.f32.mrb[0].mxu0
      %v1048 = vadd.f32 0.0, %v1047
      %v1049 = vpop.f32.mrb[0].mxu0
      %1050 = vmatprep.mubr.bf16.mxu0 0
      %1051 = vmatmul.mubr.bf16.gmra.mrb[0].mxu0 %v999
      %v1052 = vpop.f32.mrb[0].mxu0
      %v1053 = vadd.f32 0.0, %v1052
      %v1054 = vpop.f32.mrb[0].mxu0
      %v1055 = vpop.f32.mrb[0].mxu0
      %v1056 = vadd.f32 0.0, %v1055
      %v1057 = vpop.f32.mrb[0].mxu0
      %1058 = vmatprep.mubr.bf16.mxu0 0
      %1059 = vmatmul.mubr.bf16.gmra.mrb[0].mxu0 %v1002
      %v1060 = vpop.f32.mrb[0].mxu0
      %v1061 = vadd.f32 0.0, %v1060
      %v1062 = vpop.f32.mrb[0].mxu0
      %v1063 = vpop.f32.mrb[0].mxu0
      %v1064 = vadd.f32 0.0, %v1063
      %v1065 = vpop.f32.mrb[0].mxu0
      %1066 = vmatprep.mubr.bf16.mxu0 0
      %1067 = vmatmul.mubr.bf16.gmra.mrb[0].mxu0 %v1005
      %v1068 = vpop.f32.mrb[0].mxu0
      %v1069 = vadd.f32 0.0, %v1068
      %v1070 = vpop.f32.mrb[0].mxu0
      %v1071 = vpop.f32.mrb[0].mxu0
      %v1072 = vadd.f32 0.0, %v1071
      %v1073 = vpop.f32.mrb[0].mxu0
      %1074 = vdwg.mxu0
      %v1075 = vadd.f32 %v979, %v1045
      %v1076 = vadd.f32 %v980, %v1048
      %v1077 = vadd.f32 %v981, %v1053
      %v1078 = vadd.f32 %v982, %v1056
      %v1079 = vadd.f32 %v983, %v1061
      %v1080 = vadd.f32 %v984, %v1064
      %v1081 = vadd.f32 %v985, %v1069
      %v1082 = vadd.f32 %v986, %v1072
      %v1083 = vunpack.c.h.b16 %v512
      %v1084 = vpack.c.b16 %v990, %v990
      %v1085 = vpack.c.b16 %v1083, %v1083
      %v1087 = vshrl.u32 %v1084, 16
      %v1089 = vrot.slane %v1087, 4
      %v1090 = vshll.u32 %v1084, 16
      %v1092 = vrot.slane %v1090, 5
      %v1093 = vor.u32 %v1089, %v1092
      %v1094 = vrot.slane %v1093, 4
      %v1096 = vshll.u32 %v1085, 16
      %v1098 = vrot.slane %v1096, 5
      %v1099 = vsel %vm557, %v1094, %v1098
      %s1100 = scalar_lea.vmem %s3, 8
      %v1101 = vld [vmem:[%s1100] sm:$0x3]
      %v1102 = vunpack.c.l.b16 %v1099
      %v1103 = vpack.c.b16 %v674, %v673
      %v1104 = vpack.c.b16 %v676, %v675
      %v1105 = vpack.c.b16 %v678, %v677
      %v1106 = vpack.c.b16 %v1102, %v679
      %v1108 = vsel %vm684, %v1103, 0
      %v1111 = vsel %vm684, %v1104, 0
      %v1114 = vsel %vm684, %v1105, 0
      %v1117 = vsel %vm684, %v1106, 0
      %v1120 = vsel %vm697, %v1101, 0
      %1122 = vmatprep.subr.bf16.mxu0 0
      %1123 = vmatpush1.bf16.msra.mxu0 %v1120
      %1124 = vmatprep.subr.bf16.mxu0 0
      %1125 = vmatpush1.bf16.msra.mxu0 0
      %1126 = vmatprep.subr.bf16.mxu0 0
      %1127 = vmatpush1.bf16.msra.mxu0 0
      %1128 = vmatprep.subr.bf16.mxu0 0
      %1129 = vmatpush1.bf16.msra.mxu0 0
      %1130 = vmatprep.subr.bf16.mxu0 0
      %1131 = vmatpush1.bf16.msra.mxu0 0
      %1132 = vmatprep.subr.bf16.mxu0 0
      %1133 = vmatpush1.bf16.msra.mxu0 0
      %1134 = vmatprep.subr.bf16.mxu0 0
      %1135 = vmatpush1.bf16.msra.mxu0 0
      %1136 = vmatprep.subr.bf16.mxu0 0
      %1137 = vmatpush1.bf16.msra.mxu0 0
      %1138 = vmatprep.subr.bf16.mxu0 0
      %1139 = vmatpush1.bf16.msra.mxu0 0
      %1140 = vmatprep.subr.bf16.mxu0 0
      %1141 = vmatpush1.bf16.msra.mxu0 0
      %1142 = vmatprep.subr.bf16.mxu0 0
      %1143 = vmatpush1.bf16.msra.mxu0 0
      %1144 = vmatprep.subr.bf16.mxu0 0
      %1145 = vmatpush1.bf16.msra.mxu0 0
      %1146 = vmatprep.subr.bf16.mxu0 0
      %1147 = vmatpush1.bf16.msra.mxu0 0
      %1148 = vmatprep.subr.bf16.mxu0 0
      %1149 = vmatpush1.bf16.msra.mxu0 0
      %1150 = vmatprep.subr.bf16.mxu0 0
      %1151 = vmatpush1.bf16.msra.mxu0 0
      %1152 = vmatprep.subr.bf16.mxu0 0
      %1153 = vmatpush1.bf16.msra.mxu0 0
      %1154 = vmatprep.mubr.bf16.mxu0 0
      %1155 = vmatmul.mubr.bf16.gmra.mrb[0].mxu0 %v1108
      %v1156 = vpop.f32.mrb[0].mxu0
      %v1157 = vadd.f32 0.0, %v1156
      %v1158 = vpop.f32.mrb[0].mxu0
      %v1159 = vpop.f32.mrb[0].mxu0
      %v1160 = vadd.f32 0.0, %v1159
      %v1161 = vpop.f32.mrb[0].mxu0
      %1162 = vmatprep.mubr.bf16.mxu0 0
      %1163 = vmatmul.mubr.bf16.gmra.mrb[0].mxu0 %v1111
      %v1164 = vpop.f32.mrb[0].mxu0
      %v1165 = vadd.f32 0.0, %v1164
      %v1166 = vpop.f32.mrb[0].mxu0
      %v1167 = vpop.f32.mrb[0].mxu0
      %v1168 = vadd.f32 0.0, %v1167
      %v1169 = vpop.f32.mrb[0].mxu0
      %1170 = vmatprep.mubr.bf16.mxu0 0
      %1171 = vmatmul.mubr.bf16.gmra.mrb[0].mxu0 %v1114
      %v1172 = vpop.f32.mrb[0].mxu0
      %v1173 = vadd.f32 0.0, %v1172
      %v1174 = vpop.f32.mrb[0].mxu0
      %v1175 = vpop.f32.mrb[0].mxu0
      %v1176 = vadd.f32 0.0, %v1175
      %v1177 = vpop.f32.mrb[0].mxu0
      %1178 = vmatprep.mubr.bf16.mxu0 0
      %1179 = vmatmul.mubr.bf16.gmra.mrb[0].mxu0 %v1117
      %v1180 = vpop.f32.mrb[0].mxu0
      %v1181 = vadd.f32 0.0, %v1180
      %v1182 = vpop.f32.mrb[0].mxu0
      %v1183 = vpop.f32.mrb[0].mxu0
      %v1184 = vadd.f32 0.0, %v1183
      %v1185 = vpop.f32.mrb[0].mxu0
      %1186 = vdwg.mxu0
      %v1187 = vadd.f32 %v1075, %v1157
      %v1188 = vadd.f32 %v1076, %v1160
      %v1189 = vadd.f32 %v1077, %v1165
      %v1190 = vadd.f32 %v1078, %v1168
      %v1191 = vadd.f32 %v1079, %v1173
      %v1192 = vadd.f32 %v1080, %v1176
      %v1193 = vadd.f32 %v1081, %v1181
      %v1194 = vadd.f32 %v1082, %v1184
      %v1195 = vrot.slane %v1084, 5
      %v1196 = vrot.slane %v1195, 4
      %v1197 = vrot.slane %v1085, 5
      %v1198 = vsel %vm852, %v1196, %v1197
      %s1199 = scalar_lea.vmem %s3, 10
      %v1200 = vld [vmem:[%s1199] sm:$0x3]
      %v1201 = vunpack.c.l.b16 %v1198
      %v1202 = vpack.c.b16 %v889, %v888
      %v1203 = vpack.c.b16 %v891, %v890
      %v1204 = vpack.c.b16 %v893, %v892
      %v1205 = vpack.c.b16 %v1201, %v894
      %v1207 = vsel %vm684, %v1202, 0
      %v1210 = vsel %vm684, %v1203, 0
      %v1213 = vsel %vm684, %v1204, 0
      %v1216 = vsel %vm684, %v1205, 0
      %v1219 = vsel %vm697, %v1200, 0
      %1221 = vmatprep.subr.bf16.mxu0 0
      %1222 = vmatpush1.bf16.msra.mxu0 %v1219
      %1223 = vmatprep.subr.bf16.mxu0 0
      %1224 = vmatpush1.bf16.msra.mxu0 0
      %1225 = vmatprep.subr.bf16.mxu0 0
      %1226 = vmatpush1.bf16.msra.mxu0 0
      %1227 = vmatprep.subr.bf16.mxu0 0
      %1228 = vmatpush1.bf16.msra.mxu0 0
      %1229 = vmatprep.subr.bf16.mxu0 0
      %1230 = vmatpush1.bf16.msra.mxu0 0
      %1231 = vmatprep.subr.bf16.mxu0 0
      %1232 = vmatpush1.bf16.msra.mxu0 0
      %1233 = vmatprep.subr.bf16.mxu0 0
      %1234 = vmatpush1.bf16.msra.mxu0 0
      %1235 = vmatprep.subr.bf16.mxu0 0
      %1236 = vmatpush1.bf16.msra.mxu0 0
      %1237 = vmatprep.subr.bf16.mxu0 0
      %1238 = vmatpush1.bf16.msra.mxu0 0
      %1239 = vmatprep.subr.bf16.mxu0 0
      %1240 = vmatpush1.bf16.msra.mxu0 0
      %1241 = vmatprep.subr.bf16.mxu0 0
      %1242 = vmatpush1.bf16.msra.mxu0 0
      %1243 = vmatprep.subr.bf16.mxu0 0
      %1244 = vmatpush1.bf16.msra.mxu0 0
      %1245 = vmatprep.subr.bf16.mxu0 0
      %1246 = vmatpush1.bf16.msra.mxu0 0
      %1247 = vmatprep.subr.bf16.mxu0 0
      %1248 = vmatpush1.bf16.msra.mxu0 0
      %1249 = vmatprep.subr.bf16.mxu0 0
      %1250 = vmatpush1.bf16.msra.mxu0 0
      %1251 = vmatprep.subr.bf16.mxu0 0
      %1252 = vmatpush1.bf16.msra.mxu0 0
      %1253 = vmatprep.mubr.bf16.mxu0 0
      %1254 = vmatmul.mubr.bf16.gmra.mrb[0].mxu0 %v1207
      %v1255 = vpop.f32.mrb[0].mxu0
      %v1256 = vadd.f32 0.0, %v1255
      %v1257 = vpop.f32.mrb[0].mxu0
      %v1258 = vpop.f32.mrb[0].mxu0
      %v1259 = vadd.f32 0.0, %v1258
      %v1260 = vpop.f32.mrb[0].mxu0
      %1261 = vmatprep.mubr.bf16.mxu0 0
      %1262 = vmatmul.mubr.bf16.gmra.mrb[0].mxu0 %v1210
      %v1263 = vpop.f32.mrb[0].mxu0
      %v1264 = vadd.f32 0.0, %v1263
      %v1265 = vpop.f32.mrb[0].mxu0
      %v1266 = vpop.f32.mrb[0].mxu0
      %v1267 = vadd.f32 0.0, %v1266
      %v1268 = vpop.f32.mrb[0].mxu0
      %1269 = vmatprep.mubr.bf16.mxu0 0
      %1270 = vmatmul.mubr.bf16.gmra.mrb[0].mxu0 %v1213
      %v1271 = vpop.f32.mrb[0].mxu0
      %v1272 = vadd.f32 0.0, %v1271
      %v1273 = vpop.f32.mrb[0].mxu0
      %v1274 = vpop.f32.mrb[0].mxu0
      %v1275 = vadd.f32 0.0, %v1274
      %v1276 = vpop.f32.mrb[0].mxu0
      %1277 = vmatprep.mubr.bf16.mxu0 0
      %1278 = vmatmul.mubr.bf16.gmra.mrb[0].mxu0 %v1216
      %v1279 = vpop.f32.mrb[0].mxu0
      %v1280 = vadd.f32 0.0, %v1279
      %v1281 = vpop.f32.mrb[0].mxu0
      %v1282 = vpop.f32.mrb[0].mxu0
      %v1283 = vadd.f32 0.0, %v1282
      %v1284 = vpop.f32.mrb[0].mxu0
      %1285 = vdwg.mxu0
      %v1286 = vadd.f32 %v1187, %v1256
      %v1287 = vadd.f32 %v1188, %v1259
      %v1288 = vadd.f32 %v1189, %v1264
      %v1289 = vadd.f32 %v1190, %v1267
      %v1290 = vadd.f32 %v1191, %v1272
      %v1291 = vadd.f32 %v1192, %v1275
      %v1292 = vadd.f32 %v1193, %v1280
      %v1293 = vadd.f32 %v1194, %v1283
      %s1294 = scalar_lea.vmem %s3, 12
      %v1295 = vld [vmem:[%s1294] sm:$0x3]
      %v1297 = vunpack.c.l.b16 %v513
      %v1298 = vpack.c.b16 %v1297, %v990
      %v1300 = vsel %vm684, %v1298, 0
      %v1303 = vsel %vm697, %v1295, 0
      %1305 = vmatprep.subr.bf16.mxu0 0
      %1306 = vmatpush1.bf16.msra.mxu0 %v1303
      %1307 = vmatprep.subr.bf16.mxu0 0
      %1308 = vmatpush1.bf16.msra.mxu0 0
      %1309 = vmatprep.subr.bf16.mxu0 0
      %1310 = vmatpush1.bf16.msra.mxu0 0
      %1311 = vmatprep.subr.bf16.mxu0 0
      %1312 = vmatpush1.bf16.msra.mxu0 0
      %1313 = vmatprep.subr.bf16.mxu0 0
      %1314 = vmatpush1.bf16.msra.mxu0 0
      %1315 = vmatprep.subr.bf16.mxu0 0
      %1316 = vmatpush1.bf16.msra.mxu0 0
      %1317 = vmatprep.subr.bf16.mxu0 0
      %1318 = vmatpush1.bf16.msra.mxu0 0
      %1319 = vmatprep.subr.bf16.mxu0 0
      %1320 = vmatpush1.bf16.msra.mxu0 0
      %1321 = vmatprep.subr.bf16.mxu0 0
      %1322 = vmatpush1.bf16.msra.mxu0 0
      %1323 = vmatprep.subr.bf16.mxu0 0
      %1324 = vmatpush1.bf16.msra.mxu0 0
      %1325 = vmatprep.subr.bf16.mxu0 0
      %1326 = vmatpush1.bf16.msra.mxu0 0
      %1327 = vmatprep.subr.bf16.mxu0 0
      %1328 = vmatpush1.bf16.msra.mxu0 0
      %1329 = vmatprep.subr.bf16.mxu0 0
      %1330 = vmatpush1.bf16.msra.mxu0 0
      %1331 = vmatprep.subr.bf16.mxu0 0
      %1332 = vmatpush1.bf16.msra.mxu0 0
      %1333 = vmatprep.subr.bf16.mxu0 0
      %1334 = vmatpush1.bf16.msra.mxu0 0
      %1335 = vmatprep.subr.bf16.mxu0 0
      %1336 = vmatpush1.bf16.msra.mxu0 0
      %1337 = vmatprep.mubr.bf16.mxu0 0
      %1338 = vmatmul.mubr.bf16.gmra.mrb[0].mxu0 %v774
      %v1339 = vpop.f32.mrb[0].mxu0
      %v1340 = vadd.f32 0.0, %v1339
      %v1341 = vpop.f32.mrb[0].mxu0
      %v1342 = vpop.f32.mrb[0].mxu0
      %v1343 = vadd.f32 0.0, %v1342
      %v1344 = vpop.f32.mrb[0].mxu0
      %1345 = vmatprep.mubr.bf16.mxu0 0
      %1346 = vmatmul.mubr.bf16.gmra.mrb[0].mxu0 %v777
      %v1347 = vpop.f32.mrb[0].mxu0
      %v1348 = vadd.f32 0.0, %v1347
      %v1349 = vpop.f32.mrb[0].mxu0
      %v1350 = vpop.f32.mrb[0].mxu0
      %v1351 = vadd.f32 0.0, %v1350
      %v1352 = vpop.f32.mrb[0].mxu0
      %1353 = vmatprep.mubr.bf16.mxu0 0
      %1354 = vmatmul.mubr.bf16.gmra.mrb[0].mxu0 %v780
      %v1355 = vpop.f32.mrb[0].mxu0
      %v1356 = vadd.f32 0.0, %v1355
      %v1357 = vpop.f32.mrb[0].mxu0
      %v1358 = vpop.f32.mrb[0].mxu0
      %v1359 = vadd.f32 0.0, %v1358
      %v1360 = vpop.f32.mrb[0].mxu0
      %1361 = vmatprep.mubr.bf16.mxu0 0
      %1362 = vmatmul.mubr.bf16.gmra.mrb[0].mxu0 %v1300
      %v1363 = vpop.f32.mrb[0].mxu0
      %v1364 = vadd.f32 0.0, %v1363
      %v1365 = vpop.f32.mrb[0].mxu0
      %v1366 = vpop.f32.mrb[0].mxu0
      %v1367 = vadd.f32 0.0, %v1366
      %v1368 = vpop.f32.mrb[0].mxu0
      %1369 = vdwg.mxu0
      %v1370 = vadd.f32 %v1286, %v1340
      %v1371 = vadd.f32 %v1287, %v1343
      %v1372 = vadd.f32 %v1288, %v1348
      %v1373 = vadd.f32 %v1289, %v1351
      %v1374 = vadd.f32 %v1290, %v1356
      %v1375 = vadd.f32 %v1291, %v1359
      %v1376 = vadd.f32 %v1292, %v1364
      %v1377 = vadd.f32 %v1293, %v1367
      %v1378 = vunpack.c.h.b16 %v513
      %v1379 = vpack.c.b16 %v1297, %v1297
      %v1380 = vpack.c.b16 %v1378, %v1378
      %v1382 = vshrl.u32 %v1379, 16
      %v1384 = vrot.slane %v1382, 4
      %v1385 = vshll.u32 %v1379, 16
      %v1387 = vrot.slane %v1385, 5
      %v1388 = vor.u32 %v1384, %v1387
      %v1389 = vrot.slane %v1388, 4
      %v1391 = vshll.u32 %v1380, 16
      %v1393 = vrot.slane %v1391, 5
      %v1394 = vsel %vm557, %v1389, %v1393
      %s1395 = scalar_lea.vmem %s3, 14
      %v1396 = vld [vmem:[%s1395] sm:$0x3]
      %v1397 = vunpack.c.l.b16 %v1394
      %v1398 = vpack.c.b16 %v1397, %v1102
      %v1400 = vsel %vm684, %v1398, 0
      %v1403 = vsel %vm697, %v1396, 0
      %1405 = vmatprep.subr.bf16.mxu0 0
      %1406 = vmatpush1.bf16.msra.mxu0 %v1403
      %1407 = vmatprep.subr.bf16.mxu0 0
      %1408 = vmatpush1.bf16.msra.mxu0 0
      %1409 = vmatprep.subr.bf16.mxu0 0
      %1410 = vmatpush1.bf16.msra.mxu0 0
      %1411 = vmatprep.subr.bf16.mxu0 0
      %1412 = vmatpush1.bf16.msra.mxu0 0
      %1413 = vmatprep.subr.bf16.mxu0 0
      %1414 = vmatpush1.bf16.msra.mxu0 0
      %1415 = vmatprep.subr.bf16.mxu0 0
      %1416 = vmatpush1.bf16.msra.mxu0 0
      %1417 = vmatprep.subr.bf16.mxu0 0
      %1418 = vmatpush1.bf16.msra.mxu0 0
      %1419 = vmatprep.subr.bf16.mxu0 0
      %1420 = vmatpush1.bf16.msra.mxu0 0
      %1421 = vmatprep.subr.bf16.mxu0 0
      %1422 = vmatpush1.bf16.msra.mxu0 0
      %1423 = vmatprep.subr.bf16.mxu0 0
      %1424 = vmatpush1.bf16.msra.mxu0 0
      %1425 = vmatprep.subr.bf16.mxu0 0
      %1426 = vmatpush1.bf16.msra.mxu0 0
      %1427 = vmatprep.subr.bf16.mxu0 0
      %1428 = vmatpush1.bf16.msra.mxu0 0
      %1429 = vmatprep.subr.bf16.mxu0 0
      %1430 = vmatpush1.bf16.msra.mxu0 0
      %1431 = vmatprep.subr.bf16.mxu0 0
      %1432 = vmatpush1.bf16.msra.mxu0 0
      %1433 = vmatprep.subr.bf16.mxu0 0
      %1434 = vmatpush1.bf16.msra.mxu0 0
      %1435 = vmatprep.subr.bf16.mxu0 0
      %1436 = vmatpush1.bf16.msra.mxu0 0
      %1437 = vmatprep.mubr.bf16.mxu0 0
      %1438 = vmatmul.mubr.bf16.gmra.mrb[0].mxu0 %v689
      %v1439 = vpop.f32.mrb[0].mxu0
      %v1440 = vadd.f32 0.0, %v1439
      %v1441 = vpop.f32.mrb[0].mxu0
      %v1442 = vpop.f32.mrb[0].mxu0
      %v1443 = vadd.f32 0.0, %v1442
      %v1444 = vpop.f32.mrb[0].mxu0
      %1445 = vmatprep.mubr.bf16.mxu0 0
      %1446 = vmatmul.mubr.bf16.gmra.mrb[0].mxu0 %v692
      %v1447 = vpop.f32.mrb[0].mxu0
      %v1448 = vadd.f32 0.0, %v1447
      %v1449 = vpop.f32.mrb[0].mxu0
      %v1450 = vpop.f32.mrb[0].mxu0
      %v1451 = vadd.f32 0.0, %v1450
      %v1452 = vpop.f32.mrb[0].mxu0
      %1453 = vmatprep.mubr.bf16.mxu0 0
      %1454 = vmatmul.mubr.bf16.gmra.mrb[0].mxu0 %v695
      %v1455 = vpop.f32.mrb[0].mxu0
      %v1456 = vadd.f32 0.0, %v1455
      %v1457 = vpop.f32.mrb[0].mxu0
      %v1458 = vpop.f32.mrb[0].mxu0
      %v1459 = vadd.f32 0.0, %v1458
      %v1460 = vpop.f32.mrb[0].mxu0
      %1461 = vmatprep.mubr.bf16.mxu0 0
      %1462 = vmatmul.mubr.bf16.gmra.mrb[0].mxu0 %v1400
      %v1463 = vpop.f32.mrb[0].mxu0
      %v1464 = vadd.f32 0.0, %v1463
      %v1465 = vpop.f32.mrb[0].mxu0
      %v1466 = vpop.f32.mrb[0].mxu0
      %v1467 = vadd.f32 0.0, %v1466
      %v1468 = vpop.f32.mrb[0].mxu0
      %1469 = vdwg.mxu0
      %v1470 = vadd.f32 %v1370, %v1440
      %v1471 = vadd.f32 %v1371, %v1443
      %v1472 = vadd.f32 %v1372, %v1448
      %v1473 = vadd.f32 %v1373, %v1451
      %v1474 = vadd.f32 %v1374, %v1456
      %v1475 = vadd.f32 %v1375, %v1459
      %v1476 = vadd.f32 %v1376, %v1464
      %v1477 = vadd.f32 %v1377, %v1467
      %v1478 = vrot.slane %v1379, 5
      %v1479 = vrot.slane %v1478, 4
      %v1480 = vrot.slane %v1380, 5
      %v1481 = vsel %vm852, %v1479, %v1480
      %s1482 = scalar_lea.vmem %s3, 16
      %v1483 = vld [vmem:[%s1482] sm:$0x3]
      %v1484 = vunpack.c.l.b16 %v1481
      %v1485 = vpack.c.b16 %v1484, %v1201
      %v1487 = vsel %vm684, %v1485, 0
      %v1490 = vsel %vm697, %v1483, 0
      %1492 = vmatprep.subr.bf16.mxu0 0
      %1493 = vmatpush1.bf16.msra.mxu0 %v1490
      %1494 = vmatprep.subr.bf16.mxu0 0
      %1495 = vmatpush1.bf16.msra.mxu0 0
      %1496 = vmatprep.subr.bf16.mxu0 0
      %1497 = vmatpush1.bf16.msra.mxu0 0
      %1498 = vmatprep.subr.bf16.mxu0 0
      %1499 = vmatpush1.bf16.msra.mxu0 0
      %1500 = vmatprep.subr.bf16.mxu0 0
      %1501 = vmatpush1.bf16.msra.mxu0 0
      %1502 = vmatprep.subr.bf16.mxu0 0
      %1503 = vmatpush1.bf16.msra.mxu0 0
      %1504 = vmatprep.subr.bf16.mxu0 0
      %1505 = vmatpush1.bf16.msra.mxu0 0
      %1506 = vmatprep.subr.bf16.mxu0 0
      %1507 = vmatpush1.bf16.msra.mxu0 0
      %1508 = vmatprep.subr.bf16.mxu0 0
      %1509 = vmatpush1.bf16.msra.mxu0 0
      %1510 = vmatprep.subr.bf16.mxu0 0
      %1511 = vmatpush1.bf16.msra.mxu0 0
      %1512 = vmatprep.subr.bf16.mxu0 0
      %1513 = vmatpush1.bf16.msra.mxu0 0
      %1514 = vmatprep.subr.bf16.mxu0 0
      %1515 = vmatpush1.bf16.msra.mxu0 0
      %1516 = vmatprep.subr.bf16.mxu0 0
      %1517 = vmatpush1.bf16.msra.mxu0 0
      %1518 = vmatprep.subr.bf16.mxu0 0
      %1519 = vmatpush1.bf16.msra.mxu0 0
      %1520 = vmatprep.subr.bf16.mxu0 0
      %1521 = vmatpush1.bf16.msra.mxu0 0
      %1522 = vmatprep.subr.bf16.mxu0 0
      %1523 = vmatpush1.bf16.msra.mxu0 0
      %1524 = vmatprep.mubr.bf16.mxu0 0
      %1525 = vmatmul.mubr.bf16.gmra.mrb[0].mxu0 %v903
      %v1526 = vpop.f32.mrb[0].mxu0
      %v1527 = vadd.f32 0.0, %v1526
      %v1528 = vpop.f32.mrb[0].mxu0
      %v1529 = vpop.f32.mrb[0].mxu0
      %v1530 = vadd.f32 0.0, %v1529
      %v1531 = vpop.f32.mrb[0].mxu0
      %1532 = vmatprep.mubr.bf16.mxu0 0
      %1533 = vmatmul.mubr.bf16.gmra.mrb[0].mxu0 %v906
      %v1534 = vpop.f32.mrb[0].mxu0
      %v1535 = vadd.f32 0.0, %v1534
      %v1536 = vpop.f32.mrb[0].mxu0
      %v1537 = vpop.f32.mrb[0].mxu0
      %v1538 = vadd.f32 0.0, %v1537
      %v1539 = vpop.f32.mrb[0].mxu0
      %1540 = vmatprep.mubr.bf16.mxu0 0
      %1541 = vmatmul.mubr.bf16.gmra.mrb[0].mxu0 %v909
      %v1542 = vpop.f32.mrb[0].mxu0
      %v1543 = vadd.f32 0.0, %v1542
      %v1544 = vpop.f32.mrb[0].mxu0
      %v1545 = vpop.f32.mrb[0].mxu0
      %v1546 = vadd.f32 0.0, %v1545
      %v1547 = vpop.f32.mrb[0].mxu0
      %1548 = vmatprep.mubr.bf16.mxu0 0
      %1549 = vmatmul.mubr.bf16.gmra.mrb[0].mxu0 %v1487
      %v1550 = vpop.f32.mrb[0].mxu0
      %v1551 = vadd.f32 0.0, %v1550
      %v1552 = vpop.f32.mrb[0].mxu0
      %v1553 = vpop.f32.mrb[0].mxu0
      %v1554 = vadd.f32 0.0, %v1553
      %v1555 = vpop.f32.mrb[0].mxu0
      %1556 = vdwg.mxu0
      %v1557 = vadd.f32 %v1470, %v1527
      %v1558 = vadd.f32 %v1471, %v1530
      %v1559 = vadd.f32 %v1472, %v1535
      %v1560 = vadd.f32 %v1473, %v1538
      %v1561 = vadd.f32 %v1474, %v1543
      %v1562 = vadd.f32 %v1475, %v1546
      %v1563 = vadd.f32 %v1476, %v1551
      %v1564 = vadd.f32 %v1477, %v1554
      %v1565 = vld [vmem:[%s348] sm:$0xff]
      %v1566 = vld [vmem:[%s348 + $0x8] sm:$0x3]
      %v1567 = vld [vmem:[%s348 + $0x10] sm:$0xff]
      %v1568 = vld [vmem:[%s348 + $0x18] sm:$0x3]
      %v1569 = vld [vmem:[%s348 + $0x20] sm:$0xff]
      %v1570 = vld [vmem:[%s348 + $0x28] sm:$0x3]
      %v1571 = vld [vmem:[%s348 + $0x30] sm:$0xff]
      %v1572 = vld [vmem:[%s348 + $0x38] sm:$0x3]
      %v1573 = vld [vmem:[%s348 + $0x40] sm:$0xff]
      %v1574 = vld [vmem:[%s348 + $0x48] sm:$0x3]
      %v1575 = vld [vmem:[%s348 + $0x50] sm:$0xff]
      %v1576 = vld [vmem:[%s348 + $0x58] sm:$0x3]
      %v1577 = vld [vmem:[%s348 + $0x60] sm:$0xff]
      %v1578 = vld [vmem:[%s348 + $0x68] sm:$0x3]
      %v1579 = vld [vmem:[%s348 + $0x70] sm:$0xff]
      %v1580 = vld [vmem:[%s348 + $0x78] sm:$0x3]
      %v1581 = vld [vmem:[%s348 + $0x80] sm:$0xff]
      %v1582 = vld [vmem:[%s348 + $0x88] sm:$0x3]
      %v1583 = vld [vmem:[%s348 + $0x90] sm:$0xff]
      %v1584 = vld [vmem:[%s348 + $0x98] sm:$0x3]
      %v1585 = vmul.f32 %v1565, %v395
      %v1586 = vmul.f32 %v1566, %v395
      %v1587 = vmul.f32 %v1567, %v395
      %v1588 = vmul.f32 %v1568, %v395
      %v1589 = vmul.f32 %v1569, %v395
      %v1590 = vmul.f32 %v1570, %v395
      %v1591 = vmul.f32 %v1571, %v395
      %v1592 = vmul.f32 %v1572, %v395
      %v1593 = vmul.f32 %v1573, %v395
      %v1594 = vmul.f32 %v1574, %v395
      %v1595 = vmul.f32 %v1575, %v395
      %v1596 = vmul.f32 %v1576, %v395
      %v1597 = vmul.f32 %v1577, %v395
      %v1598 = vmul.f32 %v1578, %v395
      %v1599 = vmul.f32 %v1579, %v395
      %v1600 = vmul.f32 %v1580, %v395
      %v1601 = vmul.f32 %v1581, %v395
      %v1602 = vmul.f32 %v1582, %v395
      %v1603 = vmul.f32 %v1583, %v395
      %v1604 = vmul.f32 %v1584, %v395
      %v1605 = vadd.f32 %v1585, %v419
      %v1606 = vadd.f32 %v1586, %v419
      %v1607 = vadd.f32 %v1587, %v419
      %v1608 = vadd.f32 %v1588, %v419
      %v1609 = vadd.f32 %v1589, %v419
      %v1610 = vadd.f32 %v1590, %v419
      %v1611 = vadd.f32 %v1591, %v419
      %v1612 = vadd.f32 %v1592, %v419
      %v1613 = vadd.f32 %v1593, %v419
      %v1614 = vadd.f32 %v1594, %v419
      %v1615 = vadd.f32 %v1595, %v419
      %v1616 = vadd.f32 %v1596, %v419
      %v1617 = vadd.f32 %v1597, %v419
      %v1618 = vadd.f32 %v1598, %v419
      %v1619 = vadd.f32 %v1599, %v419
      %v1620 = vadd.f32 %v1600, %v419
      %v1621 = vadd.f32 %v1601, %v419
      %v1622 = vadd.f32 %v1602, %v419
      %v1623 = vadd.f32 %v1603, %v419
      %v1624 = vadd.f32 %v1604, %v419
      %vm1625 = vcmp.ge.f32.partialorder %v1605, 0.0
      %vm1626 = vcmp.ge.f32.partialorder %v1606, 0.0
      %vm1627 = vcmp.ge.f32.partialorder %v1607, 0.0
      %vm1628 = vcmp.ge.f32.partialorder %v1608, 0.0
      %vm1629 = vcmp.ge.f32.partialorder %v1609, 0.0
      %vm1630 = vcmp.ge.f32.partialorder %v1610, 0.0
      %vm1631 = vcmp.ge.f32.partialorder %v1611, 0.0
      %vm1632 = vcmp.ge.f32.partialorder %v1612, 0.0
      %vm1633 = vcmp.ge.f32.partialorder %v1613, 0.0
      %vm1634 = vcmp.ge.f32.partialorder %v1614, 0.0
      %vm1635 = vcmp.ge.f32.partialorder %v1615, 0.0
      %vm1636 = vcmp.ge.f32.partialorder %v1616, 0.0
      %vm1637 = vcmp.ge.f32.partialorder %v1617, 0.0
      %vm1638 = vcmp.ge.f32.partialorder %v1618, 0.0
      %vm1639 = vcmp.ge.f32.partialorder %v1619, 0.0
      %vm1640 = vcmp.ge.f32.partialorder %v1620, 0.0
      %vm1641 = vcmp.ge.f32.partialorder %v1621, 0.0
      %vm1642 = vcmp.ge.f32.partialorder %v1622, 0.0
      %vm1643 = vcmp.ge.f32.partialorder %v1623, 0.0
      %vm1644 = vcmp.ge.f32.partialorder %v1624, 0.0
      %v1645 = vmul.f32 %v463, %v1605
      %v1646 = vmul.f32 %v463, %v1606
      %v1647 = vmul.f32 %v463, %v1607
      %v1648 = vmul.f32 %v463, %v1608
      %v1649 = vmul.f32 %v463, %v1609
      %v1650 = vmul.f32 %v463, %v1610
      %v1651 = vmul.f32 %v463, %v1611
      %v1652 = vmul.f32 %v463, %v1612
      %v1653 = vmul.f32 %v463, %v1613
      %v1654 = vmul.f32 %v463, %v1614
      %v1655 = vmul.f32 %v463, %v1615
      %v1656 = vmul.f32 %v463, %v1616
      %v1657 = vmul.f32 %v463, %v1617
      %v1658 = vmul.f32 %v463, %v1618
      %v1659 = vmul.f32 %v463, %v1619
      %v1660 = vmul.f32 %v463, %v1620
      %v1661 = vmul.f32 %v463, %v1621
      %v1662 = vmul.f32 %v463, %v1622
      %v1663 = vmul.f32 %v463, %v1623
      %v1664 = vmul.f32 %v463, %v1624
      %v1665 = vsel %vm1625, %v1605, %v1645
      %v1666 = vsel %vm1626, %v1606, %v1646
      %v1667 = vsel %vm1627, %v1607, %v1647
      %v1668 = vsel %vm1628, %v1608, %v1648
      %v1669 = vsel %vm1629, %v1609, %v1649
      %v1670 = vsel %vm1630, %v1610, %v1650
      %v1671 = vsel %vm1631, %v1611, %v1651
      %v1672 = vsel %vm1632, %v1612, %v1652
      %v1673 = vsel %vm1633, %v1613, %v1653
      %v1674 = vsel %vm1634, %v1614, %v1654
      %v1675 = vsel %vm1635, %v1615, %v1655
      %v1676 = vsel %vm1636, %v1616, %v1656
      %v1677 = vsel %vm1637, %v1617, %v1657
      %v1678 = vsel %vm1638, %v1618, %v1658
      %v1679 = vsel %vm1639, %v1619, %v1659
      %v1680 = vsel %vm1640, %v1620, %v1660
      %v1681 = vsel %vm1641, %v1621, %v1661
      %v1682 = vsel %vm1642, %v1622, %v1662
      %v1683 = vsel %vm1643, %v1623, %v1663
      %v1684 = vsel %vm1644, %v1624, %v1664
      %v1685 = vpack.c.bf16 %v1666, %v1665
      %v1686 = vpack.c.bf16 %v1668, %v1667
      %v1687 = vpack.c.bf16 %v1670, %v1669
      %v1688 = vpack.c.bf16 %v1672, %v1671
      %v1689 = vpack.c.bf16 %v1674, %v1673
      %v1690 = vpack.c.bf16 %v1676, %v1675
      %v1691 = vpack.c.bf16 %v1678, %v1677
      %v1692 = vpack.c.bf16 %v1680, %v1679
      %v1693 = vpack.c.bf16 %v1682, %v1681
      %v1694 = vpack.c.bf16 %v1684, %v1683
      %s1695 = scalar_lea.vmem %s3, 18
      %v1696 = vld [vmem:[%s1695] sm:$0x3]
      %v1705 = vunpack.c.l.b16 %v1685
      %v1706 = vunpack.c.l.b16 %v1686
      %v1707 = vunpack.c.l.b16 %v1687
      %v1708 = vunpack.c.l.b16 %v1688
      %v1709 = vunpack.c.l.b16 %v1689
      %v1710 = vunpack.c.l.b16 %v1690
      %v1711 = vunpack.c.l.b16 %v1691
      %v1712 = vunpack.c.l.b16 %v1692
      %v1713 = vpack.c.b16 %v1706, %v1705
      %v1714 = vpack.c.b16 %v1708, %v1707
      %v1715 = vpack.c.b16 %v1710, %v1709
      %v1716 = vpack.c.b16 %v1712, %v1711
      %v1718 = vsel %vm684, %v1713, 0
      %v1721 = vsel %vm684, %v1714, 0
      %v1724 = vsel %vm684, %v1715, 0
      %v1727 = vsel %vm684, %v1716, 0
      %v1730 = vsel %vm697, %v1696, 0
      %1732 = vmatprep.subr.bf16.mxu0 0
      %1733 = vmatpush1.bf16.msra.mxu0 %v1730
      %1734 = vmatprep.subr.bf16.mxu0 0
      %1735 = vmatpush1.bf16.msra.mxu0 0
      %1736 = vmatprep.subr.bf16.mxu0 0
      %1737 = vmatpush1.bf16.msra.mxu0 0
      %1738 = vmatprep.subr.bf16.mxu0 0
      %1739 = vmatpush1.bf16.msra.mxu0 0
      %1740 = vmatprep.subr.bf16.mxu0 0
      %1741 = vmatpush1.bf16.msra.mxu0 0
      %1742 = vmatprep.subr.bf16.mxu0 0
      %1743 = vmatpush1.bf16.msra.mxu0 0
      %1744 = vmatprep.subr.bf16.mxu0 0
      %1745 = vmatpush1.bf16.msra.mxu0 0
      %1746 = vmatprep.subr.bf16.mxu0 0
      %1747 = vmatpush1.bf16.msra.mxu0 0
      %1748 = vmatprep.subr.bf16.mxu0 0
      %1749 = vmatpush1.bf16.msra.mxu0 0
      %1750 = vmatprep.subr.bf16.mxu0 0
      %1751 = vmatpush1.bf16.msra.mxu0 0
      %1752 = vmatprep.subr.bf16.mxu0 0
      %1753 = vmatpush1.bf16.msra.mxu0 0
      %1754 = vmatprep.subr.bf16.mxu0 0
      %1755 = vmatpush1.bf16.msra.mxu0 0
      %1756 = vmatprep.subr.bf16.mxu0 0
      %1757 = vmatpush1.bf16.msra.mxu0 0
      %1758 = vmatprep.subr.bf16.mxu0 0
      %1759 = vmatpush1.bf16.msra.mxu0 0
      %1760 = vmatprep.subr.bf16.mxu0 0
      %1761 = vmatpush1.bf16.msra.mxu0 0
      %1762 = vmatprep.subr.bf16.mxu0 0
      %1763 = vmatpush1.bf16.msra.mxu0 0
      %1764 = vmatprep.mubr.bf16.mxu0 0
      %1765 = vmatmul.mubr.bf16.gmra.mrb[0].mxu0 %v1718
      %v1766 = vpop.f32.mrb[0].mxu0
      %v1767 = vadd.f32 0.0, %v1766
      %v1768 = vpop.f32.mrb[0].mxu0
      %v1769 = vpop.f32.mrb[0].mxu0
      %v1770 = vadd.f32 0.0, %v1769
      %v1771 = vpop.f32.mrb[0].mxu0
      %1772 = vmatprep.mubr.bf16.mxu0 0
      %1773 = vmatmul.mubr.bf16.gmra.mrb[0].mxu0 %v1721
      %v1774 = vpop.f32.mrb[0].mxu0
      %v1775 = vadd.f32 0.0, %v1774
      %v1776 = vpop.f32.mrb[0].mxu0
      %v1777 = vpop.f32.mrb[0].mxu0
      %v1778 = vadd.f32 0.0, %v1777
      %v1779 = vpop.f32.mrb[0].mxu0
      %1780 = vmatprep.mubr.bf16.mxu0 0
      %1781 = vmatmul.mubr.bf16.gmra.mrb[0].mxu0 %v1724
      %v1782 = vpop.f32.mrb[0].mxu0
      %v1783 = vadd.f32 0.0, %v1782
      %v1784 = vpop.f32.mrb[0].mxu0
      %v1785 = vpop.f32.mrb[0].mxu0
      %v1786 = vadd.f32 0.0, %v1785
      %v1787 = vpop.f32.mrb[0].mxu0
      %1788 = vmatprep.mubr.bf16.mxu0 0
      %1789 = vmatmul.mubr.bf16.gmra.mrb[0].mxu0 %v1727
      %v1790 = vpop.f32.mrb[0].mxu0
      %v1791 = vadd.f32 0.0, %v1790
      %v1792 = vpop.f32.mrb[0].mxu0
      %v1793 = vpop.f32.mrb[0].mxu0
      %v1794 = vadd.f32 0.0, %v1793
      %v1795 = vpop.f32.mrb[0].mxu0
      %1796 = vdwg.mxu0
      %v1797 = vadd.f32 %v1557, %v1767
      %v1798 = vadd.f32 %v1558, %v1770
      %v1799 = vadd.f32 %v1559, %v1775
      %v1800 = vadd.f32 %v1560, %v1778
      %v1801 = vadd.f32 %v1561, %v1783
      %v1802 = vadd.f32 %v1562, %v1786
      %v1803 = vadd.f32 %v1563, %v1791
      %v1804 = vadd.f32 %v1564, %v1794
      %v1805 = vunpack.c.h.b16 %v1685
      %v1806 = vunpack.c.h.b16 %v1686
      %v1807 = vunpack.c.h.b16 %v1687
      %v1808 = vunpack.c.h.b16 %v1688
      %v1809 = vunpack.c.h.b16 %v1689
      %v1810 = vunpack.c.h.b16 %v1690
      %v1811 = vunpack.c.h.b16 %v1691
      %v1812 = vunpack.c.h.b16 %v1692
      %v1813 = vpack.c.b16 %v1705, %v1705
      %v1814 = vpack.c.b16 %v1805, %v1805
      %v1815 = vpack.c.b16 %v1706, %v1706
      %v1816 = vpack.c.b16 %v1806, %v1806
      %v1817 = vpack.c.b16 %v1707, %v1707
      %v1818 = vpack.c.b16 %v1807, %v1807
      %v1819 = vpack.c.b16 %v1708, %v1708
      %v1820 = vpack.c.b16 %v1808, %v1808
      %v1821 = vpack.c.b16 %v1709, %v1709
      %v1822 = vpack.c.b16 %v1809, %v1809
      %v1823 = vpack.c.b16 %v1710, %v1710
      %v1824 = vpack.c.b16 %v1810, %v1810
      %v1825 = vpack.c.b16 %v1711, %v1711
      %v1826 = vpack.c.b16 %v1811, %v1811
      %v1827 = vpack.c.b16 %v1712, %v1712
      %v1828 = vpack.c.b16 %v1812, %v1812
      %v1830 = vshrl.u32 %v1813, 16
      %v1832 = vrot.slane %v1830, 4
      %v1833 = vshll.u32 %v1813, 16
      %v1835 = vrot.slane %v1833, 5
      %v1836 = vor.u32 %v1832, %v1835
      %v1837 = vrot.slane %v1836, 4
      %v1839 = vshll.u32 %v1814, 16
      %v1841 = vrot.slane %v1839, 5
      %v1842 = vsel %vm557, %v1837, %v1841
      %v1844 = vshrl.u32 %v1815, 16
      %v1846 = vrot.slane %v1844, 4
      %v1847 = vshll.u32 %v1815, 16
      %v1849 = vrot.slane %v1847, 5
      %v1850 = vor.u32 %v1846, %v1849
      %v1851 = vrot.slane %v1850, 4
      %v1853 = vshll.u32 %v1816, 16
      %v1855 = vrot.slane %v1853, 5
      %v1856 = vsel %vm557, %v1851, %v1855
      %v1858 = vshrl.u32 %v1817, 16
      %v1860 = vrot.slane %v1858, 4
      %v1861 = vshll.u32 %v1817, 16
      %v1863 = vrot.slane %v1861, 5
      %v1864 = vor.u32 %v1860, %v1863
      %v1865 = vrot.slane %v1864, 4
      %v1867 = vshll.u32 %v1818, 16
      %v1869 = vrot.slane %v1867, 5
      %v1870 = vsel %vm557, %v1865, %v1869
      %v1872 = vshrl.u32 %v1819, 16
      %v1874 = vrot.slane %v1872, 4
      %v1875 = vshll.u32 %v1819, 16
      %v1877 = vrot.slane %v1875, 5
      %v1878 = vor.u32 %v1874, %v1877
      %v1879 = vrot.slane %v1878, 4
      %v1881 = vshll.u32 %v1820, 16
      %v1883 = vrot.slane %v1881, 5
      %v1884 = vsel %vm557, %v1879, %v1883
      %v1886 = vshrl.u32 %v1821, 16
      %v1888 = vrot.slane %v1886, 4
      %v1889 = vshll.u32 %v1821, 16
      %v1891 = vrot.slane %v1889, 5
      %v1892 = vor.u32 %v1888, %v1891
      %v1893 = vrot.slane %v1892, 4
      %v1895 = vshll.u32 %v1822, 16
      %v1897 = vrot.slane %v1895, 5
      %v1898 = vsel %vm557, %v1893, %v1897
      %v1900 = vshrl.u32 %v1823, 16
      %v1902 = vrot.slane %v1900, 4
      %v1903 = vshll.u32 %v1823, 16
      %v1905 = vrot.slane %v1903, 5
      %v1906 = vor.u32 %v1902, %v1905
      %v1907 = vrot.slane %v1906, 4
      %v1909 = vshll.u32 %v1824, 16
      %v1911 = vrot.slane %v1909, 5
      %v1912 = vsel %vm557, %v1907, %v1911
      %v1914 = vshrl.u32 %v1825, 16
      %v1916 = vrot.slane %v1914, 4
      %v1917 = vshll.u32 %v1825, 16
      %v1919 = vrot.slane %v1917, 5
      %v1920 = vor.u32 %v1916, %v1919
      %v1921 = vrot.slane %v1920, 4
      %v1923 = vshll.u32 %v1826, 16
      %v1925 = vrot.slane %v1923, 5
      %v1926 = vsel %vm557, %v1921, %v1925
      %v1928 = vshrl.u32 %v1827, 16
      %v1930 = vrot.slane %v1928, 4
      %v1931 = vshll.u32 %v1827, 16
      %v1933 = vrot.slane %v1931, 5
      %v1934 = vor.u32 %v1930, %v1933
      %v1935 = vrot.slane %v1934, 4
      %v1937 = vshll.u32 %v1828, 16
      %v1939 = vrot.slane %v1937, 5
      %v1940 = vsel %vm557, %v1935, %v1939
      %s1941 = scalar_lea.vmem %s3, 20
      %v1942 = vld [vmem:[%s1941] sm:$0x3]
      %v1943 = vunpack.c.l.b16 %v1842
      %v1944 = vunpack.c.l.b16 %v1856
      %v1945 = vunpack.c.l.b16 %v1870
      %v1946 = vunpack.c.l.b16 %v1884
      %v1947 = vunpack.c.l.b16 %v1898
      %v1948 = vunpack.c.l.b16 %v1912
      %v1949 = vunpack.c.l.b16 %v1926
      %v1950 = vunpack.c.l.b16 %v1940
      %v1951 = vpack.c.b16 %v1944, %v1943
      %v1952 = vpack.c.b16 %v1946, %v1945
      %v1953 = vpack.c.b16 %v1948, %v1947
      %v1954 = vpack.c.b16 %v1950, %v1949
      %v1956 = vsel %vm684, %v1951, 0
      %v1959 = vsel %vm684, %v1952, 0
      %v1962 = vsel %vm684, %v1953, 0
      %v1965 = vsel %vm684, %v1954, 0
      %v1968 = vsel %vm697, %v1942, 0
      %1970 = vmatprep.subr.bf16.mxu0 0
      %1971 = vmatpush1.bf16.msra.mxu0 %v1968
      %1972 = vmatprep.subr.bf16.mxu0 0
      %1973 = vmatpush1.bf16.msra.mxu0 0
      %1974 = vmatprep.subr.bf16.mxu0 0
      %1975 = vmatpush1.bf16.msra.mxu0 0
      %1976 = vmatprep.subr.bf16.mxu0 0
      %1977 = vmatpush1.bf16.msra.mxu0 0
      %1978 = vmatprep.subr.bf16.mxu0 0
      %1979 = vmatpush1.bf16.msra.mxu0 0
      %1980 = vmatprep.subr.bf16.mxu0 0
      %1981 = vmatpush1.bf16.msra.mxu0 0
      %1982 = vmatprep.subr.bf16.mxu0 0
      %1983 = vmatpush1.bf16.msra.mxu0 0
      %1984 = vmatprep.subr.bf16.mxu0 0
      %1985 = vmatpush1.bf16.msra.mxu0 0
      %1986 = vmatprep.subr.bf16.mxu0 0
      %1987 = vmatpush1.bf16.msra.mxu0 0
      %1988 = vmatprep.subr.bf16.mxu0 0
      %1989 = vmatpush1.bf16.msra.mxu0 0
      %1990 = vmatprep.subr.bf16.mxu0 0
      %1991 = vmatpush1.bf16.msra.mxu0 0
      %1992 = vmatprep.subr.bf16.mxu0 0
      %1993 = vmatpush1.bf16.msra.mxu0 0
      %1994 = vmatprep.subr.bf16.mxu0 0
      %1995 = vmatpush1.bf16.msra.mxu0 0
      %1996 = vmatprep.subr.bf16.mxu0 0
      %1997 = vmatpush1.bf16.msra.mxu0 0
      %1998 = vmatprep.subr.bf16.mxu0 0
      %1999 = vmatpush1.bf16.msra.mxu0 0
      %2000 = vmatprep.subr.bf16.mxu0 0
      %2001 = vmatpush1.bf16.msra.mxu0 0
      %2002 = vmatprep.mubr.bf16.mxu0 0
      %2003 = vmatmul.mubr.bf16.gmra.mrb[0].mxu0 %v1956
      %v2004 = vpop.f32.mrb[0].mxu0
      %v2005 = vadd.f32 0.0, %v2004
      %v2006 = vpop.f32.mrb[0].mxu0
      %v2007 = vpop.f32.mrb[0].mxu0
      %v2008 = vadd.f32 0.0, %v2007
      %v2009 = vpop.f32.mrb[0].mxu0
      %2010 = vmatprep.mubr.bf16.mxu0 0
      %2011 = vmatmul.mubr.bf16.gmra.mrb[0].mxu0 %v1959
      %v2012 = vpop.f32.mrb[0].mxu0
      %v2013 = vadd.f32 0.0, %v2012
      %v2014 = vpop.f32.mrb[0].mxu0
      %v2015 = vpop.f32.mrb[0].mxu0
      %v2016 = vadd.f32 0.0, %v2015
      %v2017 = vpop.f32.mrb[0].mxu0
      %2018 = vmatprep.mubr.bf16.mxu0 0
      %2019 = vmatmul.mubr.bf16.gmra.mrb[0].mxu0 %v1962
      %v2020 = vpop.f32.mrb[0].mxu0
      %v2021 = vadd.f32 0.0, %v2020
      %v2022 = vpop.f32.mrb[0].mxu0
      %v2023 = vpop.f32.mrb[0].mxu0
      %v2024 = vadd.f32 0.0, %v2023
      %v2025 = vpop.f32.mrb[0].mxu0
      %2026 = vmatprep.mubr.bf16.mxu0 0
      %2027 = vmatmul.mubr.bf16.gmra.mrb[0].mxu0 %v1965
      %v2028 = vpop.f32.mrb[0].mxu0
      %v2029 = vadd.f32 0.0, %v2028
      %v2030 = vpop.f32.mrb[0].mxu0
      %v2031 = vpop.f32.mrb[0].mxu0
      %v2032 = vadd.f32 0.0, %v2031
      %v2033 = vpop.f32.mrb[0].mxu0
      %2034 = vdwg.mxu0
      %v2035 = vadd.f32 %v1797, %v2005
      %v2036 = vadd.f32 %v1798, %v2008
      %v2037 = vadd.f32 %v1799, %v2013
      %v2038 = vadd.f32 %v1800, %v2016
      %v2039 = vadd.f32 %v1801, %v2021
      %v2040 = vadd.f32 %v1802, %v2024
      %v2041 = vadd.f32 %v1803, %v2029
      %v2042 = vadd.f32 %v1804, %v2032
      %v2043 = vrot.slane %v1813, 5
      %v2044 = vrot.slane %v2043, 4
      %v2045 = vrot.slane %v1814, 5
      %v2046 = vsel %vm852, %v2044, %v2045
      %v2047 = vrot.slane %v1815, 5
      %v2048 = vrot.slane %v2047, 4
      %v2049 = vrot.slane %v1816, 5
      %v2050 = vsel %vm852, %v2048, %v2049
      %v2051 = vrot.slane %v1817, 5
      %v2052 = vrot.slane %v2051, 4
      %v2053 = vrot.slane %v1818, 5
      %v2054 = vsel %vm852, %v2052, %v2053
      %v2055 = vrot.slane %v1819, 5
      %v2056 = vrot.slane %v2055, 4
      %v2057 = vrot.slane %v1820, 5
      %v2058 = vsel %vm852, %v2056, %v2057
      %v2059 = vrot.slane %v1821, 5
      %v2060 = vrot.slane %v2059, 4
      %v2061 = vrot.slane %v1822, 5
      %v2062 = vsel %vm852, %v2060, %v2061
      %v2063 = vrot.slane %v1823, 5
      %v2064 = vrot.slane %v2063, 4
      %v2065 = vrot.slane %v1824, 5
      %v2066 = vsel %vm852, %v2064, %v2065
      %v2067 = vrot.slane %v1825, 5
      %v2068 = vrot.slane %v2067, 4
      %v2069 = vrot.slane %v1826, 5
      %v2070 = vsel %vm852, %v2068, %v2069
      %v2071 = vrot.slane %v1827, 5
      %v2072 = vrot.slane %v2071, 4
      %v2073 = vrot.slane %v1828, 5
      %v2074 = vsel %vm852, %v2072, %v2073
      %s2075 = scalar_lea.vmem %s3, 22
      %v2076 = vld [vmem:[%s2075] sm:$0x3]
      %v2077 = vunpack.c.l.b16 %v2046
      %v2078 = vunpack.c.l.b16 %v2050
      %v2079 = vunpack.c.l.b16 %v2054
      %v2080 = vunpack.c.l.b16 %v2058
      %v2081 = vunpack.c.l.b16 %v2062
      %v2082 = vunpack.c.l.b16 %v2066
      %v2083 = vunpack.c.l.b16 %v2070
      %v2084 = vunpack.c.l.b16 %v2074
      %v2085 = vpack.c.b16 %v2078, %v2077
      %v2086 = vpack.c.b16 %v2080, %v2079
      %v2087 = vpack.c.b16 %v2082, %v2081
      %v2088 = vpack.c.b16 %v2084, %v2083
      %v2090 = vsel %vm684, %v2085, 0
      %v2093 = vsel %vm684, %v2086, 0
      %v2096 = vsel %vm684, %v2087, 0
      %v2099 = vsel %vm684, %v2088, 0
      %v2102 = vsel %vm697, %v2076, 0
      %2104 = vmatprep.subr.bf16.mxu0 0
      %2105 = vmatpush1.bf16.msra.mxu0 %v2102
      %2106 = vmatprep.subr.bf16.mxu0 0
      %2107 = vmatpush1.bf16.msra.mxu0 0
      %2108 = vmatprep.subr.bf16.mxu0 0
      %2109 = vmatpush1.bf16.msra.mxu0 0
      %2110 = vmatprep.subr.bf16.mxu0 0
      %2111 = vmatpush1.bf16.msra.mxu0 0
      %2112 = vmatprep.subr.bf16.mxu0 0
      %2113 = vmatpush1.bf16.msra.mxu0 0
      %2114 = vmatprep.subr.bf16.mxu0 0
      %2115 = vmatpush1.bf16.msra.mxu0 0
      %2116 = vmatprep.subr.bf16.mxu0 0
      %2117 = vmatpush1.bf16.msra.mxu0 0
      %2118 = vmatprep.subr.bf16.mxu0 0
      %2119 = vmatpush1.bf16.msra.mxu0 0
      %2120 = vmatprep.subr.bf16.mxu0 0
      %2121 = vmatpush1.bf16.msra.mxu0 0
      %2122 = vmatprep.subr.bf16.mxu0 0
      %2123 = vmatpush1.bf16.msra.mxu0 0
      %2124 = vmatprep.subr.bf16.mxu0 0
      %2125 = vmatpush1.bf16.msra.mxu0 0
      %2126 = vmatprep.subr.bf16.mxu0 0
      %2127 = vmatpush1.bf16.msra.mxu0 0
      %2128 = vmatprep.subr.bf16.mxu0 0
      %2129 = vmatpush1.bf16.msra.mxu0 0
      %2130 = vmatprep.subr.bf16.mxu0 0
      %2131 = vmatpush1.bf16.msra.mxu0 0
      %2132 = vmatprep.subr.bf16.mxu0 0
      %2133 = vmatpush1.bf16.msra.mxu0 0
      %2134 = vmatprep.subr.bf16.mxu0 0
      %2135 = vmatpush1.bf16.msra.mxu0 0
      %2136 = vmatprep.mubr.bf16.mxu0 0
      %2137 = vmatmul.mubr.bf16.gmra.mrb[0].mxu0 %v2090
      %v2138 = vpop.f32.mrb[0].mxu0
      %v2139 = vadd.f32 0.0, %v2138
      %v2140 = vpop.f32.mrb[0].mxu0
      %v2141 = vpop.f32.mrb[0].mxu0
      %v2142 = vadd.f32 0.0, %v2141
      %v2143 = vpop.f32.mrb[0].mxu0
      %2144 = vmatprep.mubr.bf16.mxu0 0
      %2145 = vmatmul.mubr.bf16.gmra.mrb[0].mxu0 %v2093
      %v2146 = vpop.f32.mrb[0].mxu0
      %v2147 = vadd.f32 0.0, %v2146
      %v2148 = vpop.f32.mrb[0].mxu0
      %v2149 = vpop.f32.mrb[0].mxu0
      %v2150 = vadd.f32 0.0, %v2149
      %v2151 = vpop.f32.mrb[0].mxu0
      %2152 = vmatprep.mubr.bf16.mxu0 0
      %2153 = vmatmul.mubr.bf16.gmra.mrb[0].mxu0 %v2096
      %v2154 = vpop.f32.mrb[0].mxu0
      %v2155 = vadd.f32 0.0, %v2154
      %v2156 = vpop.f32.mrb[0].mxu0
      %v2157 = vpop.f32.mrb[0].mxu0
      %v2158 = vadd.f32 0.0, %v2157
      %v2159 = vpop.f32.mrb[0].mxu0
      %2160 = vmatprep.mubr.bf16.mxu0 0
      %2161 = vmatmul.mubr.bf16.gmra.mrb[0].mxu0 %v2099
      %v2162 = vpop.f32.mrb[0].mxu0
      %v2163 = vadd.f32 0.0, %v2162
      %v2164 = vpop.f32.mrb[0].mxu0
      %v2165 = vpop.f32.mrb[0].mxu0
      %v2166 = vadd.f32 0.0, %v2165
      %v2167 = vpop.f32.mrb[0].mxu0
      %2168 = vdwg.mxu0
      %v2169 = vadd.f32 %v2035, %v2139
      %v2170 = vadd.f32 %v2036, %v2142
      %v2171 = vadd.f32 %v2037, %v2147
      %v2172 = vadd.f32 %v2038, %v2150
      %v2173 = vadd.f32 %v2039, %v2155
      %v2174 = vadd.f32 %v2040, %v2158
      %v2175 = vadd.f32 %v2041, %v2163
      %v2176 = vadd.f32 %v2042, %v2166
      %s2177 = scalar_lea.vmem %s3, 24
      %v2178 = vld [vmem:[%s2177] sm:$0x3]
      %v2180 = vunpack.c.l.b16 %v1693
      %v2181 = vpack.c.b16 %v1707, %v1706
      %v2182 = vpack.c.b16 %v1709, %v1708
      %v2183 = vpack.c.b16 %v1711, %v1710
      %v2184 = vpack.c.b16 %v2180, %v1712
      %v2186 = vsel %vm684, %v2181, 0
      %v2189 = vsel %vm684, %v2182, 0
      %v2192 = vsel %vm684, %v2183, 0
      %v2195 = vsel %vm684, %v2184, 0
      %v2198 = vsel %vm697, %v2178, 0
      %2200 = vmatprep.subr.bf16.mxu0 0
      %2201 = vmatpush1.bf16.msra.mxu0 %v2198
      %2202 = vmatprep.subr.bf16.mxu0 0
      %2203 = vmatpush1.bf16.msra.mxu0 0
      %2204 = vmatprep.subr.bf16.mxu0 0
      %2205 = vmatpush1.bf16.msra.mxu0 0
      %2206 = vmatprep.subr.bf16.mxu0 0
      %2207 = vmatpush1.bf16.msra.mxu0 0
      %2208 = vmatprep.subr.bf16.mxu0 0
      %2209 = vmatpush1.bf16.msra.mxu0 0
      %2210 = vmatprep.subr.bf16.mxu0 0
      %2211 = vmatpush1.bf16.msra.mxu0 0
      %2212 = vmatprep.subr.bf16.mxu0 0
      %2213 = vmatpush1.bf16.msra.mxu0 0
      %2214 = vmatprep.subr.bf16.mxu0 0
      %2215 = vmatpush1.bf16.msra.mxu0 0
      %2216 = vmatprep.subr.bf16.mxu0 0
      %2217 = vmatpush1.bf16.msra.mxu0 0
      %2218 = vmatprep.subr.bf16.mxu0 0
      %2219 = vmatpush1.bf16.msra.mxu0 0
      %2220 = vmatprep.subr.bf16.mxu0 0
      %2221 = vmatpush1.bf16.msra.mxu0 0
      %2222 = vmatprep.subr.bf16.mxu0 0
      %2223 = vmatpush1.bf16.msra.mxu0 0
      %2224 = vmatprep.subr.bf16.mxu0 0
      %2225 = vmatpush1.bf16.msra.mxu0 0
      %2226 = vmatprep.subr.bf16.mxu0 0
      %2227 = vmatpush1.bf16.msra.mxu0 0
      %2228 = vmatprep.subr.bf16.mxu0 0
      %2229 = vmatpush1.bf16.msra.mxu0 0
      %2230 = vmatprep.subr.bf16.mxu0 0
      %2231 = vmatpush1.bf16.msra.mxu0 0
      %2232 = vmatprep.mubr.bf16.mxu0 0
      %2233 = vmatmul.mubr.bf16.gmra.mrb[0].mxu0 %v2186
      %v2234 = vpop.f32.mrb[0].mxu0
      %v2235 = vadd.f32 0.0, %v2234
      %v2236 = vpop.f32.mrb[0].mxu0
      %v2237 = vpop.f32.mrb[0].mxu0
      %v2238 = vadd.f32 0.0, %v2237
      %v2239 = vpop.f32.mrb[0].mxu0
      %2240 = vmatprep.mubr.bf16.mxu0 0
      %2241 = vmatmul.mubr.bf16.gmra.mrb[0].mxu0 %v2189
      %v2242 = vpop.f32.mrb[0].mxu0
      %v2243 = vadd.f32 0.0, %v2242
      %v2244 = vpop.f32.mrb[0].mxu0
      %v2245 = vpop.f32.mrb[0].mxu0
      %v2246 = vadd.f32 0.0, %v2245
      %v2247 = vpop.f32.mrb[0].mxu0
      %2248 = vmatprep.mubr.bf16.mxu0 0
      %2249 = vmatmul.mubr.bf16.gmra.mrb[0].mxu0 %v2192
      %v2250 = vpop.f32.mrb[0].mxu0
      %v2251 = vadd.f32 0.0, %v2250
      %v2252 = vpop.f32.mrb[0].mxu0
      %v2253 = vpop.f32.mrb[0].mxu0
      %v2254 = vadd.f32 0.0, %v2253
      %v2255 = vpop.f32.mrb[0].mxu0
      %2256 = vmatprep.mubr.bf16.mxu0 0
      %2257 = vmatmul.mubr.bf16.gmra.mrb[0].mxu0 %v2195
      %v2258 = vpop.f32.mrb[0].mxu0
      %v2259 = vadd.f32 0.0, %v2258
      %v2260 = vpop.f32.mrb[0].mxu0
      %v2261 = vpop.f32.mrb[0].mxu0
      %v2262 = vadd.f32 0.0, %v2261
      %v2263 = vpop.f32.mrb[0].mxu0
      %2264 = vdwg.mxu0
      %v2265 = vadd.f32 %v2169, %v2235
      %v2266 = vadd.f32 %v2170, %v2238
      %v2267 = vadd.f32 %v2171, %v2243
      %v2268 = vadd.f32 %v2172, %v2246
      %v2269 = vadd.f32 %v2173, %v2251
      %v2270 = vadd.f32 %v2174, %v2254
      %v2271 = vadd.f32 %v2175, %v2259
      %v2272 = vadd.f32 %v2176, %v2262
      %v2273 = vunpack.c.h.b16 %v1693
      %v2274 = vpack.c.b16 %v2180, %v2180
      %v2275 = vpack.c.b16 %v2273, %v2273
      %v2277 = vshrl.u32 %v2274, 16
      %v2279 = vrot.slane %v2277, 4
      %v2280 = vshll.u32 %v2274, 16
      %v2282 = vrot.slane %v2280, 5
      %v2283 = vor.u32 %v2279, %v2282
      %v2284 = vrot.slane %v2283, 4
      %v2286 = vshll.u32 %v2275, 16
      %v2288 = vrot.slane %v2286, 5
      %v2289 = vsel %vm557, %v2284, %v2288
      %s2290 = scalar_lea.vmem %s3, 26
      %v2291 = vld [vmem:[%s2290] sm:$0x3]
      %v2292 = vunpack.c.l.b16 %v2289
      %v2293 = vpack.c.b16 %v1945, %v1944
      %v2294 = vpack.c.b16 %v1947, %v1946
      %v2295 = vpack.c.b16 %v1949, %v1948
      %v2296 = vpack.c.b16 %v2292, %v1950
      %v2298 = vsel %vm684, %v2293, 0
      %v2301 = vsel %vm684, %v2294, 0
      %v2304 = vsel %vm684, %v2295, 0
      %v2307 = vsel %vm684, %v2296, 0
      %v2310 = vsel %vm697, %v2291, 0
      %2312 = vmatprep.subr.bf16.mxu0 0
      %2313 = vmatpush1.bf16.msra.mxu0 %v2310
      %2314 = vmatprep.subr.bf16.mxu0 0
      %2315 = vmatpush1.bf16.msra.mxu0 0
      %2316 = vmatprep.subr.bf16.mxu0 0
      %2317 = vmatpush1.bf16.msra.mxu0 0
      %2318 = vmatprep.subr.bf16.mxu0 0
      %2319 = vmatpush1.bf16.msra.mxu0 0
      %2320 = vmatprep.subr.bf16.mxu0 0
      %2321 = vmatpush1.bf16.msra.mxu0 0
      %2322 = vmatprep.subr.bf16.mxu0 0
      %2323 = vmatpush1.bf16.msra.mxu0 0
      %2324 = vmatprep.subr.bf16.mxu0 0
      %2325 = vmatpush1.bf16.msra.mxu0 0
      %2326 = vmatprep.subr.bf16.mxu0 0
      %2327 = vmatpush1.bf16.msra.mxu0 0
      %2328 = vmatprep.subr.bf16.mxu0 0
      %2329 = vmatpush1.bf16.msra.mxu0 0
      %2330 = vmatprep.subr.bf16.mxu0 0
      %2331 = vmatpush1.bf16.msra.mxu0 0
      %2332 = vmatprep.subr.bf16.mxu0 0
      %2333 = vmatpush1.bf16.msra.mxu0 0
      %2334 = vmatprep.subr.bf16.mxu0 0
      %2335 = vmatpush1.bf16.msra.mxu0 0
      %2336 = vmatprep.subr.bf16.mxu0 0
      %2337 = vmatpush1.bf16.msra.mxu0 0
      %2338 = vmatprep.subr.bf16.mxu0 0
      %2339 = vmatpush1.bf16.msra.mxu0 0
      %2340 = vmatprep.subr.bf16.mxu0 0
      %2341 = vmatpush1.bf16.msra.mxu0 0
      %2342 = vmatprep.subr.bf16.mxu0 0
      %2343 = vmatpush1.bf16.msra.mxu0 0
      %2344 = vmatprep.mubr.bf16.mxu0 0
      %2345 = vmatmul.mubr.bf16.gmra.mrb[0].mxu0 %v2298
      %v2346 = vpop.f32.mrb[0].mxu0
      %v2347 = vadd.f32 0.0, %v2346
      %v2348 = vpop.f32.mrb[0].mxu0
      %v2349 = vpop.f32.mrb[0].mxu0
      %v2350 = vadd.f32 0.0, %v2349
      %v2351 = vpop.f32.mrb[0].mxu0
      %2352 = vmatprep.mubr.bf16.mxu0 0
      %2353 = vmatmul.mubr.bf16.gmra.mrb[0].mxu0 %v2301
      %v2354 = vpop.f32.mrb[0].mxu0
      %v2355 = vadd.f32 0.0, %v2354
      %v2356 = vpop.f32.mrb[0].mxu0
      %v2357 = vpop.f32.mrb[0].mxu0
      %v2358 = vadd.f32 0.0, %v2357
      %v2359 = vpop.f32.mrb[0].mxu0
      %2360 = vmatprep.mubr.bf16.mxu0 0
      %2361 = vmatmul.mubr.bf16.gmra.mrb[0].mxu0 %v2304
      %v2362 = vpop.f32.mrb[0].mxu0
      %v2363 = vadd.f32 0.0, %v2362
      %v2364 = vpop.f32.mrb[0].mxu0
      %v2365 = vpop.f32.mrb[0].mxu0
      %v2366 = vadd.f32 0.0, %v2365
      %v2367 = vpop.f32.mrb[0].mxu0
      %2368 = vmatprep.mubr.bf16.mxu0 0
      %2369 = vmatmul.mubr.bf16.gmra.mrb[0].mxu0 %v2307
      %v2370 = vpop.f32.mrb[0].mxu0
      %v2371 = vadd.f32 0.0, %v2370
      %v2372 = vpop.f32.mrb[0].mxu0
      %v2373 = vpop.f32.mrb[0].mxu0
      %v2374 = vadd.f32 0.0, %v2373
      %v2375 = vpop.f32.mrb[0].mxu0
      %2376 = vdwg.mxu0
      %v2377 = vadd.f32 %v2265, %v2347
      %v2378 = vadd.f32 %v2266, %v2350
      %v2379 = vadd.f32 %v2267, %v2355
      %v2380 = vadd.f32 %v2268, %v2358
      %v2381 = vadd.f32 %v2269, %v2363
      %v2382 = vadd.f32 %v2270, %v2366
      %v2383 = vadd.f32 %v2271, %v2371
      %v2384 = vadd.f32 %v2272, %v2374
      %v2385 = vrot.slane %v2274, 5
      %v2386 = vrot.slane %v2385, 4
      %v2387 = vrot.slane %v2275, 5
      %v2388 = vsel %vm852, %v2386, %v2387
      %s2389 = scalar_lea.vmem %s3, 28
      %v2390 = vld [vmem:[%s2389] sm:$0x3]
      %v2391 = vunpack.c.l.b16 %v2388
      %v2392 = vpack.c.b16 %v2079, %v2078
      %v2393 = vpack.c.b16 %v2081, %v2080
      %v2394 = vpack.c.b16 %v2083, %v2082
      %v2395 = vpack.c.b16 %v2391, %v2084
      %v2397 = vsel %vm684, %v2392, 0
      %v2400 = vsel %vm684, %v2393, 0
      %v2403 = vsel %vm684, %v2394, 0
      %v2406 = vsel %vm684, %v2395, 0
      %v2409 = vsel %vm697, %v2390, 0
      %2411 = vmatprep.subr.bf16.mxu0 0
      %2412 = vmatpush1.bf16.msra.mxu0 %v2409
      %2413 = vmatprep.subr.bf16.mxu0 0
      %2414 = vmatpush1.bf16.msra.mxu0 0
      %2415 = vmatprep.subr.bf16.mxu0 0
      %2416 = vmatpush1.bf16.msra.mxu0 0
      %2417 = vmatprep.subr.bf16.mxu0 0
      %2418 = vmatpush1.bf16.msra.mxu0 0
      %2419 = vmatprep.subr.bf16.mxu0 0
      %2420 = vmatpush1.bf16.msra.mxu0 0
      %2421 = vmatprep.subr.bf16.mxu0 0
      %2422 = vmatpush1.bf16.msra.mxu0 0
      %2423 = vmatprep.subr.bf16.mxu0 0
      %2424 = vmatpush1.bf16.msra.mxu0 0
      %2425 = vmatprep.subr.bf16.mxu0 0
      %2426 = vmatpush1.bf16.msra.mxu0 0
      %2427 = vmatprep.subr.bf16.mxu0 0
      %2428 = vmatpush1.bf16.msra.mxu0 0
      %2429 = vmatprep.subr.bf16.mxu0 0
      %2430 = vmatpush1.bf16.msra.mxu0 0
      %2431 = vmatprep.subr.bf16.mxu0 0
      %2432 = vmatpush1.bf16.msra.mxu0 0
      %2433 = vmatprep.subr.bf16.mxu0 0
      %2434 = vmatpush1.bf16.msra.mxu0 0
      %2435 = vmatprep.subr.bf16.mxu0 0
      %2436 = vmatpush1.bf16.msra.mxu0 0
      %2437 = vmatprep.subr.bf16.mxu0 0
      %2438 = vmatpush1.bf16.msra.mxu0 0
      %2439 = vmatprep.subr.bf16.mxu0 0
      %2440 = vmatpush1.bf16.msra.mxu0 0
      %2441 = vmatprep.subr.bf16.mxu0 0
      %2442 = vmatpush1.bf16.msra.mxu0 0
      %2443 = vmatprep.mubr.bf16.mxu0 0
      %2444 = vmatmul.mubr.bf16.gmra.mrb[0].mxu0 %v2397
      %v2445 = vpop.f32.mrb[0].mxu0
      %v2446 = vadd.f32 0.0, %v2445
      %v2447 = vpop.f32.mrb[0].mxu0
      %v2448 = vpop.f32.mrb[0].mxu0
      %v2449 = vadd.f32 0.0, %v2448
      %v2450 = vpop.f32.mrb[0].mxu0
      %2451 = vmatprep.mubr.bf16.mxu0 0
      %2452 = vmatmul.mubr.bf16.gmra.mrb[0].mxu0 %v2400
      %v2453 = vpop.f32.mrb[0].mxu0
      %v2454 = vadd.f32 0.0, %v2453
      %v2455 = vpop.f32.mrb[0].mxu0
      %v2456 = vpop.f32.mrb[0].mxu0
      %v2457 = vadd.f32 0.0, %v2456
      %v2458 = vpop.f32.mrb[0].mxu0
      %2459 = vmatprep.mubr.bf16.mxu0 0
      %2460 = vmatmul.mubr.bf16.gmra.mrb[0].mxu0 %v2403
      %v2461 = vpop.f32.mrb[0].mxu0
      %v2462 = vadd.f32 0.0, %v2461
      %v2463 = vpop.f32.mrb[0].mxu0
      %v2464 = vpop.f32.mrb[0].mxu0
      %v2465 = vadd.f32 0.0, %v2464
      %v2466 = vpop.f32.mrb[0].mxu0
      %2467 = vmatprep.mubr.bf16.mxu0 0
      %2468 = vmatmul.mubr.bf16.gmra.mrb[0].mxu0 %v2406
      %v2469 = vpop.f32.mrb[0].mxu0
      %v2470 = vadd.f32 0.0, %v2469
      %v2471 = vpop.f32.mrb[0].mxu0
      %v2472 = vpop.f32.mrb[0].mxu0
      %v2473 = vadd.f32 0.0, %v2472
      %v2474 = vpop.f32.mrb[0].mxu0
      %2475 = vdwg.mxu0
      %v2476 = vadd.f32 %v2377, %v2446
      %v2477 = vadd.f32 %v2378, %v2449
      %v2478 = vadd.f32 %v2379, %v2454
      %v2479 = vadd.f32 %v2380, %v2457
      %v2480 = vadd.f32 %v2381, %v2462
      %v2481 = vadd.f32 %v2382, %v2465
      %v2482 = vadd.f32 %v2383, %v2470
      %v2483 = vadd.f32 %v2384, %v2473
      %s2484 = scalar_lea.vmem %s3, 30
      %v2485 = vld [vmem:[%s2484] sm:$0x3]
      %v2487 = vunpack.c.l.b16 %v1694
      %v2488 = vpack.c.b16 %v2487, %v2180
      %v2490 = vsel %vm684, %v2488, 0
      %v2493 = vsel %vm697, %v2485, 0
      %2495 = vmatprep.subr.bf16.mxu0 0
      %2496 = vmatpush1.bf16.msra.mxu0 %v2493
      %2497 = vmatprep.subr.bf16.mxu0 0
      %2498 = vmatpush1.bf16.msra.mxu0 0
      %2499 = vmatprep.subr.bf16.mxu0 0
      %2500 = vmatpush1.bf16.msra.mxu0 0
      %2501 = vmatprep.subr.bf16.mxu0 0
      %2502 = vmatpush1.bf16.msra.mxu0 0
      %2503 = vmatprep.subr.bf16.mxu0 0
      %2504 = vmatpush1.bf16.msra.mxu0 0
      %2505 = vmatprep.subr.bf16.mxu0 0
      %2506 = vmatpush1.bf16.msra.mxu0 0
      %2507 = vmatprep.subr.bf16.mxu0 0
      %2508 = vmatpush1.bf16.msra.mxu0 0
      %2509 = vmatprep.subr.bf16.mxu0 0
      %2510 = vmatpush1.bf16.msra.mxu0 0
      %2511 = vmatprep.subr.bf16.mxu0 0
      %2512 = vmatpush1.bf16.msra.mxu0 0
      %2513 = vmatprep.subr.bf16.mxu0 0
      %2514 = vmatpush1.bf16.msra.mxu0 0
      %2515 = vmatprep.subr.bf16.mxu0 0
      %2516 = vmatpush1.bf16.msra.mxu0 0
      %2517 = vmatprep.subr.bf16.mxu0 0
      %2518 = vmatpush1.bf16.msra.mxu0 0
      %2519 = vmatprep.subr.bf16.mxu0 0
      %2520 = vmatpush1.bf16.msra.mxu0 0
      %2521 = vmatprep.subr.bf16.mxu0 0
      %2522 = vmatpush1.bf16.msra.mxu0 0
      %2523 = vmatprep.subr.bf16.mxu0 0
      %2524 = vmatpush1.bf16.msra.mxu0 0
      %2525 = vmatprep.subr.bf16.mxu0 0
      %2526 = vmatpush1.bf16.msra.mxu0 0
      %2527 = vmatprep.mubr.bf16.mxu0 0
      %2528 = vmatmul.mubr.bf16.gmra.mrb[0].mxu0 %v1721
      %v2529 = vpop.f32.mrb[0].mxu0
      %v2530 = vadd.f32 0.0, %v2529
      %v2531 = vpop.f32.mrb[0].mxu0
      %v2532 = vpop.f32.mrb[0].mxu0
      %v2533 = vadd.f32 0.0, %v2532
      %v2534 = vpop.f32.mrb[0].mxu0
      %2535 = vmatprep.mubr.bf16.mxu0 0
      %2536 = vmatmul.mubr.bf16.gmra.mrb[0].mxu0 %v1724
      %v2537 = vpop.f32.mrb[0].mxu0
      %v2538 = vadd.f32 0.0, %v2537
      %v2539 = vpop.f32.mrb[0].mxu0
      %v2540 = vpop.f32.mrb[0].mxu0
      %v2541 = vadd.f32 0.0, %v2540
      %v2542 = vpop.f32.mrb[0].mxu0
      %2543 = vmatprep.mubr.bf16.mxu0 0
      %2544 = vmatmul.mubr.bf16.gmra.mrb[0].mxu0 %v1727
      %v2545 = vpop.f32.mrb[0].mxu0
      %v2546 = vadd.f32 0.0, %v2545
      %v2547 = vpop.f32.mrb[0].mxu0
      %v2548 = vpop.f32.mrb[0].mxu0
      %v2549 = vadd.f32 0.0, %v2548
      %v2550 = vpop.f32.mrb[0].mxu0
      %2551 = vmatprep.mubr.bf16.mxu0 0
      %2552 = vmatmul.mubr.bf16.gmra.mrb[0].mxu0 %v2490
      %v2553 = vpop.f32.mrb[0].mxu0
      %v2554 = vadd.f32 0.0, %v2553
      %v2555 = vpop.f32.mrb[0].mxu0
      %v2556 = vpop.f32.mrb[0].mxu0
      %v2557 = vadd.f32 0.0, %v2556
      %v2558 = vpop.f32.mrb[0].mxu0
      %2559 = vdwg.mxu0
      %v2560 = vadd.f32 %v2476, %v2530
      %v2561 = vadd.f32 %v2477, %v2533
      %v2562 = vadd.f32 %v2478, %v2538
      %v2563 = vadd.f32 %v2479, %v2541
      %v2564 = vadd.f32 %v2480, %v2546
      %v2565 = vadd.f32 %v2481, %v2549
      %v2566 = vadd.f32 %v2482, %v2554
      %v2567 = vadd.f32 %v2483, %v2557
      %v2568 = vunpack.c.h.b16 %v1694
      %v2569 = vpack.c.b16 %v2487, %v2487
      %v2570 = vpack.c.b16 %v2568, %v2568
      %v2572 = vshrl.u32 %v2569, 16
      %v2574 = vrot.slane %v2572, 4
      %v2575 = vshll.u32 %v2569, 16
      %v2577 = vrot.slane %v2575, 5
      %v2578 = vor.u32 %v2574, %v2577
      %v2579 = vrot.slane %v2578, 4
      %v2581 = vshll.u32 %v2570, 16
      %v2583 = vrot.slane %v2581, 5
      %v2584 = vsel %vm557, %v2579, %v2583
      %s2585 = scalar_lea.vmem %s3, 32
      %v2586 = vld [vmem:[%s2585] sm:$0x3]
      %v2587 = vunpack.c.l.b16 %v2584
      %v2588 = vpack.c.b16 %v2587, %v2292
      %v2590 = vsel %vm684, %v2588, 0
      %v2593 = vsel %vm697, %v2586, 0
      %2595 = vmatprep.subr.bf16.mxu0 0
      %2596 = vmatpush1.bf16.msra.mxu0 %v2593
      %2597 = vmatprep.subr.bf16.mxu0 0
      %2598 = vmatpush1.bf16.msra.mxu0 0
      %2599 = vmatprep.subr.bf16.mxu0 0
      %2600 = vmatpush1.bf16.msra.mxu0 0
      %2601 = vmatprep.subr.bf16.mxu0 0
      %2602 = vmatpush1.bf16.msra.mxu0 0
      %2603 = vmatprep.subr.bf16.mxu0 0
      %2604 = vmatpush1.bf16.msra.mxu0 0
      %2605 = vmatprep.subr.bf16.mxu0 0
      %2606 = vmatpush1.bf16.msra.mxu0 0
      %2607 = vmatprep.subr.bf16.mxu0 0
      %2608 = vmatpush1.bf16.msra.mxu0 0
      %2609 = vmatprep.subr.bf16.mxu0 0
      %2610 = vmatpush1.bf16.msra.mxu0 0
      %2611 = vmatprep.subr.bf16.mxu0 0
      %2612 = vmatpush1.bf16.msra.mxu0 0
      %2613 = vmatprep.subr.bf16.mxu0 0
      %2614 = vmatpush1.bf16.msra.mxu0 0
      %2615 = vmatprep.subr.bf16.mxu0 0
      %2616 = vmatpush1.bf16.msra.mxu0 0
      %2617 = vmatprep.subr.bf16.mxu0 0
      %2618 = vmatpush1.bf16.msra.mxu0 0
      %2619 = vmatprep.subr.bf16.mxu0 0
      %2620 = vmatpush1.bf16.msra.mxu0 0
      %2621 = vmatprep.subr.bf16.mxu0 0
      %2622 = vmatpush1.bf16.msra.mxu0 0
      %2623 = vmatprep.subr.bf16.mxu0 0
      %2624 = vmatpush1.bf16.msra.mxu0 0
      %2625 = vmatprep.subr.bf16.mxu0 0
      %2626 = vmatpush1.bf16.msra.mxu0 0
      %2627 = vmatprep.mubr.bf16.mxu0 0
      %2628 = vmatmul.mubr.bf16.gmra.mrb[0].mxu0 %v1959
      %v2629 = vpop.f32.mrb[0].mxu0
      %v2630 = vadd.f32 0.0, %v2629
      %v2631 = vpop.f32.mrb[0].mxu0
      %v2632 = vpop.f32.mrb[0].mxu0
      %v2633 = vadd.f32 0.0, %v2632
      %v2634 = vpop.f32.mrb[0].mxu0
      %2635 = vmatprep.mubr.bf16.mxu0 0
      %2636 = vmatmul.mubr.bf16.gmra.mrb[0].mxu0 %v1962
      %v2637 = vpop.f32.mrb[0].mxu0
      %v2638 = vadd.f32 0.0, %v2637
      %v2639 = vpop.f32.mrb[0].mxu0
      %v2640 = vpop.f32.mrb[0].mxu0
      %v2641 = vadd.f32 0.0, %v2640
      %v2642 = vpop.f32.mrb[0].mxu0
      %2643 = vmatprep.mubr.bf16.mxu0 0
      %2644 = vmatmul.mubr.bf16.gmra.mrb[0].mxu0 %v1965
      %v2645 = vpop.f32.mrb[0].mxu0
      %v2646 = vadd.f32 0.0, %v2645
      %v2647 = vpop.f32.mrb[0].mxu0
      %v2648 = vpop.f32.mrb[0].mxu0
      %v2649 = vadd.f32 0.0, %v2648
      %v2650 = vpop.f32.mrb[0].mxu0
      %2651 = vmatprep.mubr.bf16.mxu0 0
      %2652 = vmatmul.mubr.bf16.gmra.mrb[0].mxu0 %v2590
      %v2653 = vpop.f32.mrb[0].mxu0
      %v2654 = vadd.f32 0.0, %v2653
      %v2655 = vpop.f32.mrb[0].mxu0
      %v2656 = vpop.f32.mrb[0].mxu0
      %v2657 = vadd.f32 0.0, %v2656
      %v2658 = vpop.f32.mrb[0].mxu0
      %2659 = vdwg.mxu0
      %v2660 = vadd.f32 %v2560, %v2630
      %v2661 = vadd.f32 %v2561, %v2633
      %v2662 = vadd.f32 %v2562, %v2638
      %v2663 = vadd.f32 %v2563, %v2641
      %v2664 = vadd.f32 %v2564, %v2646
      %v2665 = vadd.f32 %v2565, %v2649
      %v2666 = vadd.f32 %v2566, %v2654
      %v2667 = vadd.f32 %v2567, %v2657
      %v2668 = vrot.slane %v2569, 5
      %v2669 = vrot.slane %v2668, 4
      %v2670 = vrot.slane %v2570, 5
      %v2671 = vsel %vm852, %v2669, %v2670
      %s2672 = scalar_lea.vmem %s3, 34
      %v2673 = vld [vmem:[%s2672] sm:$0x3]
      %v2674 = vunpack.c.l.b16 %v2671
      %v2675 = vpack.c.b16 %v2674, %v2391
      %v2677 = vsel %vm684, %v2675, 0
      %v2680 = vsel %vm697, %v2673, 0
      %2682 = vmatprep.subr.bf16.mxu0 0
      %2683 = vmatpush1.bf16.msra.mxu0 %v2680
      %2684 = vmatprep.subr.bf16.mxu0 0
      %2685 = vmatpush1.bf16.msra.mxu0 0
      %2686 = vmatprep.subr.bf16.mxu0 0
      %2687 = vmatpush1.bf16.msra.mxu0 0
      %2688 = vmatprep.subr.bf16.mxu0 0
      %2689 = vmatpush1.bf16.msra.mxu0 0
      %2690 = vmatprep.subr.bf16.mxu0 0
      %2691 = vmatpush1.bf16.msra.mxu0 0
      %2692 = vmatprep.subr.bf16.mxu0 0
      %2693 = vmatpush1.bf16.msra.mxu0 0
      %2694 = vmatprep.subr.bf16.mxu0 0
      %2695 = vmatpush1.bf16.msra.mxu0 0
      %2696 = vmatprep.subr.bf16.mxu0 0
      %2697 = vmatpush1.bf16.msra.mxu0 0
      %2698 = vmatprep.subr.bf16.mxu0 0
      %2699 = vmatpush1.bf16.msra.mxu0 0
      %2700 = vmatprep.subr.bf16.mxu0 0
      %2701 = vmatpush1.bf16.msra.mxu0 0
      %2702 = vmatprep.subr.bf16.mxu0 0
      %2703 = vmatpush1.bf16.msra.mxu0 0
      %2704 = vmatprep.subr.bf16.mxu0 0
      %2705 = vmatpush1.bf16.msra.mxu0 0
      %2706 = vmatprep.subr.bf16.mxu0 0
      %2707 = vmatpush1.bf16.msra.mxu0 0
      %2708 = vmatprep.subr.bf16.mxu0 0
      %2709 = vmatpush1.bf16.msra.mxu0 0
      %2710 = vmatprep.subr.bf16.mxu0 0
      %2711 = vmatpush1.bf16.msra.mxu0 0
      %2712 = vmatprep.subr.bf16.mxu0 0
      %2713 = vmatpush1.bf16.msra.mxu0 0
      %2714 = vmatprep.mubr.bf16.mxu0 0
      %2715 = vmatmul.mubr.bf16.gmra.mrb[0].mxu0 %v2093
      %v2716 = vpop.f32.mrb[0].mxu0
      %v2717 = vadd.f32 0.0, %v2716
      %v2718 = vpop.f32.mrb[0].mxu0
      %v2719 = vpop.f32.mrb[0].mxu0
      %v2720 = vadd.f32 0.0, %v2719
      %v2721 = vpop.f32.mrb[0].mxu0
      %2722 = vmatprep.mubr.bf16.mxu0 0
      %2723 = vmatmul.mubr.bf16.gmra.mrb[0].mxu0 %v2096
      %v2724 = vpop.f32.mrb[0].mxu0
      %v2725 = vadd.f32 0.0, %v2724
      %v2726 = vpop.f32.mrb[0].mxu0
      %v2727 = vpop.f32.mrb[0].mxu0
      %v2728 = vadd.f32 0.0, %v2727
      %v2729 = vpop.f32.mrb[0].mxu0
      %2730 = vmatprep.mubr.bf16.mxu0 0
      %2731 = vmatmul.mubr.bf16.gmra.mrb[0].mxu0 %v2099
      %v2732 = vpop.f32.mrb[0].mxu0
      %v2733 = vadd.f32 0.0, %v2732
      %v2734 = vpop.f32.mrb[0].mxu0
      %v2735 = vpop.f32.mrb[0].mxu0
      %v2736 = vadd.f32 0.0, %v2735
      %v2737 = vpop.f32.mrb[0].mxu0
      %2738 = vmatprep.mubr.bf16.mxu0 0
      %2739 = vmatmul.mubr.bf16.gmra.mrb[0].mxu0 %v2677
      %v2740 = vpop.f32.mrb[0].mxu0
      %v2741 = vadd.f32 0.0, %v2740
      %v2742 = vpop.f32.mrb[0].mxu0
      %v2743 = vpop.f32.mrb[0].mxu0
      %v2744 = vadd.f32 0.0, %v2743
      %v2745 = vpop.f32.mrb[0].mxu0
      %2746 = vdwg.mxu0
      %v2747 = vadd.f32 %v2660, %v2717
      %v2748 = vadd.f32 %v2661, %v2720
      %v2749 = vadd.f32 %v2662, %v2725
      %v2750 = vadd.f32 %v2663, %v2728
      %v2751 = vadd.f32 %v2664, %v2733
      %v2752 = vadd.f32 %v2665, %v2736
      %v2753 = vadd.f32 %v2666, %v2741
      %v2754 = vadd.f32 %v2667, %v2744
      %v2755 = vld [vmem:[%s359] sm:$0xff]
      %v2756 = vld [vmem:[%s359 + $0x8] sm:$0x3]
      %v2757 = vld [vmem:[%s359 + $0x10] sm:$0xff]
      %v2758 = vld [vmem:[%s359 + $0x18] sm:$0x3]
      %v2759 = vld [vmem:[%s359 + $0x20] sm:$0xff]
      %v2760 = vld [vmem:[%s359 + $0x28] sm:$0x3]
      %v2761 = vld [vmem:[%s359 + $0x30] sm:$0xff]
      %v2762 = vld [vmem:[%s359 + $0x38] sm:$0x3]
      %v2763 = vld [vmem:[%s359 + $0x40] sm:$0xff]
      %v2764 = vld [vmem:[%s359 + $0x48] sm:$0x3]
      %v2765 = vld [vmem:[%s359 + $0x50] sm:$0xff]
      %v2766 = vld [vmem:[%s359 + $0x58] sm:$0x3]
      %v2767 = vld [vmem:[%s359 + $0x60] sm:$0xff]
      %v2768 = vld [vmem:[%s359 + $0x68] sm:$0x3]
      %v2769 = vld [vmem:[%s359 + $0x70] sm:$0xff]
      %v2770 = vld [vmem:[%s359 + $0x78] sm:$0x3]
      %v2771 = vld [vmem:[%s359 + $0x80] sm:$0xff]
      %v2772 = vld [vmem:[%s359 + $0x88] sm:$0x3]
      %v2773 = vld [vmem:[%s359 + $0x90] sm:$0xff]
      %v2774 = vld [vmem:[%s359 + $0x98] sm:$0x3]
      %v2775 = vmul.f32 %v2755, %v395
      %v2776 = vmul.f32 %v2756, %v395
      %v2777 = vmul.f32 %v2757, %v395
      %v2778 = vmul.f32 %v2758, %v395
      %v2779 = vmul.f32 %v2759, %v395
      %v2780 = vmul.f32 %v2760, %v395
      %v2781 = vmul.f32 %v2761, %v395
      %v2782 = vmul.f32 %v2762, %v395
      %v2783 = vmul.f32 %v2763, %v395
      %v2784 = vmul.f32 %v2764, %v395
      %v2785 = vmul.f32 %v2765, %v395
      %v2786 = vmul.f32 %v2766, %v395
      %v2787 = vmul.f32 %v2767, %v395
      %v2788 = vmul.f32 %v2768, %v395
      %v2789 = vmul.f32 %v2769, %v395
      %v2790 = vmul.f32 %v2770, %v395
      %v2791 = vmul.f32 %v2771, %v395
      %v2792 = vmul.f32 %v2772, %v395
      %v2793 = vmul.f32 %v2773, %v395
      %v2794 = vmul.f32 %v2774, %v395
      %v2795 = vadd.f32 %v2775, %v419
      %v2796 = vadd.f32 %v2776, %v419
      %v2797 = vadd.f32 %v2777, %v419
      %v2798 = vadd.f32 %v2778, %v419
      %v2799 = vadd.f32 %v2779, %v419
      %v2800 = vadd.f32 %v2780, %v419
      %v2801 = vadd.f32 %v2781, %v419
      %v2802 = vadd.f32 %v2782, %v419
      %v2803 = vadd.f32 %v2783, %v419
      %v2804 = vadd.f32 %v2784, %v419
      %v2805 = vadd.f32 %v2785, %v419
      %v2806 = vadd.f32 %v2786, %v419
      %v2807 = vadd.f32 %v2787, %v419
      %v2808 = vadd.f32 %v2788, %v419
      %v2809 = vadd.f32 %v2789, %v419
      %v2810 = vadd.f32 %v2790, %v419
      %v2811 = vadd.f32 %v2791, %v419
      %v2812 = vadd.f32 %v2792, %v419
      %v2813 = vadd.f32 %v2793, %v419
      %v2814 = vadd.f32 %v2794, %v419
      %vm2815 = vcmp.ge.f32.partialorder %v2795, 0.0
      %vm2816 = vcmp.ge.f32.partialorder %v2796, 0.0
      %vm2817 = vcmp.ge.f32.partialorder %v2797, 0.0
      %vm2818 = vcmp.ge.f32.partialorder %v2798, 0.0
      %vm2819 = vcmp.ge.f32.partialorder %v2799, 0.0
      %vm2820 = vcmp.ge.f32.partialorder %v2800, 0.0
      %vm2821 = vcmp.ge.f32.partialorder %v2801, 0.0
      %vm2822 = vcmp.ge.f32.partialorder %v2802, 0.0
      %vm2823 = vcmp.ge.f32.partialorder %v2803, 0.0
      %vm2824 = vcmp.ge.f32.partialorder %v2804, 0.0
      %vm2825 = vcmp.ge.f32.partialorder %v2805, 0.0
      %vm2826 = vcmp.ge.f32.partialorder %v2806, 0.0
      %vm2827 = vcmp.ge.f32.partialorder %v2807, 0.0
      %vm2828 = vcmp.ge.f32.partialorder %v2808, 0.0
      %vm2829 = vcmp.ge.f32.partialorder %v2809, 0.0
      %vm2830 = vcmp.ge.f32.partialorder %v2810, 0.0
      %vm2831 = vcmp.ge.f32.partialorder %v2811, 0.0
      %vm2832 = vcmp.ge.f32.partialorder %v2812, 0.0
      %vm2833 = vcmp.ge.f32.partialorder %v2813, 0.0
      %vm2834 = vcmp.ge.f32.partialorder %v2814, 0.0
      %v2835 = vmul.f32 %v463, %v2795
      %v2836 = vmul.f32 %v463, %v2796
      %v2837 = vmul.f32 %v463, %v2797
      %v2838 = vmul.f32 %v463, %v2798
      %v2839 = vmul.f32 %v463, %v2799
      %v2840 = vmul.f32 %v463, %v2800
      %v2841 = vmul.f32 %v463, %v2801
      %v2842 = vmul.f32 %v463, %v2802
      %v2843 = vmul.f32 %v463, %v2803
      %v2844 = vmul.f32 %v463, %v2804
      %v2845 = vmul.f32 %v463, %v2805
      %v2846 = vmul.f32 %v463, %v2806
      %v2847 = vmul.f32 %v463, %v2807
      %v2848 = vmul.f32 %v463, %v2808
      %v2849 = vmul.f32 %v463, %v2809
      %v2850 = vmul.f32 %v463, %v2810
      %v2851 = vmul.f32 %v463, %v2811
      %v2852 = vmul.f32 %v463, %v2812
      %v2853 = vmul.f32 %v463, %v2813
      %v2854 = vmul.f32 %v463, %v2814
      %v2855 = vsel %vm2815, %v2795, %v2835
      %v2856 = vsel %vm2816, %v2796, %v2836
      %v2857 = vsel %vm2817, %v2797, %v2837
      %v2858 = vsel %vm2818, %v2798, %v2838
      %v2859 = vsel %vm2819, %v2799, %v2839
      %v2860 = vsel %vm2820, %v2800, %v2840
      %v2861 = vsel %vm2821, %v2801, %v2841
      %v2862 = vsel %vm2822, %v2802, %v2842
      %v2863 = vsel %vm2823, %v2803, %v2843
      %v2864 = vsel %vm2824, %v2804, %v2844
      %v2865 = vsel %vm2825, %v2805, %v2845
      %v2866 = vsel %vm2826, %v2806, %v2846
      %v2867 = vsel %vm2827, %v2807, %v2847
      %v2868 = vsel %vm2828, %v2808, %v2848
      %v2869 = vsel %vm2829, %v2809, %v2849
      %v2870 = vsel %vm2830, %v2810, %v2850
      %v2871 = vsel %vm2831, %v2811, %v2851
      %v2872 = vsel %vm2832, %v2812, %v2852
      %v2873 = vsel %vm2833, %v2813, %v2853
      %v2874 = vsel %vm2834, %v2814, %v2854
      %v2875 = vpack.c.bf16 %v2856, %v2855
      %v2876 = vpack.c.bf16 %v2858, %v2857
      %v2877 = vpack.c.bf16 %v2860, %v2859
      %v2878 = vpack.c.bf16 %v2862, %v2861
      %v2879 = vpack.c.bf16 %v2864, %v2863
      %v2880 = vpack.c.bf16 %v2866, %v2865
      %v2881 = vpack.c.bf16 %v2868, %v2867
      %v2882 = vpack.c.bf16 %v2870, %v2869
      %v2883 = vpack.c.bf16 %v2872, %v2871
      %v2884 = vpack.c.bf16 %v2874, %v2873
      %s2885 = scalar_lea.vmem %s3, 36
      %v2886 = vld [vmem:[%s2885] sm:$0x3]
      %v2895 = vunpack.c.l.b16 %v2875
      %v2896 = vunpack.c.l.b16 %v2876
      %v2897 = vunpack.c.l.b16 %v2877
      %v2898 = vunpack.c.l.b16 %v2878
      %v2899 = vunpack.c.l.b16 %v2879
      %v2900 = vunpack.c.l.b16 %v2880
      %v2901 = vunpack.c.l.b16 %v2881
      %v2902 = vunpack.c.l.b16 %v2882
      %v2903 = vpack.c.b16 %v2896, %v2895
      %v2904 = vpack.c.b16 %v2898, %v2897
      %v2905 = vpack.c.b16 %v2900, %v2899
      %v2906 = vpack.c.b16 %v2902, %v2901
      %v2908 = vsel %vm684, %v2903, 0
      %v2911 = vsel %vm684, %v2904, 0
      %v2914 = vsel %vm684, %v2905, 0
      %v2917 = vsel %vm684, %v2906, 0
      %v2920 = vsel %vm697, %v2886, 0
      %2922 = vmatprep.subr.bf16.mxu0 0
      %2923 = vmatpush1.bf16.msra.mxu0 %v2920
      %2924 = vmatprep.subr.bf16.mxu0 0
      %2925 = vmatpush1.bf16.msra.mxu0 0
      %2926 = vmatprep.subr.bf16.mxu0 0
      %2927 = vmatpush1.bf16.msra.mxu0 0
      %2928 = vmatprep.subr.bf16.mxu0 0
      %2929 = vmatpush1.bf16.msra.mxu0 0
      %2930 = vmatprep.subr.bf16.mxu0 0
      %2931 = vmatpush1.bf16.msra.mxu0 0
      %2932 = vmatprep.subr.bf16.mxu0 0
      %2933 = vmatpush1.bf16.msra.mxu0 0
      %2934 = vmatprep.subr.bf16.mxu0 0
      %2935 = vmatpush1.bf16.msra.mxu0 0
      %2936 = vmatprep.subr.bf16.mxu0 0
      %2937 = vmatpush1.bf16.msra.mxu0 0
      %2938 = vmatprep.subr.bf16.mxu0 0
      %2939 = vmatpush1.bf16.msra.mxu0 0
      %2940 = vmatprep.subr.bf16.mxu0 0
      %2941 = vmatpush1.bf16.msra.mxu0 0
      %2942 = vmatprep.subr.bf16.mxu0 0
      %2943 = vmatpush1.bf16.msra.mxu0 0
      %2944 = vmatprep.subr.bf16.mxu0 0
      %2945 = vmatpush1.bf16.msra.mxu0 0
      %2946 = vmatprep.subr.bf16.mxu0 0
      %2947 = vmatpush1.bf16.msra.mxu0 0
      %2948 = vmatprep.subr.bf16.mxu0 0
      %2949 = vmatpush1.bf16.msra.mxu0 0
      %2950 = vmatprep.subr.bf16.mxu0 0
      %2951 = vmatpush1.bf16.msra.mxu0 0
      %2952 = vmatprep.subr.bf16.mxu0 0
      %2953 = vmatpush1.bf16.msra.mxu0 0
      %2954 = vmatprep.mubr.bf16.mxu0 0
      %2955 = vmatmul.mubr.bf16.gmra.mrb[0].mxu0 %v2908
      %v2956 = vpop.f32.mrb[0].mxu0
      %v2957 = vadd.f32 0.0, %v2956
      %v2958 = vpop.f32.mrb[0].mxu0
      %v2959 = vpop.f32.mrb[0].mxu0
      %v2960 = vadd.f32 0.0, %v2959
      %v2961 = vpop.f32.mrb[0].mxu0
      %2962 = vmatprep.mubr.bf16.mxu0 0
      %2963 = vmatmul.mubr.bf16.gmra.mrb[0].mxu0 %v2911
      %v2964 = vpop.f32.mrb[0].mxu0
      %v2965 = vadd.f32 0.0, %v2964
      %v2966 = vpop.f32.mrb[0].mxu0
      %v2967 = vpop.f32.mrb[0].mxu0
      %v2968 = vadd.f32 0.0, %v2967
      %v2969 = vpop.f32.mrb[0].mxu0
      %2970 = vmatprep.mubr.bf16.mxu0 0
      %2971 = vmatmul.mubr.bf16.gmra.mrb[0].mxu0 %v2914
      %v2972 = vpop.f32.mrb[0].mxu0
      %v2973 = vadd.f32 0.0, %v2972
      %v2974 = vpop.f32.mrb[0].mxu0
      %v2975 = vpop.f32.mrb[0].mxu0
      %v2976 = vadd.f32 0.0, %v2975
      %v2977 = vpop.f32.mrb[0].mxu0
      %2978 = vmatprep.mubr.bf16.mxu0 0
      %2979 = vmatmul.mubr.bf16.gmra.mrb[0].mxu0 %v2917
      %v2980 = vpop.f32.mrb[0].mxu0
      %v2981 = vadd.f32 0.0, %v2980
      %v2982 = vpop.f32.mrb[0].mxu0
      %v2983 = vpop.f32.mrb[0].mxu0
      %v2984 = vadd.f32 0.0, %v2983
      %v2985 = vpop.f32.mrb[0].mxu0
      %2986 = vdwg.mxu0
      %v2987 = vadd.f32 %v2747, %v2957
      %v2988 = vadd.f32 %v2748, %v2960
      %v2989 = vadd.f32 %v2749, %v2965
      %v2990 = vadd.f32 %v2750, %v2968
      %v2991 = vadd.f32 %v2751, %v2973
      %v2992 = vadd.f32 %v2752, %v2976
      %v2993 = vadd.f32 %v2753, %v2981
      %v2994 = vadd.f32 %v2754, %v2984
      %v2995 = vunpack.c.h.b16 %v2875
      %v2996 = vunpack.c.h.b16 %v2876
      %v2997 = vunpack.c.h.b16 %v2877
      %v2998 = vunpack.c.h.b16 %v2878
      %v2999 = vunpack.c.h.b16 %v2879
      %v3000 = vunpack.c.h.b16 %v2880
      %v3001 = vunpack.c.h.b16 %v2881
      %v3002 = vunpack.c.h.b16 %v2882
      %v3003 = vpack.c.b16 %v2895, %v2895
      %v3004 = vpack.c.b16 %v2995, %v2995
      %v3005 = vpack.c.b16 %v2896, %v2896
      %v3006 = vpack.c.b16 %v2996, %v2996
      %v3007 = vpack.c.b16 %v2897, %v2897
      %v3008 = vpack.c.b16 %v2997, %v2997
      %v3009 = vpack.c.b16 %v2898, %v2898
      %v3010 = vpack.c.b16 %v2998, %v2998
      %v3011 = vpack.c.b16 %v2899, %v2899
      %v3012 = vpack.c.b16 %v2999, %v2999
      %v3013 = vpack.c.b16 %v2900, %v2900
      %v3014 = vpack.c.b16 %v3000, %v3000
      %v3015 = vpack.c.b16 %v2901, %v2901
      %v3016 = vpack.c.b16 %v3001, %v3001
      %v3017 = vpack.c.b16 %v2902, %v2902
      %v3018 = vpack.c.b16 %v3002, %v3002
      %v3020 = vshrl.u32 %v3003, 16
      %v3022 = vrot.slane %v3020, 4
      %v3023 = vshll.u32 %v3003, 16
      %v3025 = vrot.slane %v3023, 5
      %v3026 = vor.u32 %v3022, %v3025
      %v3027 = vrot.slane %v3026, 4
      %v3029 = vshll.u32 %v3004, 16
      %v3031 = vrot.slane %v3029, 5
      %v3032 = vsel %vm557, %v3027, %v3031
      %v3034 = vshrl.u32 %v3005, 16
      %v3036 = vrot.slane %v3034, 4
      %v3037 = vshll.u32 %v3005, 16
      %v3039 = vrot.slane %v3037, 5
      %v3040 = vor.u32 %v3036, %v3039
      %v3041 = vrot.slane %v3040, 4
      %v3043 = vshll.u32 %v3006, 16
      %v3045 = vrot.slane %v3043, 5
      %v3046 = vsel %vm557, %v3041, %v3045
      %v3048 = vshrl.u32 %v3007, 16
      %v3050 = vrot.slane %v3048, 4
      %v3051 = vshll.u32 %v3007, 16
      %v3053 = vrot.slane %v3051, 5
      %v3054 = vor.u32 %v3050, %v3053
      %v3055 = vrot.slane %v3054, 4
      %v3057 = vshll.u32 %v3008, 16
      %v3059 = vrot.slane %v3057, 5
      %v3060 = vsel %vm557, %v3055, %v3059
      %v3062 = vshrl.u32 %v3009, 16
      %v3064 = vrot.slane %v3062, 4
      %v3065 = vshll.u32 %v3009, 16
      %v3067 = vrot.slane %v3065, 5
      %v3068 = vor.u32 %v3064, %v3067
      %v3069 = vrot.slane %v3068, 4
      %v3071 = vshll.u32 %v3010, 16
      %v3073 = vrot.slane %v3071, 5
      %v3074 = vsel %vm557, %v3069, %v3073
      %v3076 = vshrl.u32 %v3011, 16
      %v3078 = vrot.slane %v3076, 4
      %v3079 = vshll.u32 %v3011, 16
      %v3081 = vrot.slane %v3079, 5
      %v3082 = vor.u32 %v3078, %v3081
      %v3083 = vrot.slane %v3082, 4
      %v3085 = vshll.u32 %v3012, 16
      %v3087 = vrot.slane %v3085, 5
      %v3088 = vsel %vm557, %v3083, %v3087
      %v3090 = vshrl.u32 %v3013, 16
      %v3092 = vrot.slane %v3090, 4
      %v3093 = vshll.u32 %v3013, 16
      %v3095 = vrot.slane %v3093, 5
      %v3096 = vor.u32 %v3092, %v3095
      %v3097 = vrot.slane %v3096, 4
      %v3099 = vshll.u32 %v3014, 16
      %v3101 = vrot.slane %v3099, 5
      %v3102 = vsel %vm557, %v3097, %v3101
      %v3104 = vshrl.u32 %v3015, 16
      %v3106 = vrot.slane %v3104, 4
      %v3107 = vshll.u32 %v3015, 16
      %v3109 = vrot.slane %v3107, 5
      %v3110 = vor.u32 %v3106, %v3109
      %v3111 = vrot.slane %v3110, 4
      %v3113 = vshll.u32 %v3016, 16
      %v3115 = vrot.slane %v3113, 5
      %v3116 = vsel %vm557, %v3111, %v3115
      %v3118 = vshrl.u32 %v3017, 16
      %v3120 = vrot.slane %v3118, 4
      %v3121 = vshll.u32 %v3017, 16
      %v3123 = vrot.slane %v3121, 5
      %v3124 = vor.u32 %v3120, %v3123
      %v3125 = vrot.slane %v3124, 4
      %v3127 = vshll.u32 %v3018, 16
      %v3129 = vrot.slane %v3127, 5
      %v3130 = vsel %vm557, %v3125, %v3129
      %s3131 = scalar_lea.vmem %s3, 38
      %v3132 = vld [vmem:[%s3131] sm:$0x3]
      %v3133 = vunpack.c.l.b16 %v3032
      %v3134 = vunpack.c.l.b16 %v3046
      %v3135 = vunpack.c.l.b16 %v3060
      %v3136 = vunpack.c.l.b16 %v3074
      %v3137 = vunpack.c.l.b16 %v3088
      %v3138 = vunpack.c.l.b16 %v3102
      %v3139 = vunpack.c.l.b16 %v3116
      %v3140 = vunpack.c.l.b16 %v3130
      %v3141 = vpack.c.b16 %v3134, %v3133
      %v3142 = vpack.c.b16 %v3136, %v3135
      %v3143 = vpack.c.b16 %v3138, %v3137
      %v3144 = vpack.c.b16 %v3140, %v3139
      %v3146 = vsel %vm684, %v3141, 0
      %v3149 = vsel %vm684, %v3142, 0
      %v3152 = vsel %vm684, %v3143, 0
      %v3155 = vsel %vm684, %v3144, 0
      %v3158 = vsel %vm697, %v3132, 0
      %3160 = vmatprep.subr.bf16.mxu0 0
      %3161 = vmatpush1.bf16.msra.mxu0 %v3158
      %3162 = vmatprep.subr.bf16.mxu0 0
      %3163 = vmatpush1.bf16.msra.mxu0 0
      %3164 = vmatprep.subr.bf16.mxu0 0
      %3165 = vmatpush1.bf16.msra.mxu0 0
      %3166 = vmatprep.subr.bf16.mxu0 0
      %3167 = vmatpush1.bf16.msra.mxu0 0
      %3168 = vmatprep.subr.bf16.mxu0 0
      %3169 = vmatpush1.bf16.msra.mxu0 0
      %3170 = vmatprep.subr.bf16.mxu0 0
      %3171 = vmatpush1.bf16.msra.mxu0 0
      %3172 = vmatprep.subr.bf16.mxu0 0
      %3173 = vmatpush1.bf16.msra.mxu0 0
      %3174 = vmatprep.subr.bf16.mxu0 0
      %3175 = vmatpush1.bf16.msra.mxu0 0
      %3176 = vmatprep.subr.bf16.mxu0 0
      %3177 = vmatpush1.bf16.msra.mxu0 0
      %3178 = vmatprep.subr.bf16.mxu0 0
      %3179 = vmatpush1.bf16.msra.mxu0 0
      %3180 = vmatprep.subr.bf16.mxu0 0
      %3181 = vmatpush1.bf16.msra.mxu0 0
      %3182 = vmatprep.subr.bf16.mxu0 0
      %3183 = vmatpush1.bf16.msra.mxu0 0
      %3184 = vmatprep.subr.bf16.mxu0 0
      %3185 = vmatpush1.bf16.msra.mxu0 0
      %3186 = vmatprep.subr.bf16.mxu0 0
      %3187 = vmatpush1.bf16.msra.mxu0 0
      %3188 = vmatprep.subr.bf16.mxu0 0
      %3189 = vmatpush1.bf16.msra.mxu0 0
      %3190 = vmatprep.subr.bf16.mxu0 0
      %3191 = vmatpush1.bf16.msra.mxu0 0
      %3192 = vmatprep.mubr.bf16.mxu0 0
      %3193 = vmatmul.mubr.bf16.gmra.mrb[0].mxu0 %v3146
      %v3194 = vpop.f32.mrb[0].mxu0
      %v3195 = vadd.f32 0.0, %v3194
      %v3196 = vpop.f32.mrb[0].mxu0
      %v3197 = vpop.f32.mrb[0].mxu0
      %v3198 = vadd.f32 0.0, %v3197
      %v3199 = vpop.f32.mrb[0].mxu0
      %3200 = vmatprep.mubr.bf16.mxu0 0
      %3201 = vmatmul.mubr.bf16.gmra.mrb[0].mxu0 %v3149
      %v3202 = vpop.f32.mrb[0].mxu0
      %v3203 = vadd.f32 0.0, %v3202
      %v3204 = vpop.f32.mrb[0].mxu0
      %v3205 = vpop.f32.mrb[0].mxu0
      %v3206 = vadd.f32 0.0, %v3205
      %v3207 = vpop.f32.mrb[0].mxu0
      %3208 = vmatprep.mubr.bf16.mxu0 0
      %3209 = vmatmul.mubr.bf16.gmra.mrb[0].mxu0 %v3152
      %v3210 = vpop.f32.mrb[0].mxu0
      %v3211 = vadd.f32 0.0, %v3210
      %v3212 = vpop.f32.mrb[0].mxu0
      %v3213 = vpop.f32.mrb[0].mxu0
      %v3214 = vadd.f32 0.0, %v3213
      %v3215 = vpop.f32.mrb[0].mxu0
      %3216 = vmatprep.mubr.bf16.mxu0 0
      %3217 = vmatmul.mubr.bf16.gmra.mrb[0].mxu0 %v3155
      %v3218 = vpop.f32.mrb[0].mxu0
      %v3219 = vadd.f32 0.0, %v3218
      %v3220 = vpop.f32.mrb[0].mxu0
      %v3221 = vpop.f32.mrb[0].mxu0
      %v3222 = vadd.f32 0.0, %v3221
      %v3223 = vpop.f32.mrb[0].mxu0
      %3224 = vdwg.mxu0
      %v3225 = vadd.f32 %v2987, %v3195
      %v3226 = vadd.f32 %v2988, %v3198
      %v3227 = vadd.f32 %v2989, %v3203
      %v3228 = vadd.f32 %v2990, %v3206
      %v3229 = vadd.f32 %v2991, %v3211
      %v3230 = vadd.f32 %v2992, %v3214
      %v3231 = vadd.f32 %v2993, %v3219
      %v3232 = vadd.f32 %v2994, %v3222
      %v3233 = vrot.slane %v3003, 5
      %v3234 = vrot.slane %v3233, 4
      %v3235 = vrot.slane %v3004, 5
      %v3236 = vsel %vm852, %v3234, %v3235
      %v3237 = vrot.slane %v3005, 5
      %v3238 = vrot.slane %v3237, 4
      %v3239 = vrot.slane %v3006, 5
      %v3240 = vsel %vm852, %v3238, %v3239
      %v3241 = vrot.slane %v3007, 5
      %v3242 = vrot.slane %v3241, 4
      %v3243 = vrot.slane %v3008, 5
      %v3244 = vsel %vm852, %v3242, %v3243
      %v3245 = vrot.slane %v3009, 5
      %v3246 = vrot.slane %v3245, 4
      %v3247 = vrot.slane %v3010, 5
      %v3248 = vsel %vm852, %v3246, %v3247
      %v3249 = vrot.slane %v3011, 5
      %v3250 = vrot.slane %v3249, 4
      %v3251 = vrot.slane %v3012, 5
      %v3252 = vsel %vm852, %v3250, %v3251
      %v3253 = vrot.slane %v3013, 5
      %v3254 = vrot.slane %v3253, 4
      %v3255 = vrot.slane %v3014, 5
      %v3256 = vsel %vm852, %v3254, %v3255
      %v3257 = vrot.slane %v3015, 5
      %v3258 = vrot.slane %v3257, 4
      %v3259 = vrot.slane %v3016, 5
      %v3260 = vsel %vm852, %v3258, %v3259
      %v3261 = vrot.slane %v3017, 5
      %v3262 = vrot.slane %v3261, 4
      %v3263 = vrot.slane %v3018, 5
      %v3264 = vsel %vm852, %v3262, %v3263
      %s3265 = scalar_lea.vmem %s3, 40
      %v3266 = vld [vmem:[%s3265] sm:$0x3]
      %v3267 = vunpack.c.l.b16 %v3236
      %v3268 = vunpack.c.l.b16 %v3240
      %v3269 = vunpack.c.l.b16 %v3244
      %v3270 = vunpack.c.l.b16 %v3248
      %v3271 = vunpack.c.l.b16 %v3252
      %v3272 = vunpack.c.l.b16 %v3256
      %v3273 = vunpack.c.l.b16 %v3260
      %v3274 = vunpack.c.l.b16 %v3264
      %v3275 = vpack.c.b16 %v3268, %v3267
      %v3276 = vpack.c.b16 %v3270, %v3269
      %v3277 = vpack.c.b16 %v3272, %v3271
      %v3278 = vpack.c.b16 %v3274, %v3273
      %v3280 = vsel %vm684, %v3275, 0
      %v3283 = vsel %vm684, %v3276, 0
      %v3286 = vsel %vm684, %v3277, 0
      %v3289 = vsel %vm684, %v3278, 0
      %v3292 = vsel %vm697, %v3266, 0
      %3294 = vmatprep.subr.bf16.mxu0 0
      %3295 = vmatpush1.bf16.msra.mxu0 %v3292
      %3296 = vmatprep.subr.bf16.mxu0 0
      %3297 = vmatpush1.bf16.msra.mxu0 0
      %3298 = vmatprep.subr.bf16.mxu0 0
      %3299 = vmatpush1.bf16.msra.mxu0 0
      %3300 = vmatprep.subr.bf16.mxu0 0
      %3301 = vmatpush1.bf16.msra.mxu0 0
      %3302 = vmatprep.subr.bf16.mxu0 0
      %3303 = vmatpush1.bf16.msra.mxu0 0
      %3304 = vmatprep.subr.bf16.mxu0 0
      %3305 = vmatpush1.bf16.msra.mxu0 0
      %3306 = vmatprep.subr.bf16.mxu0 0
      %3307 = vmatpush1.bf16.msra.mxu0 0
      %3308 = vmatprep.subr.bf16.mxu0 0
      %3309 = vmatpush1.bf16.msra.mxu0 0
      %3310 = vmatprep.subr.bf16.mxu0 0
      %3311 = vmatpush1.bf16.msra.mxu0 0
      %3312 = vmatprep.subr.bf16.mxu0 0
      %3313 = vmatpush1.bf16.msra.mxu0 0
      %3314 = vmatprep.subr.bf16.mxu0 0
      %3315 = vmatpush1.bf16.msra.mxu0 0
      %3316 = vmatprep.subr.bf16.mxu0 0
      %3317 = vmatpush1.bf16.msra.mxu0 0
      %3318 = vmatprep.subr.bf16.mxu0 0
      %3319 = vmatpush1.bf16.msra.mxu0 0
      %3320 = vmatprep.subr.bf16.mxu0 0
      %3321 = vmatpush1.bf16.msra.mxu0 0
      %3322 = vmatprep.subr.bf16.mxu0 0
      %3323 = vmatpush1.bf16.msra.mxu0 0
      %3324 = vmatprep.subr.bf16.mxu0 0
      %3325 = vmatpush1.bf16.msra.mxu0 0
      %3326 = vmatprep.mubr.bf16.mxu0 0
      %3327 = vmatmul.mubr.bf16.gmra.mrb[0].mxu0 %v3280
      %v3328 = vpop.f32.mrb[0].mxu0
      %v3329 = vadd.f32 0.0, %v3328
      %v3330 = vpop.f32.mrb[0].mxu0
      %v3331 = vpop.f32.mrb[0].mxu0
      %v3332 = vadd.f32 0.0, %v3331
      %v3333 = vpop.f32.mrb[0].mxu0
      %3334 = vmatprep.mubr.bf16.mxu0 0
      %3335 = vmatmul.mubr.bf16.gmra.mrb[0].mxu0 %v3283
      %v3336 = vpop.f32.mrb[0].mxu0
      %v3337 = vadd.f32 0.0, %v3336
      %v3338 = vpop.f32.mrb[0].mxu0
      %v3339 = vpop.f32.mrb[0].mxu0
      %v3340 = vadd.f32 0.0, %v3339
      %v3341 = vpop.f32.mrb[0].mxu0
      %3342 = vmatprep.mubr.bf16.mxu0 0
      %3343 = vmatmul.mubr.bf16.gmra.mrb[0].mxu0 %v3286
      %v3344 = vpop.f32.mrb[0].mxu0
      %v3345 = vadd.f32 0.0, %v3344
      %v3346 = vpop.f32.mrb[0].mxu0
      %v3347 = vpop.f32.mrb[0].mxu0
      %v3348 = vadd.f32 0.0, %v3347
      %v3349 = vpop.f32.mrb[0].mxu0
      %3350 = vmatprep.mubr.bf16.mxu0 0
      %3351 = vmatmul.mubr.bf16.gmra.mrb[0].mxu0 %v3289
      %v3352 = vpop.f32.mrb[0].mxu0
      %v3353 = vadd.f32 0.0, %v3352
      %v3354 = vpop.f32.mrb[0].mxu0
      %v3355 = vpop.f32.mrb[0].mxu0
      %v3356 = vadd.f32 0.0, %v3355
      %v3357 = vpop.f32.mrb[0].mxu0
      %3358 = vdwg.mxu0
      %v3359 = vadd.f32 %v3225, %v3329
      %v3360 = vadd.f32 %v3226, %v3332
      %v3361 = vadd.f32 %v3227, %v3337
      %v3362 = vadd.f32 %v3228, %v3340
      %v3363 = vadd.f32 %v3229, %v3345
      %v3364 = vadd.f32 %v3230, %v3348
      %v3365 = vadd.f32 %v3231, %v3353
      %v3366 = vadd.f32 %v3232, %v3356
      %s3367 = scalar_lea.vmem %s3, 42
      %v3368 = vld [vmem:[%s3367] sm:$0x3]
      %v3370 = vunpack.c.l.b16 %v2883
      %v3371 = vpack.c.b16 %v2897, %v2896
      %v3372 = vpack.c.b16 %v2899, %v2898
      %v3373 = vpack.c.b16 %v2901, %v2900
      %v3374 = vpack.c.b16 %v3370, %v2902
      %v3376 = vsel %vm684, %v3371, 0
      %v3379 = vsel %vm684, %v3372, 0
      %v3382 = vsel %vm684, %v3373, 0
      %v3385 = vsel %vm684, %v3374, 0
      %v3388 = vsel %vm697, %v3368, 0
      %3390 = vmatprep.subr.bf16.mxu0 0
      %3391 = vmatpush1.bf16.msra.mxu0 %v3388
      %3392 = vmatprep.subr.bf16.mxu0 0
      %3393 = vmatpush1.bf16.msra.mxu0 0
      %3394 = vmatprep.subr.bf16.mxu0 0
      %3395 = vmatpush1.bf16.msra.mxu0 0
      %3396 = vmatprep.subr.bf16.mxu0 0
      %3397 = vmatpush1.bf16.msra.mxu0 0
      %3398 = vmatprep.subr.bf16.mxu0 0
      %3399 = vmatpush1.bf16.msra.mxu0 0
      %3400 = vmatprep.subr.bf16.mxu0 0
      %3401 = vmatpush1.bf16.msra.mxu0 0
      %3402 = vmatprep.subr.bf16.mxu0 0
      %3403 = vmatpush1.bf16.msra.mxu0 0
      %3404 = vmatprep.subr.bf16.mxu0 0
      %3405 = vmatpush1.bf16.msra.mxu0 0
      %3406 = vmatprep.subr.bf16.mxu0 0
      %3407 = vmatpush1.bf16.msra.mxu0 0
      %3408 = vmatprep.subr.bf16.mxu0 0
      %3409 = vmatpush1.bf16.msra.mxu0 0
      %3410 = vmatprep.subr.bf16.mxu0 0
      %3411 = vmatpush1.bf16.msra.mxu0 0
      %3412 = vmatprep.subr.bf16.mxu0 0
      %3413 = vmatpush1.bf16.msra.mxu0 0
      %3414 = vmatprep.subr.bf16.mxu0 0
      %3415 = vmatpush1.bf16.msra.mxu0 0
      %3416 = vmatprep.subr.bf16.mxu0 0
      %3417 = vmatpush1.bf16.msra.mxu0 0
      %3418 = vmatprep.subr.bf16.mxu0 0
      %3419 = vmatpush1.bf16.msra.mxu0 0
      %3420 = vmatprep.subr.bf16.mxu0 0
      %3421 = vmatpush1.bf16.msra.mxu0 0
      %3422 = vmatprep.mubr.bf16.mxu0 0
      %3423 = vmatmul.mubr.bf16.gmra.mrb[0].mxu0 %v3376
      %v3424 = vpop.f32.mrb[0].mxu0
      %v3425 = vadd.f32 0.0, %v3424
      %v3426 = vpop.f32.mrb[0].mxu0
      %v3427 = vpop.f32.mrb[0].mxu0
      %v3428 = vadd.f32 0.0, %v3427
      %v3429 = vpop.f32.mrb[0].mxu0
      %3430 = vmatprep.mubr.bf16.mxu0 0
      %3431 = vmatmul.mubr.bf16.gmra.mrb[0].mxu0 %v3379
      %v3432 = vpop.f32.mrb[0].mxu0
      %v3433 = vadd.f32 0.0, %v3432
      %v3434 = vpop.f32.mrb[0].mxu0
      %v3435 = vpop.f32.mrb[0].mxu0
      %v3436 = vadd.f32 0.0, %v3435
      %v3437 = vpop.f32.mrb[0].mxu0
      %3438 = vmatprep.mubr.bf16.mxu0 0
      %3439 = vmatmul.mubr.bf16.gmra.mrb[0].mxu0 %v3382
      %v3440 = vpop.f32.mrb[0].mxu0
      %v3441 = vadd.f32 0.0, %v3440
      %v3442 = vpop.f32.mrb[0].mxu0
      %v3443 = vpop.f32.mrb[0].mxu0
      %v3444 = vadd.f32 0.0, %v3443
      %v3445 = vpop.f32.mrb[0].mxu0
      %3446 = vmatprep.mubr.bf16.mxu0 0
      %3447 = vmatmul.mubr.bf16.gmra.mrb[0].mxu0 %v3385
      %v3448 = vpop.f32.mrb[0].mxu0
      %v3449 = vadd.f32 0.0, %v3448
      %v3450 = vpop.f32.mrb[0].mxu0
      %v3451 = vpop.f32.mrb[0].mxu0
      %v3452 = vadd.f32 0.0, %v3451
      %v3453 = vpop.f32.mrb[0].mxu0
      %3454 = vdwg.mxu0
      %v3455 = vadd.f32 %v3359, %v3425
      %v3456 = vadd.f32 %v3360, %v3428
      %v3457 = vadd.f32 %v3361, %v3433
      %v3458 = vadd.f32 %v3362, %v3436
      %v3459 = vadd.f32 %v3363, %v3441
      %v3460 = vadd.f32 %v3364, %v3444
      %v3461 = vadd.f32 %v3365, %v3449
      %v3462 = vadd.f32 %v3366, %v3452
      %v3463 = vunpack.c.h.b16 %v2883
      %v3464 = vpack.c.b16 %v3370, %v3370
      %v3465 = vpack.c.b16 %v3463, %v3463
      %v3467 = vshrl.u32 %v3464, 16
      %v3469 = vrot.slane %v3467, 4
      %v3470 = vshll.u32 %v3464, 16
      %v3472 = vrot.slane %v3470, 5
      %v3473 = vor.u32 %v3469, %v3472
      %v3474 = vrot.slane %v3473, 4
      %v3476 = vshll.u32 %v3465, 16
      %v3478 = vrot.slane %v3476, 5
      %v3479 = vsel %vm557, %v3474, %v3478
      %s3480 = scalar_lea.vmem %s3, 44
      %v3481 = vld [vmem:[%s3480] sm:$0x3]
      %v3482 = vunpack.c.l.b16 %v3479
      %v3483 = vpack.c.b16 %v3135, %v3134
      %v3484 = vpack.c.b16 %v3137, %v3136
      %v3485 = vpack.c.b16 %v3139, %v3138
      %v3486 = vpack.c.b16 %v3482, %v3140
      %v3488 = vsel %vm684, %v3483, 0
      %v3491 = vsel %vm684, %v3484, 0
      %v3494 = vsel %vm684, %v3485, 0
      %v3497 = vsel %vm684, %v3486, 0
      %v3500 = vsel %vm697, %v3481, 0
      %3502 = vmatprep.subr.bf16.mxu0 0
      %3503 = vmatpush1.bf16.msra.mxu0 %v3500
      %3504 = vmatprep.subr.bf16.mxu0 0
      %3505 = vmatpush1.bf16.msra.mxu0 0
      %3506 = vmatprep.subr.bf16.mxu0 0
      %3507 = vmatpush1.bf16.msra.mxu0 0
      %3508 = vmatprep.subr.bf16.mxu0 0
      %3509 = vmatpush1.bf16.msra.mxu0 0
      %3510 = vmatprep.subr.bf16.mxu0 0
      %3511 = vmatpush1.bf16.msra.mxu0 0
      %3512 = vmatprep.subr.bf16.mxu0 0
      %3513 = vmatpush1.bf16.msra.mxu0 0
      %3514 = vmatprep.subr.bf16.mxu0 0
      %3515 = vmatpush1.bf16.msra.mxu0 0
      %3516 = vmatprep.subr.bf16.mxu0 0
      %3517 = vmatpush1.bf16.msra.mxu0 0
      %3518 = vmatprep.subr.bf16.mxu0 0
      %3519 = vmatpush1.bf16.msra.mxu0 0
      %3520 = vmatprep.subr.bf16.mxu0 0
      %3521 = vmatpush1.bf16.msra.mxu0 0
      %3522 = vmatprep.subr.bf16.mxu0 0
      %3523 = vmatpush1.bf16.msra.mxu0 0
      %3524 = vmatprep.subr.bf16.mxu0 0
      %3525 = vmatpush1.bf16.msra.mxu0 0
      %3526 = vmatprep.subr.bf16.mxu0 0
      %3527 = vmatpush1.bf16.msra.mxu0 0
      %3528 = vmatprep.subr.bf16.mxu0 0
      %3529 = vmatpush1.bf16.msra.mxu0 0
      %3530 = vmatprep.subr.bf16.mxu0 0
      %3531 = vmatpush1.bf16.msra.mxu0 0
      %3532 = vmatprep.subr.bf16.mxu0 0
      %3533 = vmatpush1.bf16.msra.mxu0 0
      %3534 = vmatprep.mubr.bf16.mxu0 0
      %3535 = vmatmul.mubr.bf16.gmra.mrb[0].mxu0 %v3488
      %v3536 = vpop.f32.mrb[0].mxu0
      %v3537 = vadd.f32 0.0, %v3536
      %v3538 = vpop.f32.mrb[0].mxu0
      %v3539 = vpop.f32.mrb[0].mxu0
      %v3540 = vadd.f32 0.0, %v3539
      %v3541 = vpop.f32.mrb[0].mxu0
      %3542 = vmatprep.mubr.bf16.mxu0 0
      %3543 = vmatmul.mubr.bf16.gmra.mrb[0].mxu0 %v3491
      %v3544 = vpop.f32.mrb[0].mxu0
      %v3545 = vadd.f32 0.0, %v3544
      %v3546 = vpop.f32.mrb[0].mxu0
      %v3547 = vpop.f32.mrb[0].mxu0
      %v3548 = vadd.f32 0.0, %v3547
      %v3549 = vpop.f32.mrb[0].mxu0
      %3550 = vmatprep.mubr.bf16.mxu0 0
      %3551 = vmatmul.mubr.bf16.gmra.mrb[0].mxu0 %v3494
      %v3552 = vpop.f32.mrb[0].mxu0
      %v3553 = vadd.f32 0.0, %v3552
      %v3554 = vpop.f32.mrb[0].mxu0
      %v3555 = vpop.f32.mrb[0].mxu0
      %v3556 = vadd.f32 0.0, %v3555
      %v3557 = vpop.f32.mrb[0].mxu0
      %3558 = vmatprep.mubr.bf16.mxu0 0
      %3559 = vmatmul.mubr.bf16.gmra.mrb[0].mxu0 %v3497
      %v3560 = vpop.f32.mrb[0].mxu0
      %v3561 = vadd.f32 0.0, %v3560
      %v3562 = vpop.f32.mrb[0].mxu0
      %v3563 = vpop.f32.mrb[0].mxu0
      %v3564 = vadd.f32 0.0, %v3563
      %v3565 = vpop.f32.mrb[0].mxu0
      %3566 = vdwg.mxu0
      %v3567 = vadd.f32 %v3455, %v3537
      %v3568 = vadd.f32 %v3456, %v3540
      %v3569 = vadd.f32 %v3457, %v3545
      %v3570 = vadd.f32 %v3458, %v3548
      %v3571 = vadd.f32 %v3459, %v3553
      %v3572 = vadd.f32 %v3460, %v3556
      %v3573 = vadd.f32 %v3461, %v3561
      %v3574 = vadd.f32 %v3462, %v3564
      %v3575 = vrot.slane %v3464, 5
      %v3576 = vrot.slane %v3575, 4
      %v3577 = vrot.slane %v3465, 5
      %v3578 = vsel %vm852, %v3576, %v3577
      %s3579 = scalar_lea.vmem %s3, 46
      %v3580 = vld [vmem:[%s3579] sm:$0x3]
      %v3581 = vunpack.c.l.b16 %v3578
      %v3582 = vpack.c.b16 %v3269, %v3268
      %v3583 = vpack.c.b16 %v3271, %v3270
      %v3584 = vpack.c.b16 %v3273, %v3272
      %v3585 = vpack.c.b16 %v3581, %v3274
      %v3587 = vsel %vm684, %v3582, 0
      %v3590 = vsel %vm684, %v3583, 0
      %v3593 = vsel %vm684, %v3584, 0
      %v3596 = vsel %vm684, %v3585, 0
      %v3599 = vsel %vm697, %v3580, 0
      %3601 = vmatprep.subr.bf16.mxu0 0
      %3602 = vmatpush1.bf16.msra.mxu0 %v3599
      %3603 = vmatprep.subr.bf16.mxu0 0
      %3604 = vmatpush1.bf16.msra.mxu0 0
      %3605 = vmatprep.subr.bf16.mxu0 0
      %3606 = vmatpush1.bf16.msra.mxu0 0
      %3607 = vmatprep.subr.bf16.mxu0 0
      %3608 = vmatpush1.bf16.msra.mxu0 0
      %3609 = vmatprep.subr.bf16.mxu0 0
      %3610 = vmatpush1.bf16.msra.mxu0 0
      %3611 = vmatprep.subr.bf16.mxu0 0
      %3612 = vmatpush1.bf16.msra.mxu0 0
      %3613 = vmatprep.subr.bf16.mxu0 0
      %3614 = vmatpush1.bf16.msra.mxu0 0
      %3615 = vmatprep.subr.bf16.mxu0 0
      %3616 = vmatpush1.bf16.msra.mxu0 0
      %3617 = vmatprep.subr.bf16.mxu0 0
      %3618 = vmatpush1.bf16.msra.mxu0 0
      %3619 = vmatprep.subr.bf16.mxu0 0
      %3620 = vmatpush1.bf16.msra.mxu0 0
      %3621 = vmatprep.subr.bf16.mxu0 0
      %3622 = vmatpush1.bf16.msra.mxu0 0
      %3623 = vmatprep.subr.bf16.mxu0 0
      %3624 = vmatpush1.bf16.msra.mxu0 0
      %3625 = vmatprep.subr.bf16.mxu0 0
      %3626 = vmatpush1.bf16.msra.mxu0 0
      %3627 = vmatprep.subr.bf16.mxu0 0
      %3628 = vmatpush1.bf16.msra.mxu0 0
      %3629 = vmatprep.subr.bf16.mxu0 0
      %3630 = vmatpush1.bf16.msra.mxu0 0
      %3631 = vmatprep.subr.bf16.mxu0 0
      %3632 = vmatpush1.bf16.msra.mxu0 0
      %3633 = vmatprep.mubr.bf16.mxu0 0
      %3634 = vmatmul.mubr.bf16.gmra.mrb[0].mxu0 %v3587
      %v3635 = vpop.f32.mrb[0].mxu0
      %v3636 = vadd.f32 0.0, %v3635
      %v3637 = vpop.f32.mrb[0].mxu0
      %v3638 = vpop.f32.mrb[0].mxu0
      %v3639 = vadd.f32 0.0, %v3638
      %v3640 = vpop.f32.mrb[0].mxu0
      %3641 = vmatprep.mubr.bf16.mxu0 0
      %3642 = vmatmul.mubr.bf16.gmra.mrb[0].mxu0 %v3590
      %v3643 = vpop.f32.mrb[0].mxu0
      %v3644 = vadd.f32 0.0, %v3643
      %v3645 = vpop.f32.mrb[0].mxu0
      %v3646 = vpop.f32.mrb[0].mxu0
      %v3647 = vadd.f32 0.0, %v3646
      %v3648 = vpop.f32.mrb[0].mxu0
      %3649 = vmatprep.mubr.bf16.mxu0 0
      %3650 = vmatmul.mubr.bf16.gmra.mrb[0].mxu0 %v3593
      %v3651 = vpop.f32.mrb[0].mxu0
      %v3652 = vadd.f32 0.0, %v3651
      %v3653 = vpop.f32.mrb[0].mxu0
      %v3654 = vpop.f32.mrb[0].mxu0
      %v3655 = vadd.f32 0.0, %v3654
      %v3656 = vpop.f32.mrb[0].mxu0
      %3657 = vmatprep.mubr.bf16.mxu0 0
      %3658 = vmatmul.mubr.bf16.gmra.mrb[0].mxu0 %v3596
      %v3659 = vpop.f32.mrb[0].mxu0
      %v3660 = vadd.f32 0.0, %v3659
      %v3661 = vpop.f32.mrb[0].mxu0
      %v3662 = vpop.f32.mrb[0].mxu0
      %v3663 = vadd.f32 0.0, %v3662
      %v3664 = vpop.f32.mrb[0].mxu0
      %3665 = vdwg.mxu0
      %v3666 = vadd.f32 %v3567, %v3636
      %v3667 = vadd.f32 %v3568, %v3639
      %v3668 = vadd.f32 %v3569, %v3644
      %v3669 = vadd.f32 %v3570, %v3647
      %v3670 = vadd.f32 %v3571, %v3652
      %v3671 = vadd.f32 %v3572, %v3655
      %v3672 = vadd.f32 %v3573, %v3660
      %v3673 = vadd.f32 %v3574, %v3663
      %s3674 = scalar_lea.vmem %s3, 48
      %v3675 = vld [vmem:[%s3674] sm:$0x3]
      %v3677 = vunpack.c.l.b16 %v2884
      %v3678 = vpack.c.b16 %v3677, %v3370
      %v3680 = vsel %vm684, %v3678, 0
      %v3683 = vsel %vm697, %v3675, 0
      %3685 = vmatprep.subr.bf16.mxu0 0
      %3686 = vmatpush1.bf16.msra.mxu0 %v3683
      %3687 = vmatprep.subr.bf16.mxu0 0
      %3688 = vmatpush1.bf16.msra.mxu0 0
      %3689 = vmatprep.subr.bf16.mxu0 0
      %3690 = vmatpush1.bf16.msra.mxu0 0
      %3691 = vmatprep.subr.bf16.mxu0 0
      %3692 = vmatpush1.bf16.msra.mxu0 0
      %3693 = vmatprep.subr.bf16.mxu0 0
      %3694 = vmatpush1.bf16.msra.mxu0 0
      %3695 = vmatprep.subr.bf16.mxu0 0
      %3696 = vmatpush1.bf16.msra.mxu0 0
      %3697 = vmatprep.subr.bf16.mxu0 0
      %3698 = vmatpush1.bf16.msra.mxu0 0
      %3699 = vmatprep.subr.bf16.mxu0 0
      %3700 = vmatpush1.bf16.msra.mxu0 0
      %3701 = vmatprep.subr.bf16.mxu0 0
      %3702 = vmatpush1.bf16.msra.mxu0 0
      %3703 = vmatprep.subr.bf16.mxu0 0
      %3704 = vmatpush1.bf16.msra.mxu0 0
      %3705 = vmatprep.subr.bf16.mxu0 0
      %3706 = vmatpush1.bf16.msra.mxu0 0
      %3707 = vmatprep.subr.bf16.mxu0 0
      %3708 = vmatpush1.bf16.msra.mxu0 0
      %3709 = vmatprep.subr.bf16.mxu0 0
      %3710 = vmatpush1.bf16.msra.mxu0 0
      %3711 = vmatprep.subr.bf16.mxu0 0
      %3712 = vmatpush1.bf16.msra.mxu0 0
      %3713 = vmatprep.subr.bf16.mxu0 0
      %3714 = vmatpush1.bf16.msra.mxu0 0
      %3715 = vmatprep.subr.bf16.mxu0 0
      %3716 = vmatpush1.bf16.msra.mxu0 0
      %3717 = vmatprep.mubr.bf16.mxu0 0
      %3718 = vmatmul.mubr.bf16.gmra.mrb[0].mxu0 %v2911
      %v3719 = vpop.f32.mrb[0].mxu0
      %v3720 = vadd.f32 0.0, %v3719
      %v3721 = vpop.f32.mrb[0].mxu0
      %v3722 = vpop.f32.mrb[0].mxu0
      %v3723 = vadd.f32 0.0, %v3722
      %v3724 = vpop.f32.mrb[0].mxu0
      %3725 = vmatprep.mubr.bf16.mxu0 0
      %3726 = vmatmul.mubr.bf16.gmra.mrb[0].mxu0 %v2914
      %v3727 = vpop.f32.mrb[0].mxu0
      %v3728 = vadd.f32 0.0, %v3727
      %v3729 = vpop.f32.mrb[0].mxu0
      %v3730 = vpop.f32.mrb[0].mxu0
      %v3731 = vadd.f32 0.0, %v3730
      %v3732 = vpop.f32.mrb[0].mxu0
      %3733 = vmatprep.mubr.bf16.mxu0 0
      %3734 = vmatmul.mubr.bf16.gmra.mrb[0].mxu0 %v2917
      %v3735 = vpop.f32.mrb[0].mxu0
      %v3736 = vadd.f32 0.0, %v3735
      %v3737 = vpop.f32.mrb[0].mxu0
      %v3738 = vpop.f32.mrb[0].mxu0
      %v3739 = vadd.f32 0.0, %v3738
      %v3740 = vpop.f32.mrb[0].mxu0
      %3741 = vmatprep.mubr.bf16.mxu0 0
      %3742 = vmatmul.mubr.bf16.gmra.mrb[0].mxu0 %v3680
      %v3743 = vpop.f32.mrb[0].mxu0
      %v3744 = vadd.f32 0.0, %v3743
      %v3745 = vpop.f32.mrb[0].mxu0
      %v3746 = vpop.f32.mrb[0].mxu0
      %v3747 = vadd.f32 0.0, %v3746
      %v3748 = vpop.f32.mrb[0].mxu0
      %3749 = vdwg.mxu0
      %v3750 = vadd.f32 %v3666, %v3720
      %v3751 = vadd.f32 %v3667, %v3723
      %v3752 = vadd.f32 %v3668, %v3728
      %v3753 = vadd.f32 %v3669, %v3731
      %v3754 = vadd.f32 %v3670, %v3736
      %v3755 = vadd.f32 %v3671, %v3739
      %v3756 = vadd.f32 %v3672, %v3744
      %v3757 = vadd.f32 %v3673, %v3747
      %v3758 = vunpack.c.h.b16 %v2884
      %v3759 = vpack.c.b16 %v3677, %v3677
      %v3760 = vpack.c.b16 %v3758, %v3758
      %v3762 = vshrl.u32 %v3759, 16
      %v3764 = vrot.slane %v3762, 4
      %v3765 = vshll.u32 %v3759, 16
      %v3767 = vrot.slane %v3765, 5
      %v3768 = vor.u32 %v3764, %v3767
      %v3769 = vrot.slane %v3768, 4
      %v3771 = vshll.u32 %v3760, 16
      %v3773 = vrot.slane %v3771, 5
      %v3774 = vsel %vm557, %v3769, %v3773
      %s3775 = scalar_lea.vmem %s3, 50
      %v3776 = vld [vmem:[%s3775] sm:$0x3]
      %v3777 = vunpack.c.l.b16 %v3774
      %v3778 = vpack.c.b16 %v3777, %v3482
      %v3780 = vsel %vm684, %v3778, 0
      %v3783 = vsel %vm697, %v3776, 0
      %3785 = vmatprep.subr.bf16.mxu0 0
      %3786 = vmatpush1.bf16.msra.mxu0 %v3783
      %3787 = vmatprep.subr.bf16.mxu0 0
      %3788 = vmatpush1.bf16.msra.mxu0 0
      %3789 = vmatprep.subr.bf16.mxu0 0
      %3790 = vmatpush1.bf16.msra.mxu0 0
      %3791 = vmatprep.subr.bf16.mxu0 0
      %3792 = vmatpush1.bf16.msra.mxu0 0
      %3793 = vmatprep.subr.bf16.mxu0 0
      %3794 = vmatpush1.bf16.msra.mxu0 0
      %3795 = vmatprep.subr.bf16.mxu0 0
      %3796 = vmatpush1.bf16.msra.mxu0 0
      %3797 = vmatprep.subr.bf16.mxu0 0
      %3798 = vmatpush1.bf16.msra.mxu0 0
      %3799 = vmatprep.subr.bf16.mxu0 0
      %3800 = vmatpush1.bf16.msra.mxu0 0
      %3801 = vmatprep.subr.bf16.mxu0 0
      %3802 = vmatpush1.bf16.msra.mxu0 0
      %3803 = vmatprep.subr.bf16.mxu0 0
      %3804 = vmatpush1.bf16.msra.mxu0 0
      %3805 = vmatprep.subr.bf16.mxu0 0
      %3806 = vmatpush1.bf16.msra.mxu0 0
      %3807 = vmatprep.subr.bf16.mxu0 0
      %3808 = vmatpush1.bf16.msra.mxu0 0
      %3809 = vmatprep.subr.bf16.mxu0 0
      %3810 = vmatpush1.bf16.msra.mxu0 0
      %3811 = vmatprep.subr.bf16.mxu0 0
      %3812 = vmatpush1.bf16.msra.mxu0 0
      %3813 = vmatprep.subr.bf16.mxu0 0
      %3814 = vmatpush1.bf16.msra.mxu0 0
      %3815 = vmatprep.subr.bf16.mxu0 0
      %3816 = vmatpush1.bf16.msra.mxu0 0
      %3817 = vmatprep.mubr.bf16.mxu0 0
      %3818 = vmatmul.mubr.bf16.gmra.mrb[0].mxu0 %v3149
      %v3819 = vpop.f32.mrb[0].mxu0
      %v3820 = vadd.f32 0.0, %v3819
      %v3821 = vpop.f32.mrb[0].mxu0
      %v3822 = vpop.f32.mrb[0].mxu0
      %v3823 = vadd.f32 0.0, %v3822
      %v3824 = vpop.f32.mrb[0].mxu0
      %3825 = vmatprep.mubr.bf16.mxu0 0
      %3826 = vmatmul.mubr.bf16.gmra.mrb[0].mxu0 %v3152
      %v3827 = vpop.f32.mrb[0].mxu0
      %v3828 = vadd.f32 0.0, %v3827
      %v3829 = vpop.f32.mrb[0].mxu0
      %v3830 = vpop.f32.mrb[0].mxu0
      %v3831 = vadd.f32 0.0, %v3830
      %v3832 = vpop.f32.mrb[0].mxu0
      %3833 = vmatprep.mubr.bf16.mxu0 0
      %3834 = vmatmul.mubr.bf16.gmra.mrb[0].mxu0 %v3155
      %v3835 = vpop.f32.mrb[0].mxu0
      %v3836 = vadd.f32 0.0, %v3835
      %v3837 = vpop.f32.mrb[0].mxu0
      %v3838 = vpop.f32.mrb[0].mxu0
      %v3839 = vadd.f32 0.0, %v3838
      %v3840 = vpop.f32.mrb[0].mxu0
      %3841 = vmatprep.mubr.bf16.mxu0 0
      %3842 = vmatmul.mubr.bf16.gmra.mrb[0].mxu0 %v3780
      %v3843 = vpop.f32.mrb[0].mxu0
      %v3844 = vadd.f32 0.0, %v3843
      %v3845 = vpop.f32.mrb[0].mxu0
      %v3846 = vpop.f32.mrb[0].mxu0
      %v3847 = vadd.f32 0.0, %v3846
      %v3848 = vpop.f32.mrb[0].mxu0
      %3849 = vdwg.mxu0
      %v3850 = vadd.f32 %v3750, %v3820
      %v3851 = vadd.f32 %v3751, %v3823
      %v3852 = vadd.f32 %v3752, %v3828
      %v3853 = vadd.f32 %v3753, %v3831
      %v3854 = vadd.f32 %v3754, %v3836
      %v3855 = vadd.f32 %v3755, %v3839
      %v3856 = vadd.f32 %v3756, %v3844
      %v3857 = vadd.f32 %v3757, %v3847
      %v3858 = vrot.slane %v3759, 5
      %v3859 = vrot.slane %v3858, 4
      %v3860 = vrot.slane %v3760, 5
      %v3861 = vsel %vm852, %v3859, %v3860
      %s3862 = scalar_lea.vmem %s3, 52
      %v3863 = vld [vmem:[%s3862] sm:$0x3]
      %v3864 = vunpack.c.l.b16 %v3861
      %v3865 = vpack.c.b16 %v3864, %v3581
      %v3867 = vsel %vm684, %v3865, 0
      %v3870 = vsel %vm697, %v3863, 0
      %3872 = vmatprep.subr.bf16.mxu0 0
      %3873 = vmatpush1.bf16.msra.mxu0 %v3870
      %3874 = vmatprep.subr.bf16.mxu0 0
      %3875 = vmatpush1.bf16.msra.mxu0 0
      %3876 = vmatprep.subr.bf16.mxu0 0
      %3877 = vmatpush1.bf16.msra.mxu0 0
      %3878 = vmatprep.subr.bf16.mxu0 0
      %3879 = vmatpush1.bf16.msra.mxu0 0
      %3880 = vmatprep.subr.bf16.mxu0 0
      %3881 = vmatpush1.bf16.msra.mxu0 0
      %3882 = vmatprep.subr.bf16.mxu0 0
      %3883 = vmatpush1.bf16.msra.mxu0 0
      %3884 = vmatprep.subr.bf16.mxu0 0
      %3885 = vmatpush1.bf16.msra.mxu0 0
      %3886 = vmatprep.subr.bf16.mxu0 0
      %3887 = vmatpush1.bf16.msra.mxu0 0
      %3888 = vmatprep.subr.bf16.mxu0 0
      %3889 = vmatpush1.bf16.msra.mxu0 0
      %3890 = vmatprep.subr.bf16.mxu0 0
      %3891 = vmatpush1.bf16.msra.mxu0 0
      %3892 = vmatprep.subr.bf16.mxu0 0
      %3893 = vmatpush1.bf16.msra.mxu0 0
      %3894 = vmatprep.subr.bf16.mxu0 0
      %3895 = vmatpush1.bf16.msra.mxu0 0
      %3896 = vmatprep.subr.bf16.mxu0 0
      %3897 = vmatpush1.bf16.msra.mxu0 0
      %3898 = vmatprep.subr.bf16.mxu0 0
      %3899 = vmatpush1.bf16.msra.mxu0 0
      %3900 = vmatprep.subr.bf16.mxu0 0
      %3901 = vmatpush1.bf16.msra.mxu0 0
      %3902 = vmatprep.subr.bf16.mxu0 0
      %3903 = vmatpush1.bf16.msra.mxu0 0
      %3904 = vmatprep.mubr.bf16.mxu0 0
      %3905 = vmatmul.mubr.bf16.gmra.mrb[0].mxu0 %v3283
      %v3906 = vpop.f32.mrb[0].mxu0
      %v3907 = vadd.f32 0.0, %v3906
      %v3908 = vpop.f32.mrb[0].mxu0
      %v3909 = vpop.f32.mrb[0].mxu0
      %v3910 = vadd.f32 0.0, %v3909
      %v3911 = vpop.f32.mrb[0].mxu0
      %3912 = vmatprep.mubr.bf16.mxu0 0
      %3913 = vmatmul.mubr.bf16.gmra.mrb[0].mxu0 %v3286
      %v3914 = vpop.f32.mrb[0].mxu0
      %v3915 = vadd.f32 0.0, %v3914
      %v3916 = vpop.f32.mrb[0].mxu0
      %v3917 = vpop.f32.mrb[0].mxu0
      %v3918 = vadd.f32 0.0, %v3917
      %v3919 = vpop.f32.mrb[0].mxu0
      %3920 = vmatprep.mubr.bf16.mxu0 0
      %3921 = vmatmul.mubr.bf16.gmra.mrb[0].mxu0 %v3289
      %v3922 = vpop.f32.mrb[0].mxu0
      %v3923 = vadd.f32 0.0, %v3922
      %v3924 = vpop.f32.mrb[0].mxu0
      %v3925 = vpop.f32.mrb[0].mxu0
      %v3926 = vadd.f32 0.0, %v3925
      %v3927 = vpop.f32.mrb[0].mxu0
      %3928 = vmatprep.mubr.bf16.mxu0 0
      %3929 = vmatmul.mubr.bf16.gmra.mrb[0].mxu0 %v3867
      %v3930 = vpop.f32.mrb[0].mxu0
      %v3931 = vadd.f32 0.0, %v3930
      %v3932 = vpop.f32.mrb[0].mxu0
      %v3933 = vpop.f32.mrb[0].mxu0
      %v3934 = vadd.f32 0.0, %v3933
      %v3935 = vpop.f32.mrb[0].mxu0
      %3936 = vdwg.mxu0
      %v3937 = vadd.f32 %v3850, %v3907
      %v3938 = vadd.f32 %v3851, %v3910
      %v3939 = vadd.f32 %v3852, %v3915
      %v3940 = vadd.f32 %v3853, %v3918
      %v3941 = vadd.f32 %v3854, %v3923
      %v3942 = vadd.f32 %v3855, %v3926
      %v3943 = vadd.f32 %v3856, %v3931
      %v3944 = vadd.f32 %v3857, %v3934
      %v3945 = vld [vmem:[%s5] sm:$0x1]
      %v3947 = vlaneseq
      %v3948 = vshrl.u32 %v3947, 7
      %v3949 = vsub.s32 0, %v3948
      %v3950 = vrot.slane %v3945, %v3949
      %v3952 = vadd.f32 %v3937, %v3950
      %v3953 = vadd.f32 %v3938, %v3950
      %v3954 = vadd.f32 %v3939, %v3950
      %v3955 = vadd.f32 %v3940, %v3950
      %v3956 = vadd.f32 %v3941, %v3950
      %v3957 = vadd.f32 %v3942, %v3950
      %v3958 = vadd.f32 %v3943, %v3950
      %v3959 = vadd.f32 %v3944, %v3950
      %vm3960 = vcmask 64512
      %3961 = vst.msk [vmem:[%s369] sm:$0xff] %vm3960, %v3952
      %3962 = vst.msk [vmem:[%s369 + $0x8] sm:$0xff] %vm3960, %v3953
      %3963 = vst.msk [vmem:[%s369 + $0x10] sm:$0xff] %vm3960, %v3954
      %3964 = vst.msk [vmem:[%s369 + $0x18] sm:$0xff] %vm3960, %v3955
      %3965 = vst.msk [vmem:[%s369 + $0x20] sm:$0xff] %vm3960, %v3956
      %3966 = vst.msk [vmem:[%s369 + $0x28] sm:$0xff] %vm3960, %v3957
      %3967 = vst.msk [vmem:[%s369 + $0x30] sm:$0xff] %vm3960, %v3958
      %3968 = vst.msk [vmem:[%s369 + $0x38] sm:$0xff] %vm3960, %v3959
      %p3969 = scmp.lt.s32.totalorder %s21, 1
      %s3970 = scalar_select %p3969, %s21, 1
      %p3971 = scmp.lt.s32.totalorder %s22, 7
      %s3972 = scalar_select %p3971, %s22, 7
      %s3973 = smul.addr %s3972, 8
      %s3974 = smul.addr %s3970, 64
      %s3975 = sadd.s32 %s3973, %s3974
      %s3976 = smul.addr %s3975, 8
      %s3977 = scalar_lea.vmem %s6, %s3976
      // Predicated region
      $region45: #{tpu_custom_call.1} parent=43 // pred_check
        %p3978 = pneg %p200
      $region46: #{tpu_custom_call.1} parent=43 // pred_check_branch
        %3980 = sbr.rel (%p3978) target = $region48
      $region47: #{tpu_custom_call.1} parent=43 // pred_region
        _
      $region48: #{tpu_custom_call.1} parent=43 // pred_fallthru
        _
    $region44: #{tpu_custom_call.1} parent=5 // pred_fallthru
      _
    %p3981 = scmp.le.s32.totalorder 2, %s12
    // Predicated region
    $region49: #{tpu_custom_call.1} parent=5 // pred_check
      %p3982 = pneg %p3981
    $region50: #{tpu_custom_call.1} parent=5 // pred_check_branch
      %3984 = sbr.rel (%p3982) target = $region52
    $region51: #{tpu_custom_call.1} parent=5 // pred_region
      %s3985 = ssub.s32 %s12, 2
      // Predicated region
      $region53: #{tpu_custom_call.1} parent=51 // pred_check
        %p3986 = pneg %p206
      $region54: #{tpu_custom_call.1} parent=51 // pred_check_branch
        %3988 = sbr.rel (%p3986) target = $region56
      $region55: #{tpu_custom_call.1} parent=51 // pred_region
        %p3989 = scmp.lt.s32.totalorder %s23, 1
        %s3990 = scalar_select %p3989, %s23, 1
        %p3991 = scmp.lt.s32.totalorder %s24, 7
        %s3992 = scalar_select %p3991, %s24, 7
        %s3993 = smul.addr %s3992, 8
        %s3994 = smul.addr %s3990, 64
        %s3995 = sadd.s32 %s3993, %s3994
        %s3996 = smul.addr %s3995, 8
        %s3997 = scalar_lea.vmem %s6, %s3996
      $region56: #{tpu_custom_call.1} parent=51 // pred_fallthru
        _
    $region52: #{tpu_custom_call.1} parent=5 // pred_fallthru
      _
  $region6: #{tpu_custom_call.1} parent=0 // loop_footer
    %s16 = sadd.s32 1, %s12
  $region7: #{tpu_custom_call.1} parent=0 // loop_footer_branch
    %11 = sbr.rel target = $region3
  $region8: #{tpu_custom_call.1} parent=0 // loop_exit
    _

</llo_original>
